<compile_context>
chip_gen: v7x
topology: tpu7x:2x2x1
jax: 0.10.0
libtpu: 0.0.40
codegen_flags: <defaults>
</compile_context>

<pallas_src>
import math

import jax
import jax.numpy as jnp
from jax.experimental import pallas as pl
from jax.experimental.pallas import tpu as pltpu  # noqa: F401  (TPU backend import)

# ----------------------------- small synthetic config -----------------------------
VOCAB = 128
BASE_HIDDEN = 48          # "auto-detected base hidden size"
STUDENT_HIDDEN = 64       # draft model hidden size
FUSE_LAYERS = 3           # SimpleFusion fuses 3 base-model layers
NUM_LAYERS = 2            # num_decoder_layers (small for the demo)
NUM_HEADS = 4
NUM_KV_HEADS = 2
HEAD_DIM = STUDENT_HIDDEN // NUM_HEADS    # 16 (simplified vs Qwen3's default 128)
INTERMEDIATE = 128
RMS_EPS = 1e-6
ROPE_THETA = 1.0e6        # Qwen3 default rope_theta
MAX_LOGIT = 30.0
BATCH = 2
SEQ = 8
M_ROWS = BATCH * SEQ      # merged batch*seq rows

Q_DIM = NUM_HEADS * HEAD_DIM            # 64
KV_DIM = NUM_KV_HEADS * HEAD_DIM        # 32
GROUPS = NUM_KV_HEADS                   # kv heads == attention groups
R_PER_G = NUM_HEADS // NUM_KV_HEADS     # query heads per kv group

NEG_MASK = -1e30          # finite mask sentinel (finfo.min could yield -inf - -inf = NaN)

# ---- packed per-layer weight slab layout: wbig is (NUM_LAYERS*128, 512) ----
WB_ROWS = 128                                             # per-layer row block
WB_QKV0, WB_QKV1 = 0, Q_DIM + 2 * KV_DIM                  # [wq|wk|wv]   cols   0..128
WB_GU0, WB_GU1 = WB_QKV1, WB_QKV1 + 2 * INTERMEDIATE      # [wg|wu]      cols 128..384
WB_WD0, WB_WD1 = WB_GU1, WB_GU1 + STUDENT_HIDDEN          # wd           cols 384..448
WB_WO0, WB_WO1 = WB_WD1, WB_WD1 + STUDENT_HIDDEN          # wo           cols 448..512
WB_COLS = WB_WO1

# ---- constants + lm_head slab layout: cst is (64, 320) ----
CST_LM0, CST_LM1 = 0, VOCAB                               # lm_head * clamp(logit_scale)
CST_AVG0, CST_AVG1 = CST_LM1, CST_LM1 + Q_DIM             # per-head mean (RMS) block-diag
CST_ROT0, CST_ROT1 = CST_AVG1, CST_AVG1 + Q_DIM           # rotate_half block-diag
CST_MSC0 = CST_ROT1                                       # cos | sin | mask band
CST_COLS = CST_MSC0 + Q_DIM

# ---- vector-parameter slab row layout: vec is (16, 64) ----
VEC_BIAS, VEC_NORM = 0, 1
VEC_L0 = 2                 # then per layer: ln1, ln2, qn(tiled * 1/sqrt(hd)), kn(tiled)
VEC_PER_LAYER = 4
VEC_ROWS = 16


# ----------------------------------- fused kernel --------------------------------------
def fused_forward_kernel(xin_ref, win_ref, wbig_ref, vec_ref, cst_ref,
                         logits_ref, hid_ref):
    f32 = jnp.float32
    hd = HEAD_DIM
    M = M_ROWS

    def rms(v, w):
        var = jnp.mean(v * v, axis=-1, keepdims=True)
        return v * jax.lax.rsqrt(var + RMS_EPS) * w

    def headnorm_rope(t, avg, w_t, rotm, cos_t, sin_t):
        # per-head RMSNorm over head_dim via a block-diagonal averaging matmul,
        # rotate_half via a block-diagonal +-1 permutation matmul; all heads at once.
        var = jnp.dot(t * t, avg, preferred_element_type=f32)
        tn = t * jax.lax.rsqrt(var + RMS_EPS) * w_t
        rot = jnp.dot(tn, rotm, preferred_element_type=f32)
        return tn * cos_t + rot * sin_t

    # ---- unpack the small slabs once per call ----
    vec = vec_ref[...]                                        # (16, 64)
    b_in = vec[VEC_BIAS:VEC_BIAS + 1, :]
    normw = vec[VEC_NORM:VEC_NORM + 1, :]

    avg_q = cst_ref[:, CST_AVG0:CST_AVG1]                     # (64, 64)
    rot_q = cst_ref[:, CST_ROT0:CST_ROT1]                     # (64, 64)
    cos_q = cst_ref[0:M, CST_MSC0:CST_MSC0 + Q_DIM]           # (M, 64)
    sin_q = cst_ref[M:2 * M, CST_MSC0:CST_MSC0 + Q_DIM]       # (M, 64)
    mask = cst_ref[2 * M:3 * M, CST_MSC0:CST_MSC0 + M]        # (M, M) per-batch causal
    # KV-head variants are prefixes of the Q-head-tiled tables (identical head blocks).
    avg_k = avg_q[0:KV_DIM, 0:KV_DIM]
    rot_k = rot_q[0:KV_DIM, 0:KV_DIM]
    cos_k = cos_q[:, 0:KV_DIM]
    sin_k = sin_q[:, 0:KV_DIM]
    mask2 = jnp.concatenate([mask, mask], axis=0)             # (2M, M) group-stacked rows

    # ---- SimpleFusion.linear + hidden_proj + token-embed add + 1/sqrt(H) (pre-folded) ----
    x = jnp.dot(xin_ref[...], win_ref[...], preferred_element_type=f32) + b_in   # (M, 64)

    for l in range(NUM_LAYERS):               # static unroll over the decoder layers
        r0 = l * WB_ROWS
        vl = VEC_L0 + l * VEC_PER_LAYER
        ln1 = vec[vl:vl + 1, :]
        ln2 = vec[vl + 1:vl + 2, :]
        qn = vec[vl + 2:vl + 3, :]            # 1/sqrt(hd) attention scale folded in (glue)
        kn = vec[vl + 3:vl + 4, 0:KV_DIM]

        # ---- attention ----
        h = rms(x, ln1)
        wqkv = wbig_ref[r0:r0 + STUDENT_HIDDEN, WB_QKV0:WB_QKV1]        # (64, 128)
        qkv = jnp.dot(h, wqkv, preferred_element_type=f32)              # one fused MXU op
        q = qkv[:, 0:Q_DIM]
        k = qkv[:, Q_DIM:Q_DIM + KV_DIM]
        v = qkv[:, Q_DIM + KV_DIM:Q_DIM + 2 * KV_DIM]

        qr = headnorm_rope(q, avg_q, qn, rot_q, cos_q, sin_q)           # (M, 64)
        kr = headnorm_rope(k, avg_k, kn, rot_k, cos_k, sin_k)           # (M, 32)

        # per KV group: stack the R query heads along the sublane axis -> ONE score dot
        # and ONE PV dot per group (2+2 dots/layer instead of 4+4).
        outs = []
        for g in range(GROUPS):
            qg = jnp.concatenate(
                [qr[:, (R_PER_G * g + i) * hd:(R_PER_G * g + i + 1) * hd]
                 for i in range(R_PER_G)], axis=0)                      # (2M, hd)
            kg = kr[:, g * hd:(g + 1) * hd]                             # (M, hd)
            vg = v[:, g * hd:(g + 1) * hd]                              # (M, hd)
            s = jax.lax.dot_general(qg, kg, (((1,), (1,)), ((), ())),
                                    preferred_element_type=f32)         # (2M, M)
            s = s + mask2
            s = s - jnp.max(s, axis=-1, keepdims=True)
            p = jnp.exp(s)
            p = p * pl.reciprocal(jnp.sum(p, axis=-1, keepdims=True), approx=True)
            og = jnp.dot(p, vg, preferred_element_type=f32)             # (2M, hd)
            for i in range(R_PER_G):
                outs.append(og[i * M:(i + 1) * M, :])
        attn = jnp.concatenate(outs, axis=1)                            # (M, 64)
        wo = wbig_ref[r0:r0 + STUDENT_HIDDEN, WB_WO0:WB_WO1]
        x = x + jnp.dot(attn, wo, preferred_element_type=f32)

        # ---- SwiGLU MLP (gate|up fused into one matmul) ----
        h2 = rms(x, ln2)
        wgu = wbig_ref[r0:r0 + STUDENT_HIDDEN, WB_GU0:WB_GU1]           # (64, 256)
        gu = jnp.dot(h2, wgu, preferred_element_type=f32)               # (M, 256)
        gate = gu[:, 0:INTERMEDIATE]
        up = gu[:, INTERMEDIATE:2 * INTERMEDIATE]
        act = (gate * jax.nn.sigmoid(gate)) * up
        wd = wbig_ref[r0:r0 + INTERMEDIATE, WB_WD0:WB_WD1]              # (128, 64)
        x = x + jnp.dot(act, wd, preferred_element_type=f32)

    # ---- final RMSNorm + lm_head (clamp(logit_scale) pre-folded) + logit clamp ----
    hid = rms(x, normw)
    lmw = cst_ref[:, CST_LM0:CST_LM1]                                   # (64, VOCAB)
    logits = jnp.dot(hid, lmw, preferred_element_type=f32)
    logits_ref[...] = jnp.clip(logits, -MAX_LOGIT, MAX_LOGIT)
    hid_ref[...] = hid


# --------------------------------- glue / wrapper ---------------------------------
def rotary_cos_sin(seq_len, head_dim, theta):
    inv_freq = 1.0 / (theta ** (jnp.arange(0, head_dim, 2, dtype=jnp.float32) / head_dim))
    pos = jnp.arange(seq_len, dtype=jnp.float32)
    freqs = jnp.outer(pos, inv_freq)                   # (S, hd/2)
    emb = jnp.concatenate([freqs, freqs], axis=-1)     # (S, hd)
    return jnp.cos(emb), jnp.sin(emb)


def _pack_operands(params, multi_features, input_ids):
    B, S, F = multi_features.shape
    Mr = B * S
    Hs = STUDENT_HIDDEN
    hd = HEAD_DIM
    scale = 1.0 / math.sqrt(Hs)

    # -- input slab: [multi_features | token_embeds]; token add folded into the matmul --
    tok = params['embed'][input_ids].reshape(Mr, Hs)   # embedding gather (glue)
    xin = jnp.concatenate([multi_features.reshape(Mr, F), tok], axis=1)      # (Mr, F+Hs)

    # SimpleFusion.linear, hidden_proj, +tok and /sqrt(Hs) folded into one affine map.
    w_mf = (params['wf'] @ params['wp']) * scale                             # (F, Hs)
    w_tok = jnp.eye(Hs, dtype=jnp.float32) * scale
    w_in = jnp.concatenate([w_mf, w_tok], axis=0)                            # (F+Hs, Hs)
    b_in = (params['bf'] @ params['wp'] + params['bp']) * scale              # (1, Hs)

    # -- per-layer weight slab: [wq|wk|wv] | [wg|wu] | wd | wo per 128-row block --
    wbig = jnp.zeros((NUM_LAYERS * WB_ROWS, WB_COLS), jnp.float32)
    for l, lp in enumerate(params['layers']):
        r = l * WB_ROWS
        wqkv = jnp.concatenate([lp['wq'], lp['wk'], lp['wv']], axis=1)       # (64, 128)
        wgu = jnp.concatenate([lp['wg'], lp['wu']], axis=1)                  # (64, 256)
        wbig = wbig.at[r:r + Hs, WB_QKV0:WB_QKV1].set(wqkv)
        wbig = wbig.at[r:r + Hs, WB_GU0:WB_GU1].set(wgu)
        wbig = wbig.at[r:r + INTERMEDIATE, WB_WD0:WB_WD1].set(lp['wd'])
        wbig = wbig.at[r:r + Hs, WB_WO0:WB_WO1].set(lp['wo'])

    # -- vector-parameter slab --
    vec = jnp.zeros((VEC_ROWS, Hs), jnp.float32)
    vec = vec.at[VEC_BIAS, :].set(b_in[0])
    vec = vec.at[VEC_NORM, :].set(params['norm'][0])
    for l, lp in enumerate(params['layers']):
        r = VEC_L0 + l * VEC_PER_LAYER
        vec = vec.at[r, :].set(lp['ln1'][0])
        vec = vec.at[r + 1, :].set(lp['ln2'][0])
        vec = vec.at[r + 2, :].set(jnp.tile(lp['qn'], (1, NUM_HEADS))[0] * hd ** -0.5)
        vec = vec.at[r + 3, 0:KV_DIM].set(jnp.tile(lp['kn'], (1, NUM_KV_HEADS))[0])

    # -- constants + lm_head slab --
    cos, sin = rotary_cos_sin(S, hd, ROPE_THETA)               # (S, hd)
    cos_q = jnp.tile(jnp.tile(cos, (B, 1)), (1, NUM_HEADS))    # (Mr, Q_DIM) lane-tiled
    sin_q = jnp.tile(jnp.tile(sin, (B, 1)), (1, NUM_HEADS))

    half = hd // 2
    eye_h = jnp.eye(half, dtype=jnp.float32)
    zero_h = jnp.zeros((half, half), jnp.float32)
    r_blk = jnp.block([[zero_h, eye_h], [-eye_h, zero_h]])     # rotate_half as a matmul
    avg_blk = jnp.full((hd, hd), 1.0 / hd, jnp.float32)        # per-head mean as a matmul
    avg_q = jnp.kron(jnp.eye(NUM_HEADS, dtype=jnp.float32), avg_blk)    # (Q_DIM, Q_DIM)
    rot_q = jnp.kron(jnp.eye(NUM_HEADS, dtype=jnp.float32), r_blk)

    # Block-diagonal (per-batch) causal mask over the merged rows; single (M, M) copy.
    ridx = jnp.arange(Mr)
    same_b = (ridx[:, None] // S) == (ridx[None, :] // S)
    causal = ridx[None, :] <= ridx[:, None]
    mask = jnp.where(same_b & causal, 0.0, NEG_MASK).astype(jnp.float32)     # (Mr, Mr)

    # Pre-fold clamp(logit_scale) into the lm_head weight (scalar multiply commutes).
    lm_scale = jnp.clip(params['logit_scale'][0, 0], 0.1, 10.0)
    lmw = params['lm_head'] * lm_scale                                       # (Hs, VOCAB)

    cst = jnp.zeros((Q_DIM, CST_COLS), jnp.float32)
    cst = cst.at[0:Hs, CST_LM0:CST_LM1].set(lmw)
    cst = cst.at[:, CST_AVG0:CST_AVG1].set(avg_q)
    cst = cst.at[:, CST_ROT0:CST_ROT1].set(rot_q)
    cst = cst.at[0:Mr, CST_MSC0:CST_MSC0 + Q_DIM].set(cos_q)
    cst = cst.at[Mr:2 * Mr, CST_MSC0:CST_MSC0 + Q_DIM].set(sin_q)
    cst = cst.at[2 * Mr:3 * Mr, CST_MSC0:CST_MSC0 + Mr].set(mask)

    return xin, w_in, wbig, vec, cst


def _cost_estimate(args):
    M, hd = M_ROWS, HEAD_DIM
    Hs, Im = STUDENT_HIDDEN, INTERMEDIATE
    flops = 2 * M * (FUSE_LAYERS * BASE_HIDDEN + Hs) * Hs          # fused input projection
    per_layer = (2 * M * Hs * (Q_DIM + 2 * KV_DIM)                 # fused qkv projection
                 + 2 * 2 * M * Q_DIM * Q_DIM                       # q RMS-var + rope-rot
                 + 2 * 2 * M * KV_DIM * KV_DIM                     # k RMS-var + rope-rot
                 + GROUPS * 2 * (2 * (R_PER_G * M) * hd * M)       # scores + PV dots
                 + 2 * M * Q_DIM * Hs                              # wo
                 + 2 * M * Hs * 2 * Im                             # gate|up
                 + 2 * M * Im * Hs)                                # down proj
    flops += NUM_LAYERS * per_layer + 2 * M * Hs * VOCAB           # lm_head
    trans = NUM_LAYERS * (NUM_HEADS * M * M + M * Im)              # softmax exp + sigmoid
    byts = sum(int(a.size) * a.dtype.itemsize for a in args) + (M * VOCAB + M * Hs) * 4
    return pl.CostEstimate(flops=int(flops), transcendentals=int(trans),
                           bytes_accessed=int(byts))


def draft_model_forward(params, multi_features, input_ids):
    """Matches DraftModelV3.forward(hidden_states, input_ids, ttt_step=-1)."""
    B, S, _ = multi_features.shape
    Mr = B * S
    args = _pack_operands(params, multi_features, input_ids)

    # Everything (<1 MB) fits in VMEM on every generation (incl. v7x's 64 MiB) -> no grid,
    # whole slabs resident for the single fused invocation (default full-array blocks).
    logits2, hid2 = pl.pallas_call(
        fused_forward_kernel,
        out_shape=(jax.ShapeDtypeStruct((Mr, VOCAB), jnp.float32),
                   jax.ShapeDtypeStruct((Mr, STUDENT_HIDDEN), jnp.float32)),
        cost_estimate=_cost_estimate(args),
    )(*args)

    return logits2.reshape(B, S, VOCAB), hid2.reshape(B, S, STUDENT_HIDDEN)


# ------------------------------------ params ------------------------------------
def init_params(key):
    ks = iter(jax.random.split(key, 16 + NUM_LAYERS * 16))

    def lin(shape):   # deterministic normal(0, 0.02), matching _init_weights
        return 0.02 * jax.random.normal(next(ks), shape, dtype=jnp.float32)

    params = {
        'embed': 0.02 * jax.random.normal(next(ks), (VOCAB, STUDENT_HIDDEN), jnp.float32),
        'wf': lin((FUSE_LAYERS * BASE_HIDDEN, BASE_HIDDEN)),   # SimpleFusion.linear
        'bf': jnp.zeros((1, BASE_HIDDEN), jnp.float32),
        'wp': lin((BASE_HIDDEN, STUDENT_HIDDEN)),              # hidden_proj
        'bp': jnp.zeros((1, STUDENT_HIDDEN), jnp.float32),
        'norm': jnp.ones((1, STUDENT_HIDDEN), jnp.float32),    # final RMSNorm
        'lm_head': lin((STUDENT_HIDDEN, VOCAB)),
        'logit_scale': jnp.ones((1, 1), jnp.float32),
        'layers': [],
    }
    for _ in range(NUM_LAYERS):
        params['layers'].append({
            'ln1': jnp.ones((1, STUDENT_HIDDEN), jnp.float32),
            'wq': lin((STUDENT_HIDDEN, NUM_HEADS * HEAD_DIM)),
            'wk': lin((STUDENT_HIDDEN, NUM_KV_HEADS * HEAD_DIM)),
            'wv': lin((STUDENT_HIDDEN, NUM_KV_HEADS * HEAD_DIM)),
            'qn': jnp.ones((1, HEAD_DIM), jnp.float32),
            'kn': jnp.ones((1, HEAD_DIM), jnp.float32),
            'wo': lin((NUM_HEADS * HEAD_DIM, STUDENT_HIDDEN)),
            'ln2': jnp.ones((1, STUDENT_HIDDEN), jnp.float32),
            'wg': lin((STUDENT_HIDDEN, INTERMEDIATE)),
            'wu': lin((STUDENT_HIDDEN, INTERMEDIATE)),
            'wd': lin((INTERMEDIATE, STUDENT_HIDDEN)),
        })
    return params


# --------------------------- pure-JAX reference (validation) ---------------------------
def ref_forward(params, mf, input_ids):
    tok = params['embed'][input_ids]
    h = mf @ params['wf'] + params['bf'][0]
    h = h @ params['wp'] + params['bp'][0]
    h = (h + tok) / math.sqrt(STUDENT_HIDDEN)
    cos, sin = rotary_cos_sin(SEQ, HEAD_DIM, ROPE_THETA)

    def rms(v, w):
        return v * jax.lax.rsqrt(jnp.mean(v * v, -1, keepdims=True) + RMS_EPS) * w

    def rot_half(t):
        return jnp.concatenate([-t[..., HEAD_DIM // 2:], t[..., :HEAD_DIM // 2]], -1)

    row = jnp.arange(SEQ)[:, None]
    col = jnp.arange(SEQ)[None, :]
    mask = jnp.where(col <= row, 0.0, NEG_MASK)
    B = mf.shape[0]
    for lp in params['layers']:
        x = h
        hn = rms(x, lp['ln1'][0])
        q = (hn @ lp['wq']).reshape(B, SEQ, NUM_HEADS, HEAD_DIM)
        k = (hn @ lp['wk']).reshape(B, SEQ, NUM_KV_HEADS, HEAD_DIM)
        v = (hn @ lp['wv']).reshape(B, SEQ, NUM_KV_HEADS, HEAD_DIM)
        q = rms(q, lp['qn'][0]); k = rms(k, lp['kn'][0])
        c = cos[None, :, None, :]; s = sin[None, :, None, :]
        q = q * c + rot_half(q) * s
        k = k * c + rot_half(k) * s
        rep = NUM_HEADS // NUM_KV_HEADS
        k = jnp.repeat(k, rep, axis=2); v = jnp.repeat(v, rep, axis=2)
        scores = jnp.einsum('bqhd,bkhd->bhqk', q, k) * HEAD_DIM ** -0.5 + mask
        p = jax.nn.softmax(scores, axis=-1)
        o = jnp.einsum('bhqk,bkhd->bqhd', p, v).reshape(B, SEQ, NUM_HEADS * HEAD_DIM)
        x = x + o @ lp['wo']
        hn2 = rms(x, lp['ln2'][0])
        h = x + (jax.nn.silu(hn2 @ lp['wg']) * (hn2 @ lp['wu'])) @ lp['wd']
    hid = rms(h, params['norm'][0])
    logits = hid @ params['lm_head']
    sc = jnp.clip(params['logit_scale'][0, 0], 0.1, 10.0)
    logits = jnp.clip(logits * sc, -MAX_LOGIT, MAX_LOGIT)
    return logits, hid


# --------------------------------------- main ---------------------------------------
if __name__ == "__main__":
    key = jax.random.PRNGKey(0)
    kp, kx, ki = jax.random.split(key, 3)
    params = init_params(kp)
    multi_features = jax.random.normal(
        kx, (BATCH, SEQ, FUSE_LAYERS * BASE_HIDDEN), dtype=jnp.float32)
    input_ids = jax.random.randint(ki, (BATCH, SEQ), 0, VOCAB)

    logits, hidden = jax.jit(draft_model_forward)(params, multi_features, input_ids)
    jax.block_until_ready((logits, hidden))

    assert logits.shape == (BATCH, SEQ, VOCAB) and logits.dtype == jnp.float32
    assert hidden.shape == (BATCH, SEQ, STUDENT_HIDDEN)

    ref_logits, ref_hidden = ref_forward(params, multi_features, input_ids)
    err_l = float(jnp.max(jnp.abs(logits - ref_logits)))
    err_h = float(jnp.max(jnp.abs(hidden - ref_hidden)))
    if err_l > 5e-2 or err_h > 5e-2:
        raise ValueError(f"mismatch vs reference: logits={err_l}, hidden={err_h}")

    print("KERNEL_OK")
</pallas_src>

<mosaic_0001>
module attributes {stable_mosaic.version = 11 : i64} {
  func.func @fused_forward_kernel(%arg0: memref<16x208xf32, #tpu.memory_space<vmem>>, %arg1: memref<208x64xf32, #tpu.memory_space<vmem>>, %arg2: memref<256x512xf32, #tpu.memory_space<vmem>>, %arg3: memref<16x64xf32, #tpu.memory_space<vmem>>, %arg4: memref<64x320xf32, #tpu.memory_space<vmem>>, %arg5: memref<16x128xf32, #tpu.memory_space<vmem>>, %arg6: memref<16x64xf32, #tpu.memory_space<vmem>>) attributes {dimension_semantics = [], scalar_prefetch = 0 : i64, scratch_operands = 0 : i64, tpu.core_type = #tpu.core_type<tc>} {
    %c0 = arith.constant 0 : index
    %c0_0 = arith.constant 0 : index
    %0 = vector.load %arg3[%c0, %c0_0] : memref<16x64xf32, #tpu.memory_space<vmem>>, vector<16x64xf32>
    %1 = vector.extract_strided_slice %0 {offsets = [0, 0], sizes = [1, 64], strides = [1, 1]} : vector<16x64xf32> to vector<1x64xf32>
    %2 = vector.extract_strided_slice %0 {offsets = [1, 0], sizes = [1, 64], strides = [1, 1]} : vector<16x64xf32> to vector<1x64xf32>
    %c0_1 = arith.constant 0 : index
    %c128 = arith.constant 128 : index
    %3 = vector.load %arg4[%c0_1, %c128] : memref<64x320xf32, #tpu.memory_space<vmem>>, vector<64x64xf32>
    %c0_2 = arith.constant 0 : index
    %c192 = arith.constant 192 : index
    %4 = vector.load %arg4[%c0_2, %c192] : memref<64x320xf32, #tpu.memory_space<vmem>>, vector<64x64xf32>
    %c0_3 = arith.constant 0 : index
    %c256 = arith.constant 256 : index
    %5 = vector.load %arg4[%c0_3, %c256] : memref<64x320xf32, #tpu.memory_space<vmem>>, vector<16x64xf32>
    %c16 = arith.constant 16 : index
    %c256_4 = arith.constant 256 : index
    %6 = vector.load %arg4[%c16, %c256_4] : memref<64x320xf32, #tpu.memory_space<vmem>>, vector<16x64xf32>
    %c32 = arith.constant 32 : index
    %c256_5 = arith.constant 256 : index
    %7 = vector.load %arg4[%c32, %c256_5] : memref<64x320xf32, #tpu.memory_space<vmem>>, vector<16x16xf32>
    %8 = vector.extract_strided_slice %3 {offsets = [0, 0], sizes = [32, 32], strides = [1, 1]} : vector<64x64xf32> to vector<32x32xf32>
    %9 = vector.extract_strided_slice %4 {offsets = [0, 0], sizes = [32, 32], strides = [1, 1]} : vector<64x64xf32> to vector<32x32xf32>
    %10 = vector.extract_strided_slice %5 {offsets = [0, 0], sizes = [16, 32], strides = [1, 1]} : vector<16x64xf32> to vector<16x32xf32>
    %11 = vector.extract_strided_slice %6 {offsets = [0, 0], sizes = [16, 32], strides = [1, 1]} : vector<16x64xf32> to vector<16x32xf32>
    %12 = tpu.concatenate %7, %7 in 0 : vector<16x16xf32>, vector<16x16xf32> -> vector<32x16xf32>
    %c0_6 = arith.constant 0 : index
    %c0_7 = arith.constant 0 : index
    %13 = vector.load %arg0[%c0_6, %c0_7] : memref<16x208xf32, #tpu.memory_space<vmem>>, vector<16x208xf32>
    %c0_8 = arith.constant 0 : index
    %c0_9 = arith.constant 0 : index
    %14 = vector.load %arg1[%c0_8, %c0_9] : memref<208x64xf32, #tpu.memory_space<vmem>>, vector<208x64xf32>
    %cst = arith.constant dense<0.000000e+00> : vector<16x64xf32>
    %15 = tpu.matmul %13, %14, %cst {dimension_numbers = #tpu.dot_dimension_numbers<[1], [0], [0], [1], [0, 0, 1, 1], [], []>} : vector<16x208xf32>, vector<208x64xf32>, vector<16x64xf32> -> vector<16x64xf32>
    %16 = vector.broadcast %1 : vector<1x64xf32> to vector<16x64xf32>
    %17 = arith.addf %15, %16 : vector<16x64xf32>
    %18 = vector.extract_strided_slice %0 {offsets = [2, 0], sizes = [1, 64], strides = [1, 1]} : vector<16x64xf32> to vector<1x64xf32>
    %19 = vector.extract_strided_slice %0 {offsets = [3, 0], sizes = [1, 64], strides = [1, 1]} : vector<16x64xf32> to vector<1x64xf32>
    %20 = vector.extract_strided_slice %0 {offsets = [4, 0], sizes = [1, 64], strides = [1, 1]} : vector<16x64xf32> to vector<1x64xf32>
    %21 = vector.extract_strided_slice %0 {offsets = [5, 0], sizes = [1, 32], strides = [1, 1]} : vector<16x64xf32> to vector<1x32xf32>
    %22 = arith.mulf %17, %17 : vector<16x64xf32>
    %cst_10 = arith.constant dense<0.000000e+00> : vector<16xf32>
    %23 = vector.multi_reduction <add>, %22, %cst_10 [1] : vector<16x64xf32> to vector<16xf32>
    %24 = vector.shape_cast %23 : vector<16xf32> to vector<16x1xf32>
    %cst_11 = arith.constant 6.400000e+01 : f32
    %25 = vector.broadcast %cst_11 : f32 to vector<16x1xf32>
    %26 = arith.divf %24, %25 : vector<16x1xf32>
    %cst_12 = arith.constant 9.99999997E-7 : f32
    %27 = vector.broadcast %cst_12 : f32 to vector<16x1xf32>
    %28 = arith.addf %26, %27 : vector<16x1xf32>
    %29 = math.rsqrt %28 : vector<16x1xf32>
    %30 = vector.broadcast %29 : vector<16x1xf32> to vector<16x64xf32>
    %31 = arith.mulf %17, %30 : vector<16x64xf32>
    %32 = vector.broadcast %18 : vector<1x64xf32> to vector<16x64xf32>
    %33 = arith.mulf %31, %32 : vector<16x64xf32>
    %c0_13 = arith.constant 0 : index
    %c0_14 = arith.constant 0 : index
    %34 = vector.load %arg2[%c0_13, %c0_14] : memref<256x512xf32, #tpu.memory_space<vmem>>, vector<64x128xf32>
    %cst_15 = arith.constant dense<0.000000e+00> : vector<16x128xf32>
    %35 = tpu.matmul %33, %34, %cst_15 {dimension_numbers = #tpu.dot_dimension_numbers<[1], [0], [0], [1], [0, 0, 1, 1], [], []>} : vector<16x64xf32>, vector<64x128xf32>, vector<16x128xf32> -> vector<16x128xf32>
    %36 = vector.extract_strided_slice %35 {offsets = [0, 0], sizes = [16, 64], strides = [1, 1]} : vector<16x128xf32> to vector<16x64xf32>
    %37 = vector.extract_strided_slice %35 {offsets = [0, 64], sizes = [16, 32], strides = [1, 1]} : vector<16x128xf32> to vector<16x32xf32>
    %38 = vector.extract_strided_slice %35 {offsets = [0, 96], sizes = [16, 32], strides = [1, 1]} : vector<16x128xf32> to vector<16x32xf32>
    %39 = arith.mulf %36, %36 : vector<16x64xf32>
    %cst_16 = arith.constant dense<0.000000e+00> : vector<16x64xf32>
    %40 = tpu.matmul %39, %3, %cst_16 {dimension_numbers = #tpu.dot_dimension_numbers<[1], [0], [0], [1], [0, 0, 1, 1], [], []>} : vector<16x64xf32>, vector<64x64xf32>, vector<16x64xf32> -> vector<16x64xf32>
    %cst_17 = arith.constant 9.99999997E-7 : f32
    %41 = vector.broadcast %cst_17 : f32 to vector<16x64xf32>
    %42 = arith.addf %40, %41 : vector<16x64xf32>
    %43 = math.rsqrt %42 : vector<16x64xf32>
    %44 = arith.mulf %36, %43 : vector<16x64xf32>
    %45 = vector.broadcast %20 : vector<1x64xf32> to vector<16x64xf32>
    %46 = arith.mulf %44, %45 : vector<16x64xf32>
    %cst_18 = arith.constant dense<0.000000e+00> : vector<16x64xf32>
    %47 = tpu.matmul %46, %4, %cst_18 {dimension_numbers = #tpu.dot_dimension_numbers<[1], [0], [0], [1], [0, 0, 1, 1], [], []>} : vector<16x64xf32>, vector<64x64xf32>, vector<16x64xf32> -> vector<16x64xf32>
    %48 = arith.mulf %46, %5 : vector<16x64xf32>
    %49 = arith.mulf %47, %6 : vector<16x64xf32>
    %50 = arith.addf %48, %49 : vector<16x64xf32>
    %51 = arith.mulf %37, %37 : vector<16x32xf32>
    %cst_19 = arith.constant dense<0.000000e+00> : vector<16x32xf32>
    %52 = tpu.matmul %51, %8, %cst_19 {dimension_numbers = #tpu.dot_dimension_numbers<[1], [0], [0], [1], [0, 0, 1, 1], [], []>} : vector<16x32xf32>, vector<32x32xf32>, vector<16x32xf32> -> vector<16x32xf32>
    %cst_20 = arith.constant 9.99999997E-7 : f32
    %53 = vector.broadcast %cst_20 : f32 to vector<16x32xf32>
    %54 = arith.addf %52, %53 : vector<16x32xf32>
    %55 = math.rsqrt %54 : vector<16x32xf32>
    %56 = arith.mulf %37, %55 : vector<16x32xf32>
    %57 = vector.broadcast %21 : vector<1x32xf32> to vector<16x32xf32>
    %58 = arith.mulf %56, %57 : vector<16x32xf32>
    %cst_21 = arith.constant dense<0.000000e+00> : vector<16x32xf32>
    %59 = tpu.matmul %58, %9, %cst_21 {dimension_numbers = #tpu.dot_dimension_numbers<[1], [0], [0], [1], [0, 0, 1, 1], [], []>} : vector<16x32xf32>, vector<32x32xf32>, vector<16x32xf32> -> vector<16x32xf32>
    %60 = arith.mulf %58, %10 : vector<16x32xf32>
    %61 = arith.mulf %59, %11 : vector<16x32xf32>
    %62 = arith.addf %60, %61 : vector<16x32xf32>
    %63 = vector.extract_strided_slice %50 {offsets = [0, 0], sizes = [16, 16], strides = [1, 1]} : vector<16x64xf32> to vector<16x16xf32>
    %64 = vector.extract_strided_slice %50 {offsets = [0, 16], sizes = [16, 16], strides = [1, 1]} : vector<16x64xf32> to vector<16x16xf32>
    %65 = tpu.concatenate %63, %64 in 0 : vector<16x16xf32>, vector<16x16xf32> -> vector<32x16xf32>
    %66 = vector.extract_strided_slice %62 {offsets = [0, 0], sizes = [16, 16], strides = [1, 1]} : vector<16x32xf32> to vector<16x16xf32>
    %67 = vector.extract_strided_slice %38 {offsets = [0, 0], sizes = [16, 16], strides = [1, 1]} : vector<16x32xf32> to vector<16x16xf32>
    %cst_22 = arith.constant dense<0.000000e+00> : vector<32x16xf32>
    %68 = tpu.matmul %65, %66, %cst_22 {dimension_numbers = #tpu.dot_dimension_numbers<[1], [1], [0], [0], [0, 0, 1, 0], [], []>} : vector<32x16xf32>, vector<16x16xf32>, vector<32x16xf32> -> vector<32x16xf32>
    %69 = arith.addf %68, %12 : vector<32x16xf32>
    %cst_23 = arith.constant dense<0xFF800000> : vector<32xf32>
    %70 = vector.multi_reduction <maximumf>, %69, %cst_23 [1] : vector<32x16xf32> to vector<32xf32>
    %71 = vector.shape_cast %70 : vector<32xf32> to vector<32x1xf32>
    %72 = vector.broadcast %71 : vector<32x1xf32> to vector<32x16xf32>
    %73 = arith.subf %69, %72 : vector<32x16xf32>
    %74 = math.exp %73 : vector<32x16xf32>
    %cst_24 = arith.constant dense<0.000000e+00> : vector<32xf32>
    %75 = vector.multi_reduction <add>, %74, %cst_24 [1] : vector<32x16xf32> to vector<32xf32>
    %76 = vector.shape_cast %75 : vector<32xf32> to vector<32x1xf32>
    %77 = tpu.reciprocal %76 {approx = true} : vector<32x1xf32> -> vector<32x1xf32>
    %78 = vector.broadcast %77 : vector<32x1xf32> to vector<32x16xf32>
    %79 = arith.mulf %74, %78 : vector<32x16xf32>
    %cst_25 = arith.constant dense<0.000000e+00> : vector<32x16xf32>
    %80 = tpu.matmul %79, %67, %cst_25 {dimension_numbers = #tpu.dot_dimension_numbers<[1], [0], [0], [1], [0, 0, 1, 1], [], []>} : vector<32x16xf32>, vector<16x16xf32>, vector<32x16xf32> -> vector<32x16xf32>
    %81 = vector.extract_strided_slice %80 {offsets = [0, 0], sizes = [16, 16], strides = [1, 1]} : vector<32x16xf32> to vector<16x16xf32>
    %82 = vector.extract_strided_slice %80 {offsets = [16, 0], sizes = [16, 16], strides = [1, 1]} : vector<32x16xf32> to vector<16x16xf32>
    %83 = vector.extract_strided_slice %50 {offsets = [0, 32], sizes = [16, 16], strides = [1, 1]} : vector<16x64xf32> to vector<16x16xf32>
    %84 = vector.extract_strided_slice %50 {offsets = [0, 48], sizes = [16, 16], strides = [1, 1]} : vector<16x64xf32> to vector<16x16xf32>
    %85 = tpu.concatenate %83, %84 in 0 : vector<16x16xf32>, vector<16x16xf32> -> vector<32x16xf32>
    %86 = vector.extract_strided_slice %62 {offsets = [0, 16], sizes = [16, 16], strides = [1, 1]} : vector<16x32xf32> to vector<16x16xf32>
    %87 = vector.extract_strided_slice %38 {offsets = [0, 16], sizes = [16, 16], strides = [1, 1]} : vector<16x32xf32> to vector<16x16xf32>
    %cst_26 = arith.constant dense<0.000000e+00> : vector<32x16xf32>
    %88 = tpu.matmul %85, %86, %cst_26 {dimension_numbers = #tpu.dot_dimension_numbers<[1], [1], [0], [0], [0, 0, 1, 0], [], []>} : vector<32x16xf32>, vector<16x16xf32>, vector<32x16xf32> -> vector<32x16xf32>
    %89 = arith.addf %88, %12 : vector<32x16xf32>
    %cst_27 = arith.constant dense<0xFF800000> : vector<32xf32>
    %90 = vector.multi_reduction <maximumf>, %89, %cst_27 [1] : vector<32x16xf32> to vector<32xf32>
    %91 = vector.shape_cast %90 : vector<32xf32> to vector<32x1xf32>
    %92 = vector.broadcast %91 : vector<32x1xf32> to vector<32x16xf32>
    %93 = arith.subf %89, %92 : vector<32x16xf32>
    %94 = math.exp %93 : vector<32x16xf32>
    %cst_28 = arith.constant dense<0.000000e+00> : vector<32xf32>
    %95 = vector.multi_reduction <add>, %94, %cst_28 [1] : vector<32x16xf32> to vector<32xf32>
    %96 = vector.shape_cast %95 : vector<32xf32> to vector<32x1xf32>
    %97 = tpu.reciprocal %96 {approx = true} : vector<32x1xf32> -> vector<32x1xf32>
    %98 = vector.broadcast %97 : vector<32x1xf32> to vector<32x16xf32>
    %99 = arith.mulf %94, %98 : vector<32x16xf32>
    %cst_29 = arith.constant dense<0.000000e+00> : vector<32x16xf32>
    %100 = tpu.matmul %99, %87, %cst_29 {dimension_numbers = #tpu.dot_dimension_numbers<[1], [0], [0], [1], [0, 0, 1, 1], [], []>} : vector<32x16xf32>, vector<16x16xf32>, vector<32x16xf32> -> vector<32x16xf32>
    %101 = vector.extract_strided_slice %100 {offsets = [0, 0], sizes = [16, 16], strides = [1, 1]} : vector<32x16xf32> to vector<16x16xf32>
    %102 = vector.extract_strided_slice %100 {offsets = [16, 0], sizes = [16, 16], strides = [1, 1]} : vector<32x16xf32> to vector<16x16xf32>
    %103 = tpu.concatenate %81, %82, %101, %102 in 1 : vector<16x16xf32>, vector<16x16xf32>, vector<16x16xf32>, vector<16x16xf32> -> vector<16x64xf32>
    %c0_30 = arith.constant 0 : index
    %c448 = arith.constant 448 : index
    %104 = vector.load %arg2[%c0_30, %c448] : memref<256x512xf32, #tpu.memory_space<vmem>>, vector<64x64xf32>
    %cst_31 = arith.constant dense<0.000000e+00> : vector<16x64xf32>
    %105 = tpu.matmul %103, %104, %cst_31 {dimension_numbers = #tpu.dot_dimension_numbers<[1], [0], [0], [1], [0, 0, 1, 1], [], []>} : vector<16x64xf32>, vector<64x64xf32>, vector<16x64xf32> -> vector<16x64xf32>
    %106 = arith.addf %17, %105 : vector<16x64xf32>
    %107 = arith.mulf %106, %106 : vector<16x64xf32>
    %cst_32 = arith.constant dense<0.000000e+00> : vector<16xf32>
    %108 = vector.multi_reduction <add>, %107, %cst_32 [1] : vector<16x64xf32> to vector<16xf32>
    %109 = vector.shape_cast %108 : vector<16xf32> to vector<16x1xf32>
    %cst_33 = arith.constant 6.400000e+01 : f32
    %110 = vector.broadcast %cst_33 : f32 to vector<16x1xf32>
    %111 = arith.divf %109, %110 : vector<16x1xf32>
    %cst_34 = arith.constant 9.99999997E-7 : f32
    %112 = vector.broadcast %cst_34 : f32 to vector<16x1xf32>
    %113 = arith.addf %111, %112 : vector<16x1xf32>
    %114 = math.rsqrt %113 : vector<16x1xf32>
    %115 = vector.broadcast %114 : vector<16x1xf32> to vector<16x64xf32>
    %116 = arith.mulf %106, %115 : vector<16x64xf32>
    %117 = vector.broadcast %19 : vector<1x64xf32> to vector<16x64xf32>
    %118 = arith.mulf %116, %117 : vector<16x64xf32>
    %c0_35 = arith.constant 0 : index
    %c128_36 = arith.constant 128 : index
    %119 = vector.load %arg2[%c0_35, %c128_36] : memref<256x512xf32, #tpu.memory_space<vmem>>, vector<64x256xf32>
    %cst_37 = arith.constant dense<0.000000e+00> : vector<16x256xf32>
    %120 = tpu.matmul %118, %119, %cst_37 {dimension_numbers = #tpu.dot_dimension_numbers<[1], [0], [0], [1], [0, 0, 1, 1], [], []>} : vector<16x64xf32>, vector<64x256xf32>, vector<16x256xf32> -> vector<16x256xf32>
    %121 = vector.extract_strided_slice %120 {offsets = [0, 0], sizes = [16, 128], strides = [1, 1]} : vector<16x256xf32> to vector<16x128xf32>
    %122 = vector.extract_strided_slice %120 {offsets = [0, 128], sizes = [16, 128], strides = [1, 1]} : vector<16x256xf32> to vector<16x128xf32>
    %123 = arith.negf %121 : vector<16x128xf32>
    %124 = math.exp %123 : vector<16x128xf32>
    %cst_38 = arith.constant 1.000000e+00 : f32
    %125 = vector.broadcast %cst_38 : f32 to vector<16x128xf32>
    %126 = arith.addf %125, %124 : vector<16x128xf32>
    %127 = arith.divf %125, %126 : vector<16x128xf32>
    %128 = arith.mulf %121, %127 : vector<16x128xf32>
    %129 = arith.mulf %128, %122 : vector<16x128xf32>
    %c0_39 = arith.constant 0 : index
    %c384 = arith.constant 384 : index
    %130 = vector.load %arg2[%c0_39, %c384] : memref<256x512xf32, #tpu.memory_space<vmem>>, vector<128x64xf32>
    %cst_40 = arith.constant dense<0.000000e+00> : vector<16x64xf32>
    %131 = tpu.matmul %129, %130, %cst_40 {dimension_numbers = #tpu.dot_dimension_numbers<[1], [0], [0], [1], [0, 0, 1, 1], [], []>} : vector<16x128xf32>, vector<128x64xf32>, vector<16x64xf32> -> vector<16x64xf32>
    %132 = arith.addf %106, %131 : vector<16x64xf32>
    %133 = vector.extract_strided_slice %0 {offsets = [6, 0], sizes = [1, 64], strides = [1, 1]} : vector<16x64xf32> to vector<1x64xf32>
    %134 = vector.extract_strided_slice %0 {offsets = [7, 0], sizes = [1, 64], strides = [1, 1]} : vector<16x64xf32> to vector<1x64xf32>
    %135 = vector.extract_strided_slice %0 {offsets = [8, 0], sizes = [1, 64], strides = [1, 1]} : vector<16x64xf32> to vector<1x64xf32>
    %136 = vector.extract_strided_slice %0 {offsets = [9, 0], sizes = [1, 32], strides = [1, 1]} : vector<16x64xf32> to vector<1x32xf32>
    %137 = arith.mulf %132, %132 : vector<16x64xf32>
    %cst_41 = arith.constant dense<0.000000e+00> : vector<16xf32>
    %138 = vector.multi_reduction <add>, %137, %cst_41 [1] : vector<16x64xf32> to vector<16xf32>
    %139 = vector.shape_cast %138 : vector<16xf32> to vector<16x1xf32>
    %cst_42 = arith.constant 6.400000e+01 : f32
    %140 = vector.broadcast %cst_42 : f32 to vector<16x1xf32>
    %141 = arith.divf %139, %140 : vector<16x1xf32>
    %cst_43 = arith.constant 9.99999997E-7 : f32
    %142 = vector.broadcast %cst_43 : f32 to vector<16x1xf32>
    %143 = arith.addf %141, %142 : vector<16x1xf32>
    %144 = math.rsqrt %143 : vector<16x1xf32>
    %145 = vector.broadcast %144 : vector<16x1xf32> to vector<16x64xf32>
    %146 = arith.mulf %132, %145 : vector<16x64xf32>
    %147 = vector.broadcast %133 : vector<1x64xf32> to vector<16x64xf32>
    %148 = arith.mulf %146, %147 : vector<16x64xf32>
    %c128_44 = arith.constant 128 : index
    %c0_45 = arith.constant 0 : index
    %149 = vector.load %arg2[%c128_44, %c0_45] : memref<256x512xf32, #tpu.memory_space<vmem>>, vector<64x128xf32>
    %cst_46 = arith.constant dense<0.000000e+00> : vector<16x128xf32>
    %150 = tpu.matmul %148, %149, %cst_46 {dimension_numbers = #tpu.dot_dimension_numbers<[1], [0], [0], [1], [0, 0, 1, 1], [], []>} : vector<16x64xf32>, vector<64x128xf32>, vector<16x128xf32> -> vector<16x128xf32>
    %151 = vector.extract_strided_slice %150 {offsets = [0, 0], sizes = [16, 64], strides = [1, 1]} : vector<16x128xf32> to vector<16x64xf32>
    %152 = vector.extract_strided_slice %150 {offsets = [0, 64], sizes = [16, 32], strides = [1, 1]} : vector<16x128xf32> to vector<16x32xf32>
    %153 = vector.extract_strided_slice %150 {offsets = [0, 96], sizes = [16, 32], strides = [1, 1]} : vector<16x128xf32> to vector<16x32xf32>
    %154 = arith.mulf %151, %151 : vector<16x64xf32>
    %cst_47 = arith.constant dense<0.000000e+00> : vector<16x64xf32>
    %155 = tpu.matmul %154, %3, %cst_47 {dimension_numbers = #tpu.dot_dimension_numbers<[1], [0], [0], [1], [0, 0, 1, 1], [], []>} : vector<16x64xf32>, vector<64x64xf32>, vector<16x64xf32> -> vector<16x64xf32>
    %cst_48 = arith.constant 9.99999997E-7 : f32
    %156 = vector.broadcast %cst_48 : f32 to vector<16x64xf32>
    %157 = arith.addf %155, %156 : vector<16x64xf32>
    %158 = math.rsqrt %157 : vector<16x64xf32>
    %159 = arith.mulf %151, %158 : vector<16x64xf32>
    %160 = vector.broadcast %135 : vector<1x64xf32> to vector<16x64xf32>
    %161 = arith.mulf %159, %160 : vector<16x64xf32>
    %cst_49 = arith.constant dense<0.000000e+00> : vector<16x64xf32>
    %162 = tpu.matmul %161, %4, %cst_49 {dimension_numbers = #tpu.dot_dimension_numbers<[1], [0], [0], [1], [0, 0, 1, 1], [], []>} : vector<16x64xf32>, vector<64x64xf32>, vector<16x64xf32> -> vector<16x64xf32>
    %163 = arith.mulf %161, %5 : vector<16x64xf32>
    %164 = arith.mulf %162, %6 : vector<16x64xf32>
    %165 = arith.addf %163, %164 : vector<16x64xf32>
    %166 = arith.mulf %152, %152 : vector<16x32xf32>
    %cst_50 = arith.constant dense<0.000000e+00> : vector<16x32xf32>
    %167 = tpu.matmul %166, %8, %cst_50 {dimension_numbers = #tpu.dot_dimension_numbers<[1], [0], [0], [1], [0, 0, 1, 1], [], []>} : vector<16x32xf32>, vector<32x32xf32>, vector<16x32xf32> -> vector<16x32xf32>
    %cst_51 = arith.constant 9.99999997E-7 : f32
    %168 = vector.broadcast %cst_51 : f32 to vector<16x32xf32>
    %169 = arith.addf %167, %168 : vector<16x32xf32>
    %170 = math.rsqrt %169 : vector<16x32xf32>
    %171 = arith.mulf %152, %170 : vector<16x32xf32>
    %172 = vector.broadcast %136 : vector<1x32xf32> to vector<16x32xf32>
    %173 = arith.mulf %171, %172 : vector<16x32xf32>
    %cst_52 = arith.constant dense<0.000000e+00> : vector<16x32xf32>
    %174 = tpu.matmul %173, %9, %cst_52 {dimension_numbers = #tpu.dot_dimension_numbers<[1], [0], [0], [1], [0, 0, 1, 1], [], []>} : vector<16x32xf32>, vector<32x32xf32>, vector<16x32xf32> -> vector<16x32xf32>
    %175 = arith.mulf %173, %10 : vector<16x32xf32>
    %176 = arith.mulf %174, %11 : vector<16x32xf32>
    %177 = arith.addf %175, %176 : vector<16x32xf32>
    %178 = vector.extract_strided_slice %165 {offsets = [0, 0], sizes = [16, 16], strides = [1, 1]} : vector<16x64xf32> to vector<16x16xf32>
    %179 = vector.extract_strided_slice %165 {offsets = [0, 16], sizes = [16, 16], strides = [1, 1]} : vector<16x64xf32> to vector<16x16xf32>
    %180 = tpu.concatenate %178, %179 in 0 : vector<16x16xf32>, vector<16x16xf32> -> vector<32x16xf32>
    %181 = vector.extract_strided_slice %177 {offsets = [0, 0], sizes = [16, 16], strides = [1, 1]} : vector<16x32xf32> to vector<16x16xf32>
    %182 = vector.extract_strided_slice %153 {offsets = [0, 0], sizes = [16, 16], strides = [1, 1]} : vector<16x32xf32> to vector<16x16xf32>
    %cst_53 = arith.constant dense<0.000000e+00> : vector<32x16xf32>
    %183 = tpu.matmul %180, %181, %cst_53 {dimension_numbers = #tpu.dot_dimension_numbers<[1], [1], [0], [0], [0, 0, 1, 0], [], []>} : vector<32x16xf32>, vector<16x16xf32>, vector<32x16xf32> -> vector<32x16xf32>
    %184 = arith.addf %183, %12 : vector<32x16xf32>
    %cst_54 = arith.constant dense<0xFF800000> : vector<32xf32>
    %185 = vector.multi_reduction <maximumf>, %184, %cst_54 [1] : vector<32x16xf32> to vector<32xf32>
    %186 = vector.shape_cast %185 : vector<32xf32> to vector<32x1xf32>
    %187 = vector.broadcast %186 : vector<32x1xf32> to vector<32x16xf32>
    %188 = arith.subf %184, %187 : vector<32x16xf32>
    %189 = math.exp %188 : vector<32x16xf32>
    %cst_55 = arith.constant dense<0.000000e+00> : vector<32xf32>
    %190 = vector.multi_reduction <add>, %189, %cst_55 [1] : vector<32x16xf32> to vector<32xf32>
    %191 = vector.shape_cast %190 : vector<32xf32> to vector<32x1xf32>
    %192 = tpu.reciprocal %191 {approx = true} : vector<32x1xf32> -> vector<32x1xf32>
    %193 = vector.broadcast %192 : vector<32x1xf32> to vector<32x16xf32>
    %194 = arith.mulf %189, %193 : vector<32x16xf32>
    %cst_56 = arith.constant dense<0.000000e+00> : vector<32x16xf32>
    %195 = tpu.matmul %194, %182, %cst_56 {dimension_numbers = #tpu.dot_dimension_numbers<[1], [0], [0], [1], [0, 0, 1, 1], [], []>} : vector<32x16xf32>, vector<16x16xf32>, vector<32x16xf32> -> vector<32x16xf32>
    %196 = vector.extract_strided_slice %195 {offsets = [0, 0], sizes = [16, 16], strides = [1, 1]} : vector<32x16xf32> to vector<16x16xf32>
    %197 = vector.extract_strided_slice %195 {offsets = [16, 0], sizes = [16, 16], strides = [1, 1]} : vector<32x16xf32> to vector<16x16xf32>
    %198 = vector.extract_strided_slice %165 {offsets = [0, 32], sizes = [16, 16], strides = [1, 1]} : vector<16x64xf32> to vector<16x16xf32>
    %199 = vector.extract_strided_slice %165 {offsets = [0, 48], sizes = [16, 16], strides = [1, 1]} : vector<16x64xf32> to vector<16x16xf32>
    %200 = tpu.concatenate %198, %199 in 0 : vector<16x16xf32>, vector<16x16xf32> -> vector<32x16xf32>
    %201 = vector.extract_strided_slice %177 {offsets = [0, 16], sizes = [16, 16], strides = [1, 1]} : vector<16x32xf32> to vector<16x16xf32>
    %202 = vector.extract_strided_slice %153 {offsets = [0, 16], sizes = [16, 16], strides = [1, 1]} : vector<16x32xf32> to vector<16x16xf32>
    %cst_57 = arith.constant dense<0.000000e+00> : vector<32x16xf32>
    %203 = tpu.matmul %200, %201, %cst_57 {dimension_numbers = #tpu.dot_dimension_numbers<[1], [1], [0], [0], [0, 0, 1, 0], [], []>} : vector<32x16xf32>, vector<16x16xf32>, vector<32x16xf32> -> vector<32x16xf32>
    %204 = arith.addf %203, %12 : vector<32x16xf32>
    %cst_58 = arith.constant dense<0xFF800000> : vector<32xf32>
    %205 = vector.multi_reduction <maximumf>, %204, %cst_58 [1] : vector<32x16xf32> to vector<32xf32>
    %206 = vector.shape_cast %205 : vector<32xf32> to vector<32x1xf32>
    %207 = vector.broadcast %206 : vector<32x1xf32> to vector<32x16xf32>
    %208 = arith.subf %204, %207 : vector<32x16xf32>
    %209 = math.exp %208 : vector<32x16xf32>
    %cst_59 = arith.constant dense<0.000000e+00> : vector<32xf32>
    %210 = vector.multi_reduction <add>, %209, %cst_59 [1] : vector<32x16xf32> to vector<32xf32>
    %211 = vector.shape_cast %210 : vector<32xf32> to vector<32x1xf32>
    %212 = tpu.reciprocal %211 {approx = true} : vector<32x1xf32> -> vector<32x1xf32>
    %213 = vector.broadcast %212 : vector<32x1xf32> to vector<32x16xf32>
    %214 = arith.mulf %209, %213 : vector<32x16xf32>
    %cst_60 = arith.constant dense<0.000000e+00> : vector<32x16xf32>
    %215 = tpu.matmul %214, %202, %cst_60 {dimension_numbers = #tpu.dot_dimension_numbers<[1], [0], [0], [1], [0, 0, 1, 1], [], []>} : vector<32x16xf32>, vector<16x16xf32>, vector<32x16xf32> -> vector<32x16xf32>
    %216 = vector.extract_strided_slice %215 {offsets = [0, 0], sizes = [16, 16], strides = [1, 1]} : vector<32x16xf32> to vector<16x16xf32>
    %217 = vector.extract_strided_slice %215 {offsets = [16, 0], sizes = [16, 16], strides = [1, 1]} : vector<32x16xf32> to vector<16x16xf32>
    %218 = tpu.concatenate %196, %197, %216, %217 in 1 : vector<16x16xf32>, vector<16x16xf32>, vector<16x16xf32>, vector<16x16xf32> -> vector<16x64xf32>
    %c128_61 = arith.constant 128 : index
    %c448_62 = arith.constant 448 : index
    %219 = vector.load %arg2[%c128_61, %c448_62] : memref<256x512xf32, #tpu.memory_space<vmem>>, vector<64x64xf32>
    %cst_63 = arith.constant dense<0.000000e+00> : vector<16x64xf32>
    %220 = tpu.matmul %218, %219, %cst_63 {dimension_numbers = #tpu.dot_dimension_numbers<[1], [0], [0], [1], [0, 0, 1, 1], [], []>} : vector<16x64xf32>, vector<64x64xf32>, vector<16x64xf32> -> vector<16x64xf32>
    %221 = arith.addf %132, %220 : vector<16x64xf32>
    %222 = arith.mulf %221, %221 : vector<16x64xf32>
    %cst_64 = arith.constant dense<0.000000e+00> : vector<16xf32>
    %223 = vector.multi_reduction <add>, %222, %cst_64 [1] : vector<16x64xf32> to vector<16xf32>
    %224 = vector.shape_cast %223 : vector<16xf32> to vector<16x1xf32>
    %cst_65 = arith.constant 6.400000e+01 : f32
    %225 = vector.broadcast %cst_65 : f32 to vector<16x1xf32>
    %226 = arith.divf %224, %225 : vector<16x1xf32>
    %cst_66 = arith.constant 9.99999997E-7 : f32
    %227 = vector.broadcast %cst_66 : f32 to vector<16x1xf32>
    %228 = arith.addf %226, %227 : vector<16x1xf32>
    %229 = math.rsqrt %228 : vector<16x1xf32>
    %230 = vector.broadcast %229 : vector<16x1xf32> to vector<16x64xf32>
    %231 = arith.mulf %221, %230 : vector<16x64xf32>
    %232 = vector.broadcast %134 : vector<1x64xf32> to vector<16x64xf32>
    %233 = arith.mulf %231, %232 : vector<16x64xf32>
    %c128_67 = arith.constant 128 : index
    %c128_68 = arith.constant 128 : index
    %234 = vector.load %arg2[%c128_67, %c128_68] : memref<256x512xf32, #tpu.memory_space<vmem>>, vector<64x256xf32>
    %cst_69 = arith.constant dense<0.000000e+00> : vector<16x256xf32>
    %235 = tpu.matmul %233, %234, %cst_69 {dimension_numbers = #tpu.dot_dimension_numbers<[1], [0], [0], [1], [0, 0, 1, 1], [], []>} : vector<16x64xf32>, vector<64x256xf32>, vector<16x256xf32> -> vector<16x256xf32>
    %236 = vector.extract_strided_slice %235 {offsets = [0, 0], sizes = [16, 128], strides = [1, 1]} : vector<16x256xf32> to vector<16x128xf32>
    %237 = vector.extract_strided_slice %235 {offsets = [0, 128], sizes = [16, 128], strides = [1, 1]} : vector<16x256xf32> to vector<16x128xf32>
    %238 = arith.negf %236 : vector<16x128xf32>
    %239 = math.exp %238 : vector<16x128xf32>
    %cst_70 = arith.constant 1.000000e+00 : f32
    %240 = vector.broadcast %cst_70 : f32 to vector<16x128xf32>
    %241 = arith.addf %240, %239 : vector<16x128xf32>
    %242 = arith.divf %240, %241 : vector<16x128xf32>
    %243 = arith.mulf %236, %242 : vector<16x128xf32>
    %244 = arith.mulf %243, %237 : vector<16x128xf32>
    %c128_71 = arith.constant 128 : index
    %c384_72 = arith.constant 384 : index
    %245 = vector.load %arg2[%c128_71, %c384_72] : memref<256x512xf32, #tpu.memory_space<vmem>>, vector<128x64xf32>
    %cst_73 = arith.constant dense<0.000000e+00> : vector<16x64xf32>
    %246 = tpu.matmul %244, %245, %cst_73 {dimension_numbers = #tpu.dot_dimension_numbers<[1], [0], [0], [1], [0, 0, 1, 1], [], []>} : vector<16x128xf32>, vector<128x64xf32>, vector<16x64xf32> -> vector<16x64xf32>
    %247 = arith.addf %221, %246 : vector<16x64xf32>
    %248 = arith.mulf %247, %247 : vector<16x64xf32>
    %cst_74 = arith.constant dense<0.000000e+00> : vector<16xf32>
    %249 = vector.multi_reduction <add>, %248, %cst_74 [1] : vector<16x64xf32> to vector<16xf32>
    %250 = vector.shape_cast %249 : vector<16xf32> to vector<16x1xf32>
    %cst_75 = arith.constant 6.400000e+01 : f32
    %251 = vector.broadcast %cst_75 : f32 to vector<16x1xf32>
    %252 = arith.divf %250, %251 : vector<16x1xf32>
    %cst_76 = arith.constant 9.99999997E-7 : f32
    %253 = vector.broadcast %cst_76 : f32 to vector<16x1xf32>
    %254 = arith.addf %252, %253 : vector<16x1xf32>
    %255 = math.rsqrt %254 : vector<16x1xf32>
    %256 = vector.broadcast %255 : vector<16x1xf32> to vector<16x64xf32>
    %257 = arith.mulf %247, %256 : vector<16x64xf32>
    %258 = vector.broadcast %2 : vector<1x64xf32> to vector<16x64xf32>
    %259 = arith.mulf %257, %258 : vector<16x64xf32>
    %c0_77 = arith.constant 0 : index
    %c0_78 = arith.constant 0 : index
    %260 = vector.load %arg4[%c0_77, %c0_78] : memref<64x320xf32, #tpu.memory_space<vmem>>, vector<64x128xf32>
    %cst_79 = arith.constant dense<0.000000e+00> : vector<16x128xf32>
    %261 = tpu.matmul %259, %260, %cst_79 {dimension_numbers = #tpu.dot_dimension_numbers<[1], [0], [0], [1], [0, 0, 1, 1], [], []>} : vector<16x64xf32>, vector<64x128xf32>, vector<16x128xf32> -> vector<16x128xf32>
    %cst_80 = arith.constant -3.000000e+01 : f32
    %cst_81 = arith.constant 3.000000e+01 : f32
    %262 = vector.broadcast %cst_80 : f32 to vector<16x128xf32>
    %263 = arith.maximumf %262, %261 : vector<16x128xf32>
    %264 = vector.broadcast %cst_81 : f32 to vector<16x128xf32>
    %265 = arith.minimumf %264, %263 : vector<16x128xf32>
    %c0_82 = arith.constant 0 : index
    %c0_83 = arith.constant 0 : index
    %266 = vector.load %arg5[%c0_82, %c0_83] : memref<16x128xf32, #tpu.memory_space<vmem>>, vector<16x128xf32>
    tpu.vector_store %arg5[%c0_82, %c0_83], %265 {strides = array<i32>} : memref<16x128xf32, #tpu.memory_space<vmem>>, vector<16x128xf32>,
    %c0_84 = arith.constant 0 : index
    %c0_85 = arith.constant 0 : index
    %267 = vector.load %arg6[%c0_84, %c0_85] : memref<16x64xf32, #tpu.memory_space<vmem>>, vector<16x64xf32>
    tpu.vector_store %arg6[%c0_84, %c0_85], %259 {strides = array<i32>} : memref<16x64xf32, #tpu.memory_space<vmem>>, vector<16x64xf32>,
    return
  }
}

</mosaic_0001>

<llo_original>
// kernel: draft_model_forward.1
$region0: #{draft_model_forward.1}
  #allocation0 [shape = 'u32[]', space=smem, size = 0x4, offset = 0x4, fixed_abs, tag = 'smem constant byte address 0x4 - core index']
  #allocation1 [shape = 'u32[144,128]{1,0:T(1,128)}', space=vmem, size = 0x12000, scoped, tag = 'internal scratch']
  %s0 = inlined_call_operand.vmem [shape: f32[16,208], index: 0, kind: input, shape index: {}]
  %s1 = inlined_call_operand.vmem [shape: f32[208,64], index: 1, kind: input, shape index: {}]
  %s2 = inlined_call_operand.vmem [shape: f32[256,512], index: 2, kind: input, shape index: {}]
  %s3 = inlined_call_operand.vmem [shape: f32[16,64], index: 3, kind: input, shape index: {}]
  %s4 = inlined_call_operand.vmem [shape: f32[64,320], index: 4, kind: input, shape index: {}]
  %s5 = inlined_call_operand.hbm [shape: f32[16,128], index: 5, kind: output, shape index: {0}]
  %s6 = inlined_call_operand.hbm [shape: f32[16,64], index: 6, kind: output, shape index: {1}]
  %7 = xla_tuple %s5, %s6
  %s8 = sld [smem:[#allocation0]]
  $region38: #{draft_model_forward.1} parent=0
    _
  %s10 = ssub.s32 1, %s8
  %s11 = scalar_select 0, %s10, %s8
  $region1: #{draft_model_forward.1} parent=0
    #allocation2 [shape = 'u8[8192]{0}', space=vmem, size = 0x2000, scoped, tag = 'output window, operand 0, single buffered']
    #allocation3 [shape = 's32[1]{0}', space=sflag, size = 0x4, scoped, tag = 'scoped memory for draft_model_forward.1']
    #allocation4 [shape = 'u8[8192]{0}', space=vmem, size = 0x2000, scoped, tag = 'output window, operand 1, single buffered']
    #allocation5 [shape = 's32[1]{0}', space=sflag, size = 0x4, scoped, tag = 'scoped memory for draft_model_forward.1']
    %12 = vsyncpa [#allocation3], 0
    %13 = vsyncpa [#allocation5], 0
    // Predicated region
    $region2: #{draft_model_forward.1} parent=1 // pred_check
      _
    $region3: #{draft_model_forward.1} parent=1 // pred_check_branch
      %15 = sbr.rel (0) target = $region5
    $region4: #{draft_model_forward.1} parent=1 // pred_region
      _
    $region5: #{draft_model_forward.1} parent=1 // pred_fallthru
      _
    // Predicated region
    $region6: #{draft_model_forward.1} parent=1 // pred_check
      _
    $region7: #{draft_model_forward.1} parent=1 // pred_check_branch
      %17 = sbr.rel (0) target = $region9
    $region8: #{draft_model_forward.1} parent=1 // pred_region
      _
    $region9: #{draft_model_forward.1} parent=1 // pred_fallthru
      _
    // Predicated region
    $region10: #{draft_model_forward.1} parent=1 // pred_check
      _
    $region11: #{draft_model_forward.1} parent=1 // pred_check_branch
      %19 = sbr.rel (0) target = $region13
    $region12: #{draft_model_forward.1} parent=1 // pred_region
      _
    $region13: #{draft_model_forward.1} parent=1 // pred_fallthru
      _
    // Predicated region
    $region14: #{draft_model_forward.1} parent=1 // pred_check
      _
    $region15: #{draft_model_forward.1} parent=1 // pred_check_branch
      %21 = sbr.rel (0) target = $region17
    $region16: #{draft_model_forward.1} parent=1 // pred_region
      _
    $region17: #{draft_model_forward.1} parent=1 // pred_fallthru
      _
    // Predicated region
    $region18: #{draft_model_forward.1} parent=1 // pred_check
      _
    $region19: #{draft_model_forward.1} parent=1 // pred_check_branch
      %23 = sbr.rel (0) target = $region21
    $region20: #{draft_model_forward.1} parent=1 // pred_region
      _
    $region21: #{draft_model_forward.1} parent=1 // pred_fallthru
      _
    %v24 = vld [vmem:[%s3] sm:$0xff]
    %v25 = vld [vmem:[%s3 + $0x8] sm:$0xff]
    %v26 = vld [vmem:[%s4 + $0x8] sm:$0xff]
    %v27 = vld [vmem:[%s4 + $0x20] sm:$0xff]
    %v28 = vld [vmem:[%s4 + $0x38] sm:$0xff]
    %v29 = vld [vmem:[%s4 + $0x50] sm:$0xff]
    %v30 = vld [vmem:[%s4 + $0x68] sm:$0xff]
    %v31 = vld [vmem:[%s4 + $0x80] sm:$0xff]
    %v32 = vld [vmem:[%s4 + $0x98] sm:$0xff]
    %v33 = vld [vmem:[%s4 + $0xb0] sm:$0xff]
    %v34 = vld [vmem:[%s4 + $0x10] sm:$0xff]
    %v35 = vld [vmem:[%s4 + $0x28] sm:$0xff]
    %v36 = vld [vmem:[%s4 + $0x40] sm:$0xff]
    %v37 = vld [vmem:[%s4 + $0x58] sm:$0xff]
    %v38 = vld [vmem:[%s4 + $0x70] sm:$0xff]
    %v39 = vld [vmem:[%s4 + $0x88] sm:$0xff]
    %v40 = vld [vmem:[%s0] sm:$0xff]
    %v41 = vld [vmem:[%s0 + $0x8] sm:$0xff]
    %v42 = vld [vmem:[%s0 + $0x10] sm:$0xff]
    %v43 = vld [vmem:[%s0 + $0x18] sm:$0xff]
    %v44 = vld [vmem:[%s1] sm:$0xff]
    %v45 = vld [vmem:[%s1 + $0x8] sm:$0xff]
    %v46 = vld [vmem:[%s1 + $0x10] sm:$0xff]
    %v47 = vld [vmem:[%s1 + $0x18] sm:$0xff]
    %v48 = vld [vmem:[%s1 + $0x20] sm:$0xff]
    %v49 = vld [vmem:[%s1 + $0x28] sm:$0xff]
    %v50 = vld [vmem:[%s1 + $0x30] sm:$0xff]
    %v51 = vld [vmem:[%s1 + $0x38] sm:$0xff]
    %v52 = vld [vmem:[%s1 + $0x40] sm:$0xff]
    %v53 = vld [vmem:[%s1 + $0x48] sm:$0xff]
    %v54 = vld [vmem:[%s1 + $0x50] sm:$0xff]
    %v55 = vld [vmem:[%s1 + $0x58] sm:$0xff]
    %v56 = vld [vmem:[%s1 + $0x60] sm:$0xff]
    %v57 = vld [vmem:[%s1 + $0x68] sm:$0xff]
    %v58 = vld [vmem:[%s1 + $0x70] sm:$0xff]
    %v59 = vld [vmem:[%s1 + $0x78] sm:$0xff]
    %v60 = vld [vmem:[%s1 + $0x80] sm:$0xff]
    %v61 = vld [vmem:[%s1 + $0x88] sm:$0xff]
    %v62 = vld [vmem:[%s1 + $0x90] sm:$0xff]
    %v63 = vld [vmem:[%s1 + $0x98] sm:$0xff]
    %v64 = vld [vmem:[%s1 + $0xa0] sm:$0xff]
    %v65 = vld [vmem:[%s1 + $0xa8] sm:$0xff]
    %v66 = vld [vmem:[%s1 + $0xb0] sm:$0xff]
    %v67 = vld [vmem:[%s1 + $0xb8] sm:$0xff]
    %v68 = vld [vmem:[%s1 + $0xc0] sm:$0xff]
    %v69 = vld [vmem:[%s1 + $0xc8] sm:$0xff]
    %v70 = vlaneseq
    %v71 = vshrl.u32 %v70, 7
    %v72 = vsub.s32 0, %v71
    %v73 = vrot.slane %v24, %v72
    %vm74 = vcmask 654336
    %v76 = vsel %vm74, %v41, 0
    %v79 = vsel %vm74, %v43, 0
    %81 = vmatprep.subr.mxu0 0.0
    %82 = vmatpush1.msra.mxu0 %v44
    %83 = vmatprep.subr.mxu0 0.0
    %84 = vmatpush1.msra.mxu0 %v45
    %85 = vmatprep.subr.mxu0 0.0
    %86 = vmatpush1.msra.mxu0 %v46
    %87 = vmatprep.subr.mxu0 0.0
    %88 = vmatpush1.msra.mxu0 %v47
    %89 = vmatprep.subr.mxu0 0.0
    %90 = vmatpush1.msra.mxu0 %v48
    %91 = vmatprep.subr.mxu0 0.0
    %92 = vmatpush1.msra.mxu0 %v49
    %93 = vmatprep.subr.mxu0 0.0
    %94 = vmatpush1.msra.mxu0 %v50
    %95 = vmatprep.subr.mxu0 0.0
    %96 = vmatpush1.msra.mxu0 %v51
    %97 = vmatprep.subr.mxu0 0.0
    %98 = vmatpush1.msra.mxu0 %v52
    %99 = vmatprep.subr.mxu0 0.0
    %100 = vmatpush1.msra.mxu0 %v53
    %101 = vmatprep.subr.mxu0 0.0
    %102 = vmatpush1.msra.mxu0 %v54
    %103 = vmatprep.subr.mxu0 0.0
    %104 = vmatpush1.msra.mxu0 %v55
    %105 = vmatprep.subr.mxu0 0.0
    %106 = vmatpush1.msra.mxu0 %v56
    %107 = vmatprep.subr.mxu0 0.0
    %108 = vmatpush1.msra.mxu0 %v57
    %109 = vmatprep.subr.mxu0 0.0
    %110 = vmatpush1.msra.mxu0 %v58
    %111 = vmatprep.subr.mxu0 0.0
    %112 = vmatpush1.msra.mxu0 %v59
    %113 = vmatprep.subr.mxu0 0.0
    %114 = vmatpush1.msra.mxu0 %v60
    %115 = vmatprep.subr.mxu0 0.0
    %116 = vmatpush1.msra.mxu0 %v61
    %117 = vmatprep.subr.mxu0 0.0
    %118 = vmatpush1.msra.mxu0 %v62
    %119 = vmatprep.subr.mxu0 0.0
    %120 = vmatpush1.msra.mxu0 %v63
    %121 = vmatprep.subr.mxu0 0.0
    %122 = vmatpush1.msra.mxu0 %v64
    %123 = vmatprep.subr.mxu0 0.0
    %124 = vmatpush1.msra.mxu0 %v65
    %125 = vmatprep.subr.mxu0 0.0
    %126 = vmatpush1.msra.mxu0 %v66
    %127 = vmatprep.subr.mxu0 0.0
    %128 = vmatpush1.msra.mxu0 %v67
    %129 = vmatprep.subr.mxu0 0.0
    %130 = vmatpush1.msra.mxu0 %v68
    %131 = vmatprep.subr.mxu0 0.0
    %132 = vmatpush1.msra.mxu0 %v69
    %133 = vmatprep.subr.mxu0 0.0
    %134 = vmatpush1.msra.mxu0 0.0
    %135 = vmatprep.subr.mxu0 0.0
    %136 = vmatpush1.msra.mxu0 0.0
    %137 = vmatprep.subr.mxu0 0.0
    %138 = vmatpush1.msra.mxu0 0.0
    %139 = vmatprep.subr.mxu0 0.0
    %140 = vmatpush1.msra.mxu0 0.0
    %141 = vmatprep.subr.mxu0 0.0
    %142 = vmatpush1.msra.mxu0 0.0
    %143 = vmatprep.subr.mxu0 0.0
    %144 = vmatpush1.msra.mxu0 0.0
    %145 = vmatprep.mubr.f32.mxu0 %v76
    %146 = vmatmul.mubr.f32.gmra.mrb[0].mxu0 %v40
    %v147 = vpop.f32.mrb[0].mxu0
    %v148 = vadd.f32 %v73, %v147
    %v149 = vpop.f32.mrb[0].mxu0
    %150 = vmatprep.mubr.f32.mxu0 %v79
    %151 = vmatmul.mubr.f32.gmra.mrb[0].mxu0 %v42
    %v152 = vpop.f32.mrb[0].mxu0
    %v153 = vadd.f32 %v73, %v152
    %v154 = vpop.f32.mrb[0].mxu0
    %155 = vdwg.mxu0
    %v156 = vmul.f32 %v148, %v148
    %v157 = vmul.f32 %v153, %v153
    %vm158 = vcmask 523264
    %v159 = vsel %vm158, %v156, 0.0
    %160 = vadd.xlane.f32.xlu0 %v159
    %v161 = vpop.xlane.xlu0 %160
    %v162 = vsel %vm158, %v157, 0.0
    %163 = vadd.xlane.f32.xlu0 %v162
    %v164 = vpop.xlane.xlu0 %163
    %v165 = vrcp.pop 64.0
    %v166 = vmul.f32 %v161, %v165
    %v167 = vmul.f32 %v164, %v165
    %v168 = vadd.f32 %v166, 1e-06
    %v169 = vadd.f32 %v167, 1e-06
    %v170 = vrsqrt.pop %v168
    %v171 = vrsqrt.pop %v169
    %v172 = vmul.f32 %v148, %v170
    %v173 = vmul.f32 %v153, %v171
    %v174 = vlaneseq
    %v175 = vshrl.u32 %v174, 7
    %v176 = vsub.s32 2, %v175
    %v177 = vrot.slane %v24, %v176
    %v178 = vmul.f32 %v172, %v177
    %v179 = vmul.f32 %v173, %v177
    %v180 = vld [vmem:[%s2] sm:$0xff]
    %v181 = vld [vmem:[%s2 + $0x20] sm:$0xff]
    %v182 = vld [vmem:[%s2 + $0x40] sm:$0xff]
    %v183 = vld [vmem:[%s2 + $0x60] sm:$0xff]
    %v184 = vld [vmem:[%s2 + $0x80] sm:$0xff]
    %v185 = vld [vmem:[%s2 + $0xa0] sm:$0xff]
    %v186 = vld [vmem:[%s2 + $0xc0] sm:$0xff]
    %v187 = vld [vmem:[%s2 + $0xe0] sm:$0xff]
    %v189 = vsel %vm158, %v178, 0
    %v192 = vsel %vm158, %v179, 0
    %194 = vmatprep.subr.mxu0 0.0
    %195 = vmatpush1.msra.mxu0 %v180
    %196 = vmatprep.subr.mxu0 0.0
    %197 = vmatpush1.msra.mxu0 %v181
    %198 = vmatprep.subr.mxu0 0.0
    %199 = vmatpush1.msra.mxu0 %v182
    %200 = vmatprep.subr.mxu0 0.0
    %201 = vmatpush1.msra.mxu0 %v183
    %202 = vmatprep.subr.mxu0 0.0
    %203 = vmatpush1.msra.mxu0 %v184
    %204 = vmatprep.subr.mxu0 0.0
    %205 = vmatpush1.msra.mxu0 %v185
    %206 = vmatprep.subr.mxu0 0.0
    %207 = vmatpush1.msra.mxu0 %v186
    %208 = vmatprep.subr.mxu0 0.0
    %209 = vmatpush1.msra.mxu0 %v187
    %210 = vmatprep.subr.mxu0 0.0
    %211 = vmatpush1.msra.mxu0 0.0
    %212 = vmatprep.subr.mxu0 0.0
    %213 = vmatpush1.msra.mxu0 0.0
    %214 = vmatprep.subr.mxu0 0.0
    %215 = vmatpush1.msra.mxu0 0.0
    %216 = vmatprep.subr.mxu0 0.0
    %217 = vmatpush1.msra.mxu0 0.0
    %218 = vmatprep.subr.mxu0 0.0
    %219 = vmatpush1.msra.mxu0 0.0
    %220 = vmatprep.subr.mxu0 0.0
    %221 = vmatpush1.msra.mxu0 0.0
    %222 = vmatprep.subr.mxu0 0.0
    %223 = vmatpush1.msra.mxu0 0.0
    %224 = vmatprep.subr.mxu0 0.0
    %225 = vmatpush1.msra.mxu0 0.0
    %226 = vmatprep.subr.mxu0 0.0
    %227 = vmatpush1.msra.mxu0 0.0
    %228 = vmatprep.subr.mxu0 0.0
    %229 = vmatpush1.msra.mxu0 0.0
    %230 = vmatprep.subr.mxu0 0.0
    %231 = vmatpush1.msra.mxu0 0.0
    %232 = vmatprep.subr.mxu0 0.0
    %233 = vmatpush1.msra.mxu0 0.0
    %234 = vmatprep.subr.mxu0 0.0
    %235 = vmatpush1.msra.mxu0 0.0
    %236 = vmatprep.subr.mxu0 0.0
    %237 = vmatpush1.msra.mxu0 0.0
    %238 = vmatprep.subr.mxu0 0.0
    %239 = vmatpush1.msra.mxu0 0.0
    %240 = vmatprep.subr.mxu0 0.0
    %241 = vmatpush1.msra.mxu0 0.0
    %242 = vmatprep.subr.mxu0 0.0
    %243 = vmatpush1.msra.mxu0 0.0
    %244 = vmatprep.subr.mxu0 0.0
    %245 = vmatpush1.msra.mxu0 0.0
    %246 = vmatprep.subr.mxu0 0.0
    %247 = vmatpush1.msra.mxu0 0.0
    %248 = vmatprep.subr.mxu0 0.0
    %249 = vmatpush1.msra.mxu0 0.0
    %250 = vmatprep.subr.mxu0 0.0
    %251 = vmatpush1.msra.mxu0 0.0
    %252 = vmatprep.subr.mxu0 0.0
    %253 = vmatpush1.msra.mxu0 0.0
    %254 = vmatprep.subr.mxu0 0.0
    %255 = vmatpush1.msra.mxu0 0.0
    %256 = vmatprep.subr.mxu0 0.0
    %257 = vmatpush1.msra.mxu0 0.0
    %258 = vmatprep.mubr.f32.mxu0 0.0
    %259 = vmatmul.mubr.f32.gmra.mrb[0].mxu0 %v189
    %v260 = vpop.f32.mrb[0].mxu0
    %v261 = vadd.f32 0.0, %v260
    %v262 = vpop.f32.mrb[0].mxu0
    %263 = vmatprep.mubr.f32.mxu0 0.0
    %264 = vmatmul.mubr.f32.gmra.mrb[0].mxu0 %v192
    %v265 = vpop.f32.mrb[0].mxu0
    %v266 = vadd.f32 0.0, %v265
    %v267 = vpop.f32.mrb[0].mxu0
    %268 = vdwg.mxu0
    %v269 = vmul.f32 %v261, %v261
    %v270 = vmul.f32 %v266, %v266
    %v272 = vsel %vm158, %v269, 0
    %v275 = vsel %vm158, %v270, 0
    %277 = vmatprep.subr.mxu0 0.0
    %278 = vmatpush1.msra.mxu0 %v26
    %279 = vmatprep.subr.mxu0 0.0
    %280 = vmatpush1.msra.mxu0 %v27
    %281 = vmatprep.subr.mxu0 0.0
    %282 = vmatpush1.msra.mxu0 %v28
    %283 = vmatprep.subr.mxu0 0.0
    %284 = vmatpush1.msra.mxu0 %v29
    %285 = vmatprep.subr.mxu0 0.0
    %286 = vmatpush1.msra.mxu0 %v30
    %287 = vmatprep.subr.mxu0 0.0
    %288 = vmatpush1.msra.mxu0 %v31
    %289 = vmatprep.subr.mxu0 0.0
    %290 = vmatpush1.msra.mxu0 %v32
    %291 = vmatprep.subr.mxu0 0.0
    %292 = vmatpush1.msra.mxu0 %v33
    %293 = vmatprep.subr.mxu0 0.0
    %294 = vmatpush1.msra.mxu0 0.0
    %295 = vmatprep.subr.mxu0 0.0
    %296 = vmatpush1.msra.mxu0 0.0
    %297 = vmatprep.subr.mxu0 0.0
    %298 = vmatpush1.msra.mxu0 0.0
    %299 = vmatprep.subr.mxu0 0.0
    %300 = vmatpush1.msra.mxu0 0.0
    %301 = vmatprep.subr.mxu0 0.0
    %302 = vmatpush1.msra.mxu0 0.0
    %303 = vmatprep.subr.mxu0 0.0
    %304 = vmatpush1.msra.mxu0 0.0
    %305 = vmatprep.subr.mxu0 0.0
    %306 = vmatpush1.msra.mxu0 0.0
    %307 = vmatprep.subr.mxu0 0.0
    %308 = vmatpush1.msra.mxu0 0.0
    %309 = vmatprep.subr.mxu0 0.0
    %310 = vmatpush1.msra.mxu0 0.0
    %311 = vmatprep.subr.mxu0 0.0
    %312 = vmatpush1.msra.mxu0 0.0
    %313 = vmatprep.subr.mxu0 0.0
    %314 = vmatpush1.msra.mxu0 0.0
    %315 = vmatprep.subr.mxu0 0.0
    %316 = vmatpush1.msra.mxu0 0.0
    %317 = vmatprep.subr.mxu0 0.0
    %318 = vmatpush1.msra.mxu0 0.0
    %319 = vmatprep.subr.mxu0 0.0
    %320 = vmatpush1.msra.mxu0 0.0
    %321 = vmatprep.subr.mxu0 0.0
    %322 = vmatpush1.msra.mxu0 0.0
    %323 = vmatprep.subr.mxu0 0.0
    %324 = vmatpush1.msra.mxu0 0.0
    %325 = vmatprep.subr.mxu0 0.0
    %326 = vmatpush1.msra.mxu0 0.0
    %327 = vmatprep.subr.mxu0 0.0
    %328 = vmatpush1.msra.mxu0 0.0
    %329 = vmatprep.subr.mxu0 0.0
    %330 = vmatpush1.msra.mxu0 0.0
    %331 = vmatprep.subr.mxu0 0.0
    %332 = vmatpush1.msra.mxu0 0.0
    %333 = vmatprep.subr.mxu0 0.0
    %334 = vmatpush1.msra.mxu0 0.0
    %335 = vmatprep.subr.mxu0 0.0
    %336 = vmatpush1.msra.mxu0 0.0
    %337 = vmatprep.subr.mxu0 0.0
    %338 = vmatpush1.msra.mxu0 0.0
    %339 = vmatprep.subr.mxu0 0.0
    %340 = vmatpush1.msra.mxu0 0.0
    %341 = vmatprep.mubr.f32.mxu0 0.0
    %342 = vmatmul.mubr.f32.gmra.mrb[0].mxu0 %v272
    %v343 = vpop.f32.mrb[0].mxu0
    %v344 = vadd.f32 1e-06, %v343
    %v345 = vpop.f32.mrb[0].mxu0
    %346 = vmatprep.mubr.f32.mxu0 0.0
    %347 = vmatmul.mubr.f32.gmra.mrb[0].mxu0 %v275
    %v348 = vpop.f32.mrb[0].mxu0
    %v349 = vadd.f32 1e-06, %v348
    %v350 = vpop.f32.mrb[0].mxu0
    %351 = vdwg.mxu0
    %v352 = vrsqrt.pop %v344
    %v353 = vrsqrt.pop %v349
    %v354 = vmul.f32 %v261, %v352
    %v355 = vmul.f32 %v266, %v353
    %v356 = vlaneseq
    %v357 = vshrl.u32 %v356, 7
    %v358 = vsub.s32 4, %v357
    %v359 = vrot.slane %v24, %v358
    %v360 = vmul.f32 %v354, %v359
    %v361 = vmul.f32 %v355, %v359
    %370 = vrot.lane.b32.xlu0 %v26, 64
    %v371 = vpop.permute.xlu0 %370
    %372 = vrot.lane.b32.xlu0 %v27, 64
    %v373 = vpop.permute.xlu0 %372
    %374 = vrot.lane.b32.xlu0 %v28, 64
    %v375 = vpop.permute.xlu0 %374
    %376 = vrot.lane.b32.xlu0 %v29, 64
    %v377 = vpop.permute.xlu0 %376
    %378 = vrot.lane.b32.xlu0 %v30, 64
    %v379 = vpop.permute.xlu0 %378
    %380 = vrot.lane.b32.xlu0 %v31, 64
    %v381 = vpop.permute.xlu0 %380
    %382 = vrot.lane.b32.xlu0 %v32, 64
    %v383 = vpop.permute.xlu0 %382
    %384 = vrot.lane.b32.xlu0 %v33, 64
    %v385 = vpop.permute.xlu0 %384
    %v395 = vsel %vm158, %v360, 0
    %v398 = vsel %vm158, %v361, 0
    %400 = vmatprep.subr.mxu0 0.0
    %401 = vmatpush1.msra.mxu0 %v371
    %402 = vmatprep.subr.mxu0 0.0
    %403 = vmatpush1.msra.mxu0 %v373
    %404 = vmatprep.subr.mxu0 0.0
    %405 = vmatpush1.msra.mxu0 %v375
    %406 = vmatprep.subr.mxu0 0.0
    %407 = vmatpush1.msra.mxu0 %v377
    %408 = vmatprep.subr.mxu0 0.0
    %409 = vmatpush1.msra.mxu0 %v379
    %410 = vmatprep.subr.mxu0 0.0
    %411 = vmatpush1.msra.mxu0 %v381
    %412 = vmatprep.subr.mxu0 0.0
    %413 = vmatpush1.msra.mxu0 %v383
    %414 = vmatprep.subr.mxu0 0.0
    %415 = vmatpush1.msra.mxu0 %v385
    %416 = vmatprep.subr.mxu0 0.0
    %417 = vmatpush1.msra.mxu0 0.0
    %418 = vmatprep.subr.mxu0 0.0
    %419 = vmatpush1.msra.mxu0 0.0
    %420 = vmatprep.subr.mxu0 0.0
    %421 = vmatpush1.msra.mxu0 0.0
    %422 = vmatprep.subr.mxu0 0.0
    %423 = vmatpush1.msra.mxu0 0.0
    %424 = vmatprep.subr.mxu0 0.0
    %425 = vmatpush1.msra.mxu0 0.0
    %426 = vmatprep.subr.mxu0 0.0
    %427 = vmatpush1.msra.mxu0 0.0
    %428 = vmatprep.subr.mxu0 0.0
    %429 = vmatpush1.msra.mxu0 0.0
    %430 = vmatprep.subr.mxu0 0.0
    %431 = vmatpush1.msra.mxu0 0.0
    %432 = vmatprep.subr.mxu0 0.0
    %433 = vmatpush1.msra.mxu0 0.0
    %434 = vmatprep.subr.mxu0 0.0
    %435 = vmatpush1.msra.mxu0 0.0
    %436 = vmatprep.subr.mxu0 0.0
    %437 = vmatpush1.msra.mxu0 0.0
    %438 = vmatprep.subr.mxu0 0.0
    %439 = vmatpush1.msra.mxu0 0.0
    %440 = vmatprep.subr.mxu0 0.0
    %441 = vmatpush1.msra.mxu0 0.0
    %442 = vmatprep.subr.mxu0 0.0
    %443 = vmatpush1.msra.mxu0 0.0
    %444 = vmatprep.subr.mxu0 0.0
    %445 = vmatpush1.msra.mxu0 0.0
    %446 = vmatprep.subr.mxu0 0.0
    %447 = vmatpush1.msra.mxu0 0.0
    %448 = vmatprep.subr.mxu0 0.0
    %449 = vmatpush1.msra.mxu0 0.0
    %450 = vmatprep.subr.mxu0 0.0
    %451 = vmatpush1.msra.mxu0 0.0
    %452 = vmatprep.subr.mxu0 0.0
    %453 = vmatpush1.msra.mxu0 0.0
    %454 = vmatprep.subr.mxu0 0.0
    %455 = vmatpush1.msra.mxu0 0.0
    %456 = vmatprep.subr.mxu0 0.0
    %457 = vmatpush1.msra.mxu0 0.0
    %458 = vmatprep.subr.mxu0 0.0
    %459 = vmatpush1.msra.mxu0 0.0
    %460 = vmatprep.subr.mxu0 0.0
    %461 = vmatpush1.msra.mxu0 0.0
    %462 = vmatprep.subr.mxu0 0.0
    %463 = vmatpush1.msra.mxu0 0.0
    %464 = vmatprep.mubr.f32.mxu0 0.0
    %465 = vmatmul.mubr.f32.gmra.mrb[0].mxu0 %v395
    %v466 = vpop.f32.mrb[0].mxu0
    %v467 = vadd.f32 0.0, %v466
    %v468 = vpop.f32.mrb[0].mxu0
    %469 = vmatprep.mubr.f32.mxu0 0.0
    %470 = vmatmul.mubr.f32.gmra.mrb[0].mxu0 %v398
    %v471 = vpop.f32.mrb[0].mxu0
    %v472 = vadd.f32 0.0, %v471
    %v473 = vpop.f32.mrb[0].mxu0
    %474 = vdwg.mxu0
    %v475 = vmul.f32 %v360, %v34
    %v476 = vmul.f32 %v361, %v35
    %v477 = vmul.f32 %v467, %v36
    %v478 = vmul.f32 %v472, %v37
    %v479 = vadd.f32 %v475, %v477
    %v480 = vadd.f32 %v476, %v478
    %481 = vrot.lane.b32.xlu0 %v269, 64
    %v482 = vpop.permute.xlu0 %481
    %483 = vrot.lane.b32.xlu0 %v270, 64
    %v484 = vpop.permute.xlu0 %483
    %vm485 = vcmask 261120
    %v486 = vsel %vm485, %v482, 0
    %v488 = vsel %vm485, %v484, 0
    %490 = vmatprep.subr.mxu0 0.0
    %491 = vmatpush1.msra.mxu0 %v26
    %492 = vmatprep.subr.mxu0 0.0
    %493 = vmatpush1.msra.mxu0 %v27
    %494 = vmatprep.subr.mxu0 0.0
    %495 = vmatpush1.msra.mxu0 %v28
    %496 = vmatprep.subr.mxu0 0.0
    %497 = vmatpush1.msra.mxu0 %v29
    %498 = vmatprep.subr.mxu0 0.0
    %499 = vmatpush1.msra.mxu0 0.0
    %500 = vmatprep.subr.mxu0 0.0
    %501 = vmatpush1.msra.mxu0 0.0
    %502 = vmatprep.subr.mxu0 0.0
    %503 = vmatpush1.msra.mxu0 0.0
    %504 = vmatprep.subr.mxu0 0.0
    %505 = vmatpush1.msra.mxu0 0.0
    %506 = vmatprep.subr.mxu0 0.0
    %507 = vmatpush1.msra.mxu0 0.0
    %508 = vmatprep.subr.mxu0 0.0
    %509 = vmatpush1.msra.mxu0 0.0
    %510 = vmatprep.subr.mxu0 0.0
    %511 = vmatpush1.msra.mxu0 0.0
    %512 = vmatprep.subr.mxu0 0.0
    %513 = vmatpush1.msra.mxu0 0.0
    %514 = vmatprep.subr.mxu0 0.0
    %515 = vmatpush1.msra.mxu0 0.0
    %516 = vmatprep.subr.mxu0 0.0
    %517 = vmatpush1.msra.mxu0 0.0
    %518 = vmatprep.subr.mxu0 0.0
    %519 = vmatpush1.msra.mxu0 0.0
    %520 = vmatprep.subr.mxu0 0.0
    %521 = vmatpush1.msra.mxu0 0.0
    %522 = vmatprep.subr.mxu0 0.0
    %523 = vmatpush1.msra.mxu0 0.0
    %524 = vmatprep.subr.mxu0 0.0
    %525 = vmatpush1.msra.mxu0 0.0
    %526 = vmatprep.subr.mxu0 0.0
    %527 = vmatpush1.msra.mxu0 0.0
    %528 = vmatprep.subr.mxu0 0.0
    %529 = vmatpush1.msra.mxu0 0.0
    %530 = vmatprep.subr.mxu0 0.0
    %531 = vmatpush1.msra.mxu0 0.0
    %532 = vmatprep.subr.mxu0 0.0
    %533 = vmatpush1.msra.mxu0 0.0
    %534 = vmatprep.subr.mxu0 0.0
    %535 = vmatpush1.msra.mxu0 0.0
    %536 = vmatprep.subr.mxu0 0.0
    %537 = vmatpush1.msra.mxu0 0.0
    %538 = vmatprep.subr.mxu0 0.0
    %539 = vmatpush1.msra.mxu0 0.0
    %540 = vmatprep.subr.mxu0 0.0
    %541 = vmatpush1.msra.mxu0 0.0
    %542 = vmatprep.subr.mxu0 0.0
    %543 = vmatpush1.msra.mxu0 0.0
    %544 = vmatprep.subr.mxu0 0.0
    %545 = vmatpush1.msra.mxu0 0.0
    %546 = vmatprep.subr.mxu0 0.0
    %547 = vmatpush1.msra.mxu0 0.0
    %548 = vmatprep.subr.mxu0 0.0
    %549 = vmatpush1.msra.mxu0 0.0
    %550 = vmatprep.subr.mxu0 0.0
    %551 = vmatpush1.msra.mxu0 0.0
    %552 = vmatprep.subr.mxu0 0.0
    %553 = vmatpush1.msra.mxu0 0.0
    %554 = vmatprep.mubr.f32.mxu0 0.0
    %555 = vmatmul.mubr.f32.gmra.mrb[0].mxu0 %v486
    %v556 = vpop.f32.mrb[0].mxu0
    %v557 = vadd.f32 1e-06, %v556
    %v558 = vpop.f32.mrb[0].mxu0
    %559 = vmatprep.mubr.f32.mxu0 0.0
    %560 = vmatmul.mubr.f32.gmra.mrb[0].mxu0 %v488
    %v561 = vpop.f32.mrb[0].mxu0
    %v562 = vadd.f32 1e-06, %v561
    %v563 = vpop.f32.mrb[0].mxu0
    %564 = vdwg.mxu0
    %v565 = vrsqrt.pop %v557
    %v566 = vrsqrt.pop %v562
    %569 = vrot.lane.b32.xlu0 %v565, 64
    %v570 = vpop.permute.xlu0 %569
    %571 = vrot.lane.b32.xlu0 %v566, 64
    %v572 = vpop.permute.xlu0 %571
    %v575 = vmul.f32 %v261, %v570
    %v576 = vmul.f32 %v266, %v572
    %v577 = vlaneseq
    %v578 = vshrl.u32 %v577, 7
    %v579 = vsub.s32 5, %v578
    %v580 = vrot.slane %v24, %v579
    %582 = vrot.lane.b32.xlu0 %v580, 64
    %v583 = vpop.permute.xlu0 %582
    %v585 = vmul.f32 %v575, %v583
    %v586 = vmul.f32 %v576, %v583
    %589 = vrot.lane.b32.xlu0 %v585, 64
    %v590 = vpop.permute.xlu0 %589
    %591 = vrot.lane.b32.xlu0 %v586, 64
    %v592 = vpop.permute.xlu0 %591
    %v593 = vsel %vm485, %v590, 0
    %v595 = vsel %vm485, %v592, 0
    %597 = vmatprep.subr.mxu0 0.0
    %598 = vmatpush1.msra.mxu0 %v371
    %599 = vmatprep.subr.mxu0 0.0
    %600 = vmatpush1.msra.mxu0 %v373
    %601 = vmatprep.subr.mxu0 0.0
    %602 = vmatpush1.msra.mxu0 %v375
    %603 = vmatprep.subr.mxu0 0.0
    %604 = vmatpush1.msra.mxu0 %v377
    %605 = vmatprep.subr.mxu0 0.0
    %606 = vmatpush1.msra.mxu0 0.0
    %607 = vmatprep.subr.mxu0 0.0
    %608 = vmatpush1.msra.mxu0 0.0
    %609 = vmatprep.subr.mxu0 0.0
    %610 = vmatpush1.msra.mxu0 0.0
    %611 = vmatprep.subr.mxu0 0.0
    %612 = vmatpush1.msra.mxu0 0.0
    %613 = vmatprep.subr.mxu0 0.0
    %614 = vmatpush1.msra.mxu0 0.0
    %615 = vmatprep.subr.mxu0 0.0
    %616 = vmatpush1.msra.mxu0 0.0
    %617 = vmatprep.subr.mxu0 0.0
    %618 = vmatpush1.msra.mxu0 0.0
    %619 = vmatprep.subr.mxu0 0.0
    %620 = vmatpush1.msra.mxu0 0.0
    %621 = vmatprep.subr.mxu0 0.0
    %622 = vmatpush1.msra.mxu0 0.0
    %623 = vmatprep.subr.mxu0 0.0
    %624 = vmatpush1.msra.mxu0 0.0
    %625 = vmatprep.subr.mxu0 0.0
    %626 = vmatpush1.msra.mxu0 0.0
    %627 = vmatprep.subr.mxu0 0.0
    %628 = vmatpush1.msra.mxu0 0.0
    %629 = vmatprep.subr.mxu0 0.0
    %630 = vmatpush1.msra.mxu0 0.0
    %631 = vmatprep.subr.mxu0 0.0
    %632 = vmatpush1.msra.mxu0 0.0
    %633 = vmatprep.subr.mxu0 0.0
    %634 = vmatpush1.msra.mxu0 0.0
    %635 = vmatprep.subr.mxu0 0.0
    %636 = vmatpush1.msra.mxu0 0.0
    %637 = vmatprep.subr.mxu0 0.0
    %638 = vmatpush1.msra.mxu0 0.0
    %639 = vmatprep.subr.mxu0 0.0
    %640 = vmatpush1.msra.mxu0 0.0
    %641 = vmatprep.subr.mxu0 0.0
    %642 = vmatpush1.msra.mxu0 0.0
    %643 = vmatprep.subr.mxu0 0.0
    %644 = vmatpush1.msra.mxu0 0.0
    %645 = vmatprep.subr.mxu0 0.0
    %646 = vmatpush1.msra.mxu0 0.0
    %647 = vmatprep.subr.mxu0 0.0
    %648 = vmatpush1.msra.mxu0 0.0
    %649 = vmatprep.subr.mxu0 0.0
    %650 = vmatpush1.msra.mxu0 0.0
    %651 = vmatprep.subr.mxu0 0.0
    %652 = vmatpush1.msra.mxu0 0.0
    %653 = vmatprep.subr.mxu0 0.0
    %654 = vmatpush1.msra.mxu0 0.0
    %655 = vmatprep.subr.mxu0 0.0
    %656 = vmatpush1.msra.mxu0 0.0
    %657 = vmatprep.subr.mxu0 0.0
    %658 = vmatpush1.msra.mxu0 0.0
    %659 = vmatprep.subr.mxu0 0.0
    %660 = vmatpush1.msra.mxu0 0.0
    %661 = vmatprep.mubr.f32.mxu0 0.0
    %662 = vmatmul.mubr.f32.gmra.mrb[0].mxu0 %v593
    %v663 = vpop.f32.mrb[0].mxu0
    %v664 = vadd.f32 0.0, %v663
    %v665 = vpop.f32.mrb[0].mxu0
    %666 = vmatprep.mubr.f32.mxu0 0.0
    %667 = vmatmul.mubr.f32.gmra.mrb[0].mxu0 %v595
    %v668 = vpop.f32.mrb[0].mxu0
    %v669 = vadd.f32 0.0, %v668
    %v670 = vpop.f32.mrb[0].mxu0
    %671 = vdwg.mxu0
    %674 = vrot.lane.b32.xlu0 %v34, 64
    %v675 = vpop.permute.xlu0 %674
    %676 = vrot.lane.b32.xlu0 %v35, 64
    %v677 = vpop.permute.xlu0 %676
    %v680 = vmul.f32 %v585, %v675
    %v681 = vmul.f32 %v586, %v677
    %v682 = vmul.f32 %v664, %v36
    %v683 = vmul.f32 %v669, %v37
    %686 = vrot.lane.b32.xlu0 %v682, 64
    %v687 = vpop.permute.xlu0 %686
    %688 = vrot.lane.b32.xlu0 %v683, 64
    %v689 = vpop.permute.xlu0 %688
    %v692 = vadd.f32 %v680, %v687
    %v693 = vadd.f32 %v681, %v689
    %696 = vrot.lane.b32.xlu0 %v479, 112
    %v697 = vpop.permute.xlu0 %696
    %698 = vrot.lane.b32.xlu0 %v480, 112
    %v699 = vpop.permute.xlu0 %698
    %702 = vrot.lane.b32.xlu0 %v692, 64
    %v703 = vpop.permute.xlu0 %702
    %704 = vrot.lane.b32.xlu0 %v693, 64
    %v705 = vpop.permute.xlu0 %704
    %vm706 = vcmask 130048
    %v707 = vsel %vm706, %v479, 0
    %v709 = vsel %vm706, %v480, 0
    %v711 = vsel %vm706, %v697, 0
    %v713 = vsel %vm706, %v699, 0
    %v715 = vsel %vm706, %v703, 0
    %v717 = vsel %vm706, %v705, 0
    %719 = vmatprep.subr.mxu0 0.0
    %720 = vmatpush1.xpose.msra.mxu0 %v715
    %721 = vmatprep.subr.mxu0 0.0
    %722 = vmatpush1.xpose.msra.mxu0 %v717
    %723 = vmatprep.subr.mxu0 0.0
    %724 = vmatpush1.xpose.msra.mxu0 0.0
    %725 = vmatprep.subr.mxu0 0.0
    %726 = vmatpush1.xpose.msra.mxu0 0.0
    %727 = vmatprep.subr.mxu0 0.0
    %728 = vmatpush1.xpose.msra.mxu0 0.0
    %729 = vmatprep.subr.mxu0 0.0
    %730 = vmatpush1.xpose.msra.mxu0 0.0
    %731 = vmatprep.subr.mxu0 0.0
    %732 = vmatpush1.xpose.msra.mxu0 0.0
    %733 = vmatprep.subr.mxu0 0.0
    %734 = vmatpush1.xpose.msra.mxu0 0.0
    %735 = vmatprep.subr.mxu0 0.0
    %736 = vmatpush1.xpose.msra.mxu0 0.0
    %737 = vmatprep.subr.mxu0 0.0
    %738 = vmatpush1.xpose.msra.mxu0 0.0
    %739 = vmatprep.subr.mxu0 0.0
    %740 = vmatpush1.xpose.msra.mxu0 0.0
    %741 = vmatprep.subr.mxu0 0.0
    %742 = vmatpush1.xpose.msra.mxu0 0.0
    %743 = vmatprep.subr.mxu0 0.0
    %744 = vmatpush1.xpose.msra.mxu0 0.0
    %745 = vmatprep.subr.mxu0 0.0
    %746 = vmatpush1.xpose.msra.mxu0 0.0
    %747 = vmatprep.subr.mxu0 0.0
    %748 = vmatpush1.xpose.msra.mxu0 0.0
    %749 = vmatprep.subr.mxu0 0.0
    %750 = vmatpush1.xpose.msra.mxu0 0.0
    %751 = vmatprep.subr.mxu0 0.0
    %752 = vmatpush1.xpose.msra.mxu0 0.0
    %753 = vmatprep.subr.mxu0 0.0
    %754 = vmatpush1.xpose.msra.mxu0 0.0
    %755 = vmatprep.subr.mxu0 0.0
    %756 = vmatpush1.xpose.msra.mxu0 0.0
    %757 = vmatprep.subr.mxu0 0.0
    %758 = vmatpush1.xpose.msra.mxu0 0.0
    %759 = vmatprep.subr.mxu0 0.0
    %760 = vmatpush1.xpose.msra.mxu0 0.0
    %761 = vmatprep.subr.mxu0 0.0
    %762 = vmatpush1.xpose.msra.mxu0 0.0
    %763 = vmatprep.subr.mxu0 0.0
    %764 = vmatpush1.xpose.msra.mxu0 0.0
    %765 = vmatprep.subr.mxu0 0.0
    %766 = vmatpush1.xpose.msra.mxu0 0.0
    %767 = vmatprep.subr.mxu0 0.0
    %768 = vmatpush1.xpose.msra.mxu0 0.0
    %769 = vmatprep.subr.mxu0 0.0
    %770 = vmatpush1.xpose.msra.mxu0 0.0
    %771 = vmatprep.subr.mxu0 0.0
    %772 = vmatpush1.xpose.msra.mxu0 0.0
    %773 = vmatprep.subr.mxu0 0.0
    %774 = vmatpush1.xpose.msra.mxu0 0.0
    %775 = vmatprep.subr.mxu0 0.0
    %776 = vmatpush1.xpose.msra.mxu0 0.0
    %777 = vmatprep.subr.mxu0 0.0
    %778 = vmatpush1.xpose.msra.mxu0 0.0
    %779 = vmatprep.subr.mxu0 0.0
    %780 = vmatpush1.xpose.msra.mxu0 0.0
    %781 = vmatprep.subr.mxu0 0.0
    %782 = vmatpush1.xpose.msra.mxu0 0.0
    %783 = vmatprep.mubr.f32.mxu0 0.0
    %784 = vmatmul.mubr.f32.gmra.mrb[0].mxu0 %v707
    %v785 = vpop.f32.mrb[0].mxu0
    %v786 = vadd.f32 %v38, %v785
    %v787 = vpop.f32.mrb[0].mxu0
    %788 = vmatprep.mubr.f32.mxu0 0.0
    %789 = vmatmul.mubr.f32.gmra.mrb[0].mxu0 %v709
    %v790 = vpop.f32.mrb[0].mxu0
    %v791 = vadd.f32 %v39, %v790
    %v792 = vpop.f32.mrb[0].mxu0
    %793 = vmatprep.mubr.f32.mxu0 0.0
    %794 = vmatmul.mubr.f32.gmra.mrb[0].mxu0 %v711
    %v795 = vpop.f32.mrb[0].mxu0
    %v796 = vadd.f32 %v38, %v795
    %v797 = vpop.f32.mrb[0].mxu0
    %798 = vmatprep.mubr.f32.mxu0 0.0
    %799 = vmatmul.mubr.f32.gmra.mrb[0].mxu0 %v713
    %v800 = vpop.f32.mrb[0].mxu0
    %v801 = vadd.f32 %v39, %v800
    %v802 = vpop.f32.mrb[0].mxu0
    %803 = vdwg.mxu0
    %v804 = vsel %vm706, %v786, -inf
    %805 = vmax.xlane.f32.xlu0 %v804
    %v806 = vpop.xlane.xlu0 %805
    %v807 = vsel %vm706, %v791, -inf
    %808 = vmax.xlane.f32.xlu0 %v807
    %v809 = vpop.xlane.xlu0 %808
    %v810 = vsel %vm706, %v796, -inf
    %811 = vmax.xlane.f32.xlu0 %v810
    %v812 = vpop.xlane.xlu0 %811
    %v813 = vsel %vm706, %v801, -inf
    %814 = vmax.xlane.f32.xlu0 %v813
    %v815 = vpop.xlane.xlu0 %814
    %v816 = vsub.f32 %v786, %v806
    %v817 = vsub.f32 %v791, %v809
    %v818 = vsub.f32 %v796, %v812
    %v819 = vsub.f32 %v801, %v815
    %v820 = vmul.f32 %v816, 1.442695
    %v821 = vpow.pop %v820
    %v822 = vmul.f32 %v817, 1.442695
    %v823 = vpow.pop %v822
    %v824 = vmul.f32 %v818, 1.442695
    %v825 = vpow.pop %v824
    %v826 = vmul.f32 %v819, 1.442695
    %v827 = vpow.pop %v826
    %v828 = vsel %vm706, %v821, 0.0
    %829 = vadd.xlane.f32.xlu0 %v828
    %v830 = vpop.xlane.xlu0 %829
    %v831 = vsel %vm706, %v823, 0.0
    %832 = vadd.xlane.f32.xlu0 %v831
    %v833 = vpop.xlane.xlu0 %832
    %v834 = vsel %vm706, %v825, 0.0
    %835 = vadd.xlane.f32.xlu0 %v834
    %v836 = vpop.xlane.xlu0 %835
    %v837 = vsel %vm706, %v827, 0.0
    %838 = vadd.xlane.f32.xlu0 %v837
    %v839 = vpop.xlane.xlu0 %838
    %v840 = vrcp.pop %v830
    %v841 = vrcp.pop %v833
    %v842 = vrcp.pop %v836
    %v843 = vrcp.pop %v839
    %v844 = vmul.f32 %v821, %v840
    %v845 = vmul.f32 %v823, %v841
    %v846 = vmul.f32 %v825, %v842
    %v847 = vmul.f32 %v827, %v843
    %850 = vrot.lane.b32.xlu0 %v261, 32
    %v851 = vpop.permute.xlu0 %850
    %852 = vrot.lane.b32.xlu0 %v266, 32
    %v853 = vpop.permute.xlu0 %852
    %v857 = vsel %vm706, %v844, 0
    %v860 = vsel %vm706, %v845, 0
    %v863 = vsel %vm706, %v846, 0
    %v866 = vsel %vm706, %v847, 0
    %868 = vmatprep.subr.mxu0 0.0
    %869 = vmatpush1.msra.mxu0 %v851
    %870 = vmatprep.subr.mxu0 0.0
    %871 = vmatpush1.msra.mxu0 %v853
    %872 = vmatprep.subr.mxu0 0.0
    %873 = vmatpush1.msra.mxu0 0.0
    %874 = vmatprep.subr.mxu0 0.0
    %875 = vmatpush1.msra.mxu0 0.0
    %876 = vmatprep.subr.mxu0 0.0
    %877 = vmatpush1.msra.mxu0 0.0
    %878 = vmatprep.subr.mxu0 0.0
    %879 = vmatpush1.msra.mxu0 0.0
    %880 = vmatprep.subr.mxu0 0.0
    %881 = vmatpush1.msra.mxu0 0.0
    %882 = vmatprep.subr.mxu0 0.0
    %883 = vmatpush1.msra.mxu0 0.0
    %884 = vmatprep.subr.mxu0 0.0
    %885 = vmatpush1.msra.mxu0 0.0
    %886 = vmatprep.subr.mxu0 0.0
    %887 = vmatpush1.msra.mxu0 0.0
    %888 = vmatprep.subr.mxu0 0.0
    %889 = vmatpush1.msra.mxu0 0.0
    %890 = vmatprep.subr.mxu0 0.0
    %891 = vmatpush1.msra.mxu0 0.0
    %892 = vmatprep.subr.mxu0 0.0
    %893 = vmatpush1.msra.mxu0 0.0
    %894 = vmatprep.subr.mxu0 0.0
    %895 = vmatpush1.msra.mxu0 0.0
    %896 = vmatprep.subr.mxu0 0.0
    %897 = vmatpush1.msra.mxu0 0.0
    %898 = vmatprep.subr.mxu0 0.0
    %899 = vmatpush1.msra.mxu0 0.0
    %900 = vmatprep.subr.mxu0 0.0
    %901 = vmatpush1.msra.mxu0 0.0
    %902 = vmatprep.subr.mxu0 0.0
    %903 = vmatpush1.msra.mxu0 0.0
    %904 = vmatprep.subr.mxu0 0.0
    %905 = vmatpush1.msra.mxu0 0.0
    %906 = vmatprep.subr.mxu0 0.0
    %907 = vmatpush1.msra.mxu0 0.0
    %908 = vmatprep.subr.mxu0 0.0
    %909 = vmatpush1.msra.mxu0 0.0
    %910 = vmatprep.subr.mxu0 0.0
    %911 = vmatpush1.msra.mxu0 0.0
    %912 = vmatprep.subr.mxu0 0.0
    %913 = vmatpush1.msra.mxu0 0.0
    %914 = vmatprep.subr.mxu0 0.0
    %915 = vmatpush1.msra.mxu0 0.0
    %916 = vmatprep.subr.mxu0 0.0
    %917 = vmatpush1.msra.mxu0 0.0
    %918 = vmatprep.subr.mxu0 0.0
    %919 = vmatpush1.msra.mxu0 0.0
    %920 = vmatprep.subr.mxu0 0.0
    %921 = vmatpush1.msra.mxu0 0.0
    %922 = vmatprep.subr.mxu0 0.0
    %923 = vmatpush1.msra.mxu0 0.0
    %924 = vmatprep.subr.mxu0 0.0
    %925 = vmatpush1.msra.mxu0 0.0
    %926 = vmatprep.subr.mxu0 0.0
    %927 = vmatpush1.msra.mxu0 0.0
    %928 = vmatprep.subr.mxu0 0.0
    %929 = vmatpush1.msra.mxu0 0.0
    %930 = vmatprep.subr.mxu0 0.0
    %931 = vmatpush1.msra.mxu0 0.0
    %932 = vmatprep.mubr.f32.mxu0 0.0
    %933 = vmatmul.mubr.f32.gmra.mrb[0].mxu0 %v857
    %v934 = vpop.f32.mrb[0].mxu0
    %v935 = vadd.f32 0.0, %v934
    %v936 = vpop.f32.mrb[0].mxu0
    %937 = vmatprep.mubr.f32.mxu0 0.0
    %938 = vmatmul.mubr.f32.gmra.mrb[0].mxu0 %v860
    %v939 = vpop.f32.mrb[0].mxu0
    %v940 = vadd.f32 0.0, %v939
    %v941 = vpop.f32.mrb[0].mxu0
    %942 = vmatprep.mubr.f32.mxu0 0.0
    %943 = vmatmul.mubr.f32.gmra.mrb[0].mxu0 %v863
    %v944 = vpop.f32.mrb[0].mxu0
    %v945 = vadd.f32 0.0, %v944
    %v946 = vpop.f32.mrb[0].mxu0
    %947 = vmatprep.mubr.f32.mxu0 0.0
    %948 = vmatmul.mubr.f32.gmra.mrb[0].mxu0 %v866
    %v949 = vpop.f32.mrb[0].mxu0
    %v950 = vadd.f32 0.0, %v949
    %v951 = vpop.f32.mrb[0].mxu0
    %952 = vdwg.mxu0
    %953 = vrot.lane.b32.xlu0 %v479, 96
    %v954 = vpop.permute.xlu0 %953
    %955 = vrot.lane.b32.xlu0 %v480, 96
    %v956 = vpop.permute.xlu0 %955
    %957 = vrot.lane.b32.xlu0 %v697, 96
    %v958 = vpop.permute.xlu0 %957
    %959 = vrot.lane.b32.xlu0 %v699, 96
    %v960 = vpop.permute.xlu0 %959
    %961 = vrot.lane.b32.xlu0 %v692, 48
    %v962 = vpop.permute.xlu0 %961
    %963 = vrot.lane.b32.xlu0 %v693, 48
    %v964 = vpop.permute.xlu0 %963
    %v965 = vsel %vm706, %v954, 0
    %v967 = vsel %vm706, %v956, 0
    %v969 = vsel %vm706, %v958, 0
    %v971 = vsel %vm706, %v960, 0
    %v973 = vsel %vm706, %v962, 0
    %v975 = vsel %vm706, %v964, 0
    %977 = vmatprep.subr.mxu0 0.0
    %978 = vmatpush1.xpose.msra.mxu0 %v973
    %979 = vmatprep.subr.mxu0 0.0
    %980 = vmatpush1.xpose.msra.mxu0 %v975
    %981 = vmatprep.subr.mxu0 0.0
    %982 = vmatpush1.xpose.msra.mxu0 0.0
    %983 = vmatprep.subr.mxu0 0.0
    %984 = vmatpush1.xpose.msra.mxu0 0.0
    %985 = vmatprep.subr.mxu0 0.0
    %986 = vmatpush1.xpose.msra.mxu0 0.0
    %987 = vmatprep.subr.mxu0 0.0
    %988 = vmatpush1.xpose.msra.mxu0 0.0
    %989 = vmatprep.subr.mxu0 0.0
    %990 = vmatpush1.xpose.msra.mxu0 0.0
    %991 = vmatprep.subr.mxu0 0.0
    %992 = vmatpush1.xpose.msra.mxu0 0.0
    %993 = vmatprep.subr.mxu0 0.0
    %994 = vmatpush1.xpose.msra.mxu0 0.0
    %995 = vmatprep.subr.mxu0 0.0
    %996 = vmatpush1.xpose.msra.mxu0 0.0
    %997 = vmatprep.subr.mxu0 0.0
    %998 = vmatpush1.xpose.msra.mxu0 0.0
    %999 = vmatprep.subr.mxu0 0.0
    %1000 = vmatpush1.xpose.msra.mxu0 0.0
    %1001 = vmatprep.subr.mxu0 0.0
    %1002 = vmatpush1.xpose.msra.mxu0 0.0
    %1003 = vmatprep.subr.mxu0 0.0
    %1004 = vmatpush1.xpose.msra.mxu0 0.0
    %1005 = vmatprep.subr.mxu0 0.0
    %1006 = vmatpush1.xpose.msra.mxu0 0.0
    %1007 = vmatprep.subr.mxu0 0.0
    %1008 = vmatpush1.xpose.msra.mxu0 0.0
    %1009 = vmatprep.subr.mxu0 0.0
    %1010 = vmatpush1.xpose.msra.mxu0 0.0
    %1011 = vmatprep.subr.mxu0 0.0
    %1012 = vmatpush1.xpose.msra.mxu0 0.0
    %1013 = vmatprep.subr.mxu0 0.0
    %1014 = vmatpush1.xpose.msra.mxu0 0.0
    %1015 = vmatprep.subr.mxu0 0.0
    %1016 = vmatpush1.xpose.msra.mxu0 0.0
    %1017 = vmatprep.subr.mxu0 0.0
    %1018 = vmatpush1.xpose.msra.mxu0 0.0
    %1019 = vmatprep.subr.mxu0 0.0
    %1020 = vmatpush1.xpose.msra.mxu0 0.0
    %1021 = vmatprep.subr.mxu0 0.0
    %1022 = vmatpush1.xpose.msra.mxu0 0.0
    %1023 = vmatprep.subr.mxu0 0.0
    %1024 = vmatpush1.xpose.msra.mxu0 0.0
    %1025 = vmatprep.subr.mxu0 0.0
    %1026 = vmatpush1.xpose.msra.mxu0 0.0
    %1027 = vmatprep.subr.mxu0 0.0
    %1028 = vmatpush1.xpose.msra.mxu0 0.0
    %1029 = vmatprep.subr.mxu0 0.0
    %1030 = vmatpush1.xpose.msra.mxu0 0.0
    %1031 = vmatprep.subr.mxu0 0.0
    %1032 = vmatpush1.xpose.msra.mxu0 0.0
    %1033 = vmatprep.subr.mxu0 0.0
    %1034 = vmatpush1.xpose.msra.mxu0 0.0
    %1035 = vmatprep.subr.mxu0 0.0
    %1036 = vmatpush1.xpose.msra.mxu0 0.0
    %1037 = vmatprep.subr.mxu0 0.0
    %1038 = vmatpush1.xpose.msra.mxu0 0.0
    %1039 = vmatprep.subr.mxu0 0.0
    %1040 = vmatpush1.xpose.msra.mxu0 0.0
    %1041 = vmatprep.mubr.f32.mxu0 0.0
    %1042 = vmatmul.mubr.f32.gmra.mrb[0].mxu0 %v965
    %v1043 = vpop.f32.mrb[0].mxu0
    %v1044 = vadd.f32 %v38, %v1043
    %v1045 = vpop.f32.mrb[0].mxu0
    %1046 = vmatprep.mubr.f32.mxu0 0.0
    %1047 = vmatmul.mubr.f32.gmra.mrb[0].mxu0 %v967
    %v1048 = vpop.f32.mrb[0].mxu0
    %v1049 = vadd.f32 %v39, %v1048
    %v1050 = vpop.f32.mrb[0].mxu0
    %1051 = vmatprep.mubr.f32.mxu0 0.0
    %1052 = vmatmul.mubr.f32.gmra.mrb[0].mxu0 %v969
    %v1053 = vpop.f32.mrb[0].mxu0
    %v1054 = vadd.f32 %v38, %v1053
    %v1055 = vpop.f32.mrb[0].mxu0
    %1056 = vmatprep.mubr.f32.mxu0 0.0
    %1057 = vmatmul.mubr.f32.gmra.mrb[0].mxu0 %v971
    %v1058 = vpop.f32.mrb[0].mxu0
    %v1059 = vadd.f32 %v39, %v1058
    %v1060 = vpop.f32.mrb[0].mxu0
    %1061 = vdwg.mxu0
    %v1062 = vsel %vm706, %v1044, -inf
    %1063 = vmax.xlane.f32.xlu0 %v1062
    %v1064 = vpop.xlane.xlu0 %1063
    %v1065 = vsel %vm706, %v1049, -inf
    %1066 = vmax.xlane.f32.xlu0 %v1065
    %v1067 = vpop.xlane.xlu0 %1066
    %v1068 = vsel %vm706, %v1054, -inf
    %1069 = vmax.xlane.f32.xlu0 %v1068
    %v1070 = vpop.xlane.xlu0 %1069
    %v1071 = vsel %vm706, %v1059, -inf
    %1072 = vmax.xlane.f32.xlu0 %v1071
    %v1073 = vpop.xlane.xlu0 %1072
    %v1074 = vsub.f32 %v1044, %v1064
    %v1075 = vsub.f32 %v1049, %v1067
    %v1076 = vsub.f32 %v1054, %v1070
    %v1077 = vsub.f32 %v1059, %v1073
    %v1078 = vmul.f32 %v1074, 1.442695
    %v1079 = vpow.pop %v1078
    %v1080 = vmul.f32 %v1075, 1.442695
    %v1081 = vpow.pop %v1080
    %v1082 = vmul.f32 %v1076, 1.442695
    %v1083 = vpow.pop %v1082
    %v1084 = vmul.f32 %v1077, 1.442695
    %v1085 = vpow.pop %v1084
    %v1086 = vsel %vm706, %v1079, 0.0
    %1087 = vadd.xlane.f32.xlu0 %v1086
    %v1088 = vpop.xlane.xlu0 %1087
    %v1089 = vsel %vm706, %v1081, 0.0
    %1090 = vadd.xlane.f32.xlu0 %v1089
    %v1091 = vpop.xlane.xlu0 %1090
    %v1092 = vsel %vm706, %v1083, 0.0
    %1093 = vadd.xlane.f32.xlu0 %v1092
    %v1094 = vpop.xlane.xlu0 %1093
    %v1095 = vsel %vm706, %v1085, 0.0
    %1096 = vadd.xlane.f32.xlu0 %v1095
    %v1097 = vpop.xlane.xlu0 %1096
    %v1098 = vrcp.pop %v1088
    %v1099 = vrcp.pop %v1091
    %v1100 = vrcp.pop %v1094
    %v1101 = vrcp.pop %v1097
    %v1102 = vmul.f32 %v1079, %v1098
    %v1103 = vmul.f32 %v1081, %v1099
    %v1104 = vmul.f32 %v1083, %v1100
    %v1105 = vmul.f32 %v1085, %v1101
    %1106 = vrot.lane.b32.xlu0 %v261, 16
    %v1107 = vpop.permute.xlu0 %1106
    %1108 = vrot.lane.b32.xlu0 %v266, 16
    %v1109 = vpop.permute.xlu0 %1108
    %v1113 = vsel %vm706, %v1102, 0
    %v1116 = vsel %vm706, %v1103, 0
    %v1119 = vsel %vm706, %v1104, 0
    %v1122 = vsel %vm706, %v1105, 0
    %1124 = vmatprep.subr.mxu0 0.0
    %1125 = vmatpush1.msra.mxu0 %v1107
    %1126 = vmatprep.subr.mxu0 0.0
    %1127 = vmatpush1.msra.mxu0 %v1109
    %1128 = vmatprep.subr.mxu0 0.0
    %1129 = vmatpush1.msra.mxu0 0.0
    %1130 = vmatprep.subr.mxu0 0.0
    %1131 = vmatpush1.msra.mxu0 0.0
    %1132 = vmatprep.subr.mxu0 0.0
    %1133 = vmatpush1.msra.mxu0 0.0
    %1134 = vmatprep.subr.mxu0 0.0
    %1135 = vmatpush1.msra.mxu0 0.0
    %1136 = vmatprep.subr.mxu0 0.0
    %1137 = vmatpush1.msra.mxu0 0.0
    %1138 = vmatprep.subr.mxu0 0.0
    %1139 = vmatpush1.msra.mxu0 0.0
    %1140 = vmatprep.subr.mxu0 0.0
    %1141 = vmatpush1.msra.mxu0 0.0
    %1142 = vmatprep.subr.mxu0 0.0
    %1143 = vmatpush1.msra.mxu0 0.0
    %1144 = vmatprep.subr.mxu0 0.0
    %1145 = vmatpush1.msra.mxu0 0.0
    %1146 = vmatprep.subr.mxu0 0.0
    %1147 = vmatpush1.msra.mxu0 0.0
    %1148 = vmatprep.subr.mxu0 0.0
    %1149 = vmatpush1.msra.mxu0 0.0
    %1150 = vmatprep.subr.mxu0 0.0
    %1151 = vmatpush1.msra.mxu0 0.0
    %1152 = vmatprep.subr.mxu0 0.0
    %1153 = vmatpush1.msra.mxu0 0.0
    %1154 = vmatprep.subr.mxu0 0.0
    %1155 = vmatpush1.msra.mxu0 0.0
    %1156 = vmatprep.subr.mxu0 0.0
    %1157 = vmatpush1.msra.mxu0 0.0
    %1158 = vmatprep.subr.mxu0 0.0
    %1159 = vmatpush1.msra.mxu0 0.0
    %1160 = vmatprep.subr.mxu0 0.0
    %1161 = vmatpush1.msra.mxu0 0.0
    %1162 = vmatprep.subr.mxu0 0.0
    %1163 = vmatpush1.msra.mxu0 0.0
    %1164 = vmatprep.subr.mxu0 0.0
    %1165 = vmatpush1.msra.mxu0 0.0
    %1166 = vmatprep.subr.mxu0 0.0
    %1167 = vmatpush1.msra.mxu0 0.0
    %1168 = vmatprep.subr.mxu0 0.0
    %1169 = vmatpush1.msra.mxu0 0.0
    %1170 = vmatprep.subr.mxu0 0.0
    %1171 = vmatpush1.msra.mxu0 0.0
    %1172 = vmatprep.subr.mxu0 0.0
    %1173 = vmatpush1.msra.mxu0 0.0
    %1174 = vmatprep.subr.mxu0 0.0
    %1175 = vmatpush1.msra.mxu0 0.0
    %1176 = vmatprep.subr.mxu0 0.0
    %1177 = vmatpush1.msra.mxu0 0.0
    %1178 = vmatprep.subr.mxu0 0.0
    %1179 = vmatpush1.msra.mxu0 0.0
    %1180 = vmatprep.subr.mxu0 0.0
    %1181 = vmatpush1.msra.mxu0 0.0
    %1182 = vmatprep.subr.mxu0 0.0
    %1183 = vmatpush1.msra.mxu0 0.0
    %1184 = vmatprep.subr.mxu0 0.0
    %1185 = vmatpush1.msra.mxu0 0.0
    %1186 = vmatprep.subr.mxu0 0.0
    %1187 = vmatpush1.msra.mxu0 0.0
    %1188 = vmatprep.mubr.f32.mxu0 0.0
    %1189 = vmatmul.mubr.f32.gmra.mrb[0].mxu0 %v1113
    %v1190 = vpop.f32.mrb[0].mxu0
    %v1191 = vadd.f32 0.0, %v1190
    %v1192 = vpop.f32.mrb[0].mxu0
    %1193 = vmatprep.mubr.f32.mxu0 0.0
    %1194 = vmatmul.mubr.f32.gmra.mrb[0].mxu0 %v1116
    %v1195 = vpop.f32.mrb[0].mxu0
    %v1196 = vadd.f32 0.0, %v1195
    %v1197 = vpop.f32.mrb[0].mxu0
    %1198 = vmatprep.mubr.f32.mxu0 0.0
    %1199 = vmatmul.mubr.f32.gmra.mrb[0].mxu0 %v1119
    %v1200 = vpop.f32.mrb[0].mxu0
    %v1201 = vadd.f32 0.0, %v1200
    %v1202 = vpop.f32.mrb[0].mxu0
    %1203 = vmatprep.mubr.f32.mxu0 0.0
    %1204 = vmatmul.mubr.f32.gmra.mrb[0].mxu0 %v1122
    %v1205 = vpop.f32.mrb[0].mxu0
    %v1206 = vadd.f32 0.0, %v1205
    %v1207 = vpop.f32.mrb[0].mxu0
    %1208 = vdwg.mxu0
    %1211 = vrot.lane.b32.xlu0 %v945, 16
    %v1212 = vpop.permute.xlu0 %1211
    %1213 = vrot.lane.b32.xlu0 %v950, 16
    %v1214 = vpop.permute.xlu0 %1213
    %1219 = vrot.lane.b32.xlu0 %v1191, 32
    %v1220 = vpop.permute.xlu0 %1219
    %1221 = vrot.lane.b32.xlu0 %v1196, 32
    %v1222 = vpop.permute.xlu0 %1221
    %1227 = vrot.lane.b32.xlu0 %v1201, 48
    %v1228 = vpop.permute.xlu0 %1227
    %1229 = vrot.lane.b32.xlu0 %v1206, 48
    %v1230 = vpop.permute.xlu0 %1229
    %v1233 = vsel %vm706, %v935, %v1212
    %v1234 = vsel %vm706, %v940, %v1214
    %v1235 = vsel %vm485, %v1233, %v1220
    %v1236 = vsel %vm485, %v1234, %v1222
    %vm1237 = vcmask 392192
    %v1238 = vsel %vm1237, %v1235, %v1228
    %v1239 = vsel %vm1237, %v1236, %v1230
    %v1240 = vld [vmem:[%s2 + $0x18] sm:$0xff]
    %v1241 = vld [vmem:[%s2 + $0x38] sm:$0xff]
    %v1242 = vld [vmem:[%s2 + $0x58] sm:$0xff]
    %v1243 = vld [vmem:[%s2 + $0x78] sm:$0xff]
    %v1244 = vld [vmem:[%s2 + $0x98] sm:$0xff]
    %v1245 = vld [vmem:[%s2 + $0xb8] sm:$0xff]
    %v1246 = vld [vmem:[%s2 + $0xd8] sm:$0xff]
    %v1247 = vld [vmem:[%s2 + $0xf8] sm:$0xff]
    %1256 = vrot.lane.b32.xlu0 %v1240, 64
    %v1257 = vpop.permute.xlu0 %1256
    %1258 = vrot.lane.b32.xlu0 %v1241, 64
    %v1259 = vpop.permute.xlu0 %1258
    %1260 = vrot.lane.b32.xlu0 %v1242, 64
    %v1261 = vpop.permute.xlu0 %1260
    %1262 = vrot.lane.b32.xlu0 %v1243, 64
    %v1263 = vpop.permute.xlu0 %1262
    %1264 = vrot.lane.b32.xlu0 %v1244, 64
    %v1265 = vpop.permute.xlu0 %1264
    %1266 = vrot.lane.b32.xlu0 %v1245, 64
    %v1267 = vpop.permute.xlu0 %1266
    %1268 = vrot.lane.b32.xlu0 %v1246, 64
    %v1269 = vpop.permute.xlu0 %1268
    %1270 = vrot.lane.b32.xlu0 %v1247, 64
    %v1271 = vpop.permute.xlu0 %1270
    %v1281 = vsel %vm158, %v1238, 0
    %v1284 = vsel %vm158, %v1239, 0
    %1286 = vmatprep.subr.mxu0 0.0
    %1287 = vmatpush1.msra.mxu0 %v1257
    %1288 = vmatprep.subr.mxu0 0.0
    %1289 = vmatpush1.msra.mxu0 %v1259
    %1290 = vmatprep.subr.mxu0 0.0
    %1291 = vmatpush1.msra.mxu0 %v1261
    %1292 = vmatprep.subr.mxu0 0.0
    %1293 = vmatpush1.msra.mxu0 %v1263
    %1294 = vmatprep.subr.mxu0 0.0
    %1295 = vmatpush1.msra.mxu0 %v1265
    %1296 = vmatprep.subr.mxu0 0.0
    %1297 = vmatpush1.msra.mxu0 %v1267
    %1298 = vmatprep.subr.mxu0 0.0
    %1299 = vmatpush1.msra.mxu0 %v1269
    %1300 = vmatprep.subr.mxu0 0.0
    %1301 = vmatpush1.msra.mxu0 %v1271
    %1302 = vmatprep.subr.mxu0 0.0
    %1303 = vmatpush1.msra.mxu0 0.0
    %1304 = vmatprep.subr.mxu0 0.0
    %1305 = vmatpush1.msra.mxu0 0.0
    %1306 = vmatprep.subr.mxu0 0.0
    %1307 = vmatpush1.msra.mxu0 0.0
    %1308 = vmatprep.subr.mxu0 0.0
    %1309 = vmatpush1.msra.mxu0 0.0
    %1310 = vmatprep.subr.mxu0 0.0
    %1311 = vmatpush1.msra.mxu0 0.0
    %1312 = vmatprep.subr.mxu0 0.0
    %1313 = vmatpush1.msra.mxu0 0.0
    %1314 = vmatprep.subr.mxu0 0.0
    %1315 = vmatpush1.msra.mxu0 0.0
    %1316 = vmatprep.subr.mxu0 0.0
    %1317 = vmatpush1.msra.mxu0 0.0
    %1318 = vmatprep.subr.mxu0 0.0
    %1319 = vmatpush1.msra.mxu0 0.0
    %1320 = vmatprep.subr.mxu0 0.0
    %1321 = vmatpush1.msra.mxu0 0.0
    %1322 = vmatprep.subr.mxu0 0.0
    %1323 = vmatpush1.msra.mxu0 0.0
    %1324 = vmatprep.subr.mxu0 0.0
    %1325 = vmatpush1.msra.mxu0 0.0
    %1326 = vmatprep.subr.mxu0 0.0
    %1327 = vmatpush1.msra.mxu0 0.0
    %1328 = vmatprep.subr.mxu0 0.0
    %1329 = vmatpush1.msra.mxu0 0.0
    %1330 = vmatprep.subr.mxu0 0.0
    %1331 = vmatpush1.msra.mxu0 0.0
    %1332 = vmatprep.subr.mxu0 0.0
    %1333 = vmatpush1.msra.mxu0 0.0
    %1334 = vmatprep.subr.mxu0 0.0
    %1335 = vmatpush1.msra.mxu0 0.0
    %1336 = vmatprep.subr.mxu0 0.0
    %1337 = vmatpush1.msra.mxu0 0.0
    %1338 = vmatprep.subr.mxu0 0.0
    %1339 = vmatpush1.msra.mxu0 0.0
    %1340 = vmatprep.subr.mxu0 0.0
    %1341 = vmatpush1.msra.mxu0 0.0
    %1342 = vmatprep.subr.mxu0 0.0
    %1343 = vmatpush1.msra.mxu0 0.0
    %1344 = vmatprep.subr.mxu0 0.0
    %1345 = vmatpush1.msra.mxu0 0.0
    %1346 = vmatprep.subr.mxu0 0.0
    %1347 = vmatpush1.msra.mxu0 0.0
    %1348 = vmatprep.subr.mxu0 0.0
    %1349 = vmatpush1.msra.mxu0 0.0
    %1350 = vmatprep.mubr.f32.mxu0 0.0
    %1351 = vmatmul.mubr.f32.gmra.mrb[0].mxu0 %v1281
    %v1352 = vpop.f32.mrb[0].mxu0
    %v1353 = vadd.f32 0.0, %v1352
    %v1354 = vpop.f32.mrb[0].mxu0
    %1355 = vmatprep.mubr.f32.mxu0 0.0
    %1356 = vmatmul.mubr.f32.gmra.mrb[0].mxu0 %v1284
    %v1357 = vpop.f32.mrb[0].mxu0
    %v1358 = vadd.f32 0.0, %v1357
    %v1359 = vpop.f32.mrb[0].mxu0
    %1360 = vdwg.mxu0
    %v1361 = vadd.f32 %v148, %v1353
    %v1362 = vadd.f32 %v153, %v1358
    %v1363 = vmul.f32 %v1361, %v1361
    %v1364 = vmul.f32 %v1362, %v1362
    %v1365 = vsel %vm158, %v1363, 0.0
    %1366 = vadd.xlane.f32.xlu0 %v1365
    %v1367 = vpop.xlane.xlu0 %1366
    %v1368 = vsel %vm158, %v1364, 0.0
    %1369 = vadd.xlane.f32.xlu0 %v1368
    %v1370 = vpop.xlane.xlu0 %1369
    %v1371 = vmul.f32 %v1367, %v165
    %v1372 = vmul.f32 %v1370, %v165
    %v1373 = vadd.f32 %v1371, 1e-06
    %v1374 = vadd.f32 %v1372, 1e-06
    %v1375 = vrsqrt.pop %v1373
    %v1376 = vrsqrt.pop %v1374
    %v1377 = vmul.f32 %v1361, %v1375
    %v1378 = vmul.f32 %v1362, %v1376
    %v1379 = vlaneseq
    %v1380 = vshrl.u32 %v1379, 7
    %v1381 = vsub.s32 3, %v1380
    %v1382 = vrot.slane %v24, %v1381
    %v1383 = vmul.f32 %v1377, %v1382
    %v1384 = vmul.f32 %v1378, %v1382
    %v1385 = vld [vmem:[%s2 + $0x8] sm:$0xff]
    %v1386 = vld [vmem:[%s2 + $0x10] sm:$0xff]
    %v1387 = vld [vmem:[%s2 + $0x28] sm:$0xff]
    %v1388 = vld [vmem:[%s2 + $0x30] sm:$0xff]
    %v1389 = vld [vmem:[%s2 + $0x48] sm:$0xff]
    %v1390 = vld [vmem:[%s2 + $0x50] sm:$0xff]
    %v1391 = vld [vmem:[%s2 + $0x68] sm:$0xff]
    %v1392 = vld [vmem:[%s2 + $0x70] sm:$0xff]
    %v1393 = vld [vmem:[%s2 + $0x88] sm:$0xff]
    %v1394 = vld [vmem:[%s2 + $0x90] sm:$0xff]
    %v1395 = vld [vmem:[%s2 + $0xa8] sm:$0xff]
    %v1396 = vld [vmem:[%s2 + $0xb0] sm:$0xff]
    %v1397 = vld [vmem:[%s2 + $0xc8] sm:$0xff]
    %v1398 = vld [vmem:[%s2 + $0xd0] sm:$0xff]
    %v1399 = vld [vmem:[%s2 + $0xe8] sm:$0xff]
    %v1400 = vld [vmem:[%s2 + $0xf0] sm:$0xff]
    %v1402 = vsel %vm158, %v1383, 0
    %v1405 = vsel %vm158, %v1384, 0
    %1407 = vmatprep.subr.mxu0 %v1386
    %1408 = vmatpush1.msra.mxu0 %v1385
    %1409 = vmatprep.subr.mxu0 %v1388
    %1410 = vmatpush1.msra.mxu0 %v1387
    %1411 = vmatprep.subr.mxu0 %v1390
    %1412 = vmatpush1.msra.mxu0 %v1389
    %1413 = vmatprep.subr.mxu0 %v1392
    %1414 = vmatpush1.msra.mxu0 %v1391
    %1415 = vmatprep.subr.mxu0 %v1394
    %1416 = vmatpush1.msra.mxu0 %v1393
    %1417 = vmatprep.subr.mxu0 %v1396
    %1418 = vmatpush1.msra.mxu0 %v1395
    %1419 = vmatprep.subr.mxu0 %v1398
    %1420 = vmatpush1.msra.mxu0 %v1397
    %1421 = vmatprep.subr.mxu0 %v1400
    %1422 = vmatpush1.msra.mxu0 %v1399
    %1423 = vmatprep.subr.mxu0 0.0
    %1424 = vmatpush1.msra.mxu0 0.0
    %1425 = vmatprep.subr.mxu0 0.0
    %1426 = vmatpush1.msra.mxu0 0.0
    %1427 = vmatprep.subr.mxu0 0.0
    %1428 = vmatpush1.msra.mxu0 0.0
    %1429 = vmatprep.subr.mxu0 0.0
    %1430 = vmatpush1.msra.mxu0 0.0
    %1431 = vmatprep.subr.mxu0 0.0
    %1432 = vmatpush1.msra.mxu0 0.0
    %1433 = vmatprep.subr.mxu0 0.0
    %1434 = vmatpush1.msra.mxu0 0.0
    %1435 = vmatprep.subr.mxu0 0.0
    %1436 = vmatpush1.msra.mxu0 0.0
    %1437 = vmatprep.subr.mxu0 0.0
    %1438 = vmatpush1.msra.mxu0 0.0
    %1439 = vmatprep.subr.mxu0 0.0
    %1440 = vmatpush1.msra.mxu0 0.0
    %1441 = vmatprep.subr.mxu0 0.0
    %1442 = vmatpush1.msra.mxu0 0.0
    %1443 = vmatprep.subr.mxu0 0.0
    %1444 = vmatpush1.msra.mxu0 0.0
    %1445 = vmatprep.subr.mxu0 0.0
    %1446 = vmatpush1.msra.mxu0 0.0
    %1447 = vmatprep.subr.mxu0 0.0
    %1448 = vmatpush1.msra.mxu0 0.0
    %1449 = vmatprep.subr.mxu0 0.0
    %1450 = vmatpush1.msra.mxu0 0.0
    %1451 = vmatprep.subr.mxu0 0.0
    %1452 = vmatpush1.msra.mxu0 0.0
    %1453 = vmatprep.subr.mxu0 0.0
    %1454 = vmatpush1.msra.mxu0 0.0
    %1455 = vmatprep.subr.mxu0 0.0
    %1456 = vmatpush1.msra.mxu0 0.0
    %1457 = vmatprep.subr.mxu0 0.0
    %1458 = vmatpush1.msra.mxu0 0.0
    %1459 = vmatprep.subr.mxu0 0.0
    %1460 = vmatpush1.msra.mxu0 0.0
    %1461 = vmatprep.subr.mxu0 0.0
    %1462 = vmatpush1.msra.mxu0 0.0
    %1463 = vmatprep.subr.mxu0 0.0
    %1464 = vmatpush1.msra.mxu0 0.0
    %1465 = vmatprep.subr.mxu0 0.0
    %1466 = vmatpush1.msra.mxu0 0.0
    %1467 = vmatprep.subr.mxu0 0.0
    %1468 = vmatpush1.msra.mxu0 0.0
    %1469 = vmatprep.subr.mxu0 0.0
    %1470 = vmatpush1.msra.mxu0 0.0
    %1471 = vmatprep.mubr.f32.mxu0 0.0
    %1472 = vmatmul.mubr.f32.gmra.mrb[0].mxu0 %v1402
    %v1473 = vpop.f32.mrb[0].mxu0
    %v1474 = vadd.f32 0.0, %v1473
    %v1475 = vpop.f32.mrb[0].mxu0
    %v1476 = vadd.f32 0.0, %v1475
    %1477 = vmatprep.mubr.f32.mxu0 0.0
    %1478 = vmatmul.mubr.f32.gmra.mrb[0].mxu0 %v1405
    %v1479 = vpop.f32.mrb[0].mxu0
    %v1480 = vadd.f32 0.0, %v1479
    %v1481 = vpop.f32.mrb[0].mxu0
    %v1482 = vadd.f32 0.0, %v1481
    %1483 = vdwg.mxu0
    %v1484 = vxor.u32 %v1474, 2147483648
    %v1485 = vxor.u32 %v1480, 2147483648
    %v1486 = vmul.f32 %v1484, 1.442695
    %v1487 = vpow.pop %v1486
    %v1488 = vmul.f32 %v1485, 1.442695
    %v1489 = vpow.pop %v1488
    %v1490 = vadd.f32 %v1487, 1.0
    %v1491 = vadd.f32 %v1489, 1.0
    %v1492 = vrcp.pop %v1490
    %v1493 = vmul.f32 1.0, %v1492
    %v1494 = vrcp.pop %v1491
    %v1495 = vmul.f32 1.0, %v1494
    %v1496 = vmul.f32 %v1474, %v1493
    %v1497 = vmul.f32 %v1480, %v1495
    %v1498 = vmul.f32 %v1496, %v1476
    %v1499 = vmul.f32 %v1497, %v1482
    %v1500 = vld [vmem:[%s2 + $0x18] sm:$0xff]
    %v1501 = vld [vmem:[%s2 + $0x38] sm:$0xff]
    %v1502 = vld [vmem:[%s2 + $0x58] sm:$0xff]
    %v1503 = vld [vmem:[%s2 + $0x78] sm:$0xff]
    %v1504 = vld [vmem:[%s2 + $0x98] sm:$0xff]
    %v1505 = vld [vmem:[%s2 + $0xb8] sm:$0xff]
    %v1506 = vld [vmem:[%s2 + $0xd8] sm:$0xff]
    %v1507 = vld [vmem:[%s2 + $0xf8] sm:$0xff]
    %v1508 = vld [vmem:[%s2 + $0x118] sm:$0xff]
    %v1509 = vld [vmem:[%s2 + $0x138] sm:$0xff]
    %v1510 = vld [vmem:[%s2 + $0x158] sm:$0xff]
    %v1511 = vld [vmem:[%s2 + $0x178] sm:$0xff]
    %v1512 = vld [vmem:[%s2 + $0x198] sm:$0xff]
    %v1513 = vld [vmem:[%s2 + $0x1b8] sm:$0xff]
    %v1514 = vld [vmem:[%s2 + $0x1d8] sm:$0xff]
    %v1515 = vld [vmem:[%s2 + $0x1f8] sm:$0xff]
    %1516 = vmatprep.subr.mxu0 0.0
    %1517 = vmatpush1.msra.mxu0 %v1500
    %1518 = vmatprep.subr.mxu0 0.0
    %1519 = vmatpush1.msra.mxu0 %v1501
    %1520 = vmatprep.subr.mxu0 0.0
    %1521 = vmatpush1.msra.mxu0 %v1502
    %1522 = vmatprep.subr.mxu0 0.0
    %1523 = vmatpush1.msra.mxu0 %v1503
    %1524 = vmatprep.subr.mxu0 0.0
    %1525 = vmatpush1.msra.mxu0 %v1504
    %1526 = vmatprep.subr.mxu0 0.0
    %1527 = vmatpush1.msra.mxu0 %v1505
    %1528 = vmatprep.subr.mxu0 0.0
    %1529 = vmatpush1.msra.mxu0 %v1506
    %1530 = vmatprep.subr.mxu0 0.0
    %1531 = vmatpush1.msra.mxu0 %v1507
    %1532 = vmatprep.subr.mxu0 0.0
    %1533 = vmatpush1.msra.mxu0 %v1508
    %1534 = vmatprep.subr.mxu0 0.0
    %1535 = vmatpush1.msra.mxu0 %v1509
    %1536 = vmatprep.subr.mxu0 0.0
    %1537 = vmatpush1.msra.mxu0 %v1510
    %1538 = vmatprep.subr.mxu0 0.0
    %1539 = vmatpush1.msra.mxu0 %v1511
    %1540 = vmatprep.subr.mxu0 0.0
    %1541 = vmatpush1.msra.mxu0 %v1512
    %1542 = vmatprep.subr.mxu0 0.0
    %1543 = vmatpush1.msra.mxu0 %v1513
    %1544 = vmatprep.subr.mxu0 0.0
    %1545 = vmatpush1.msra.mxu0 %v1514
    %1546 = vmatprep.subr.mxu0 0.0
    %1547 = vmatpush1.msra.mxu0 %v1515
    %1548 = vmatprep.subr.mxu0 0.0
    %1549 = vmatpush1.msra.mxu0 0.0
    %1550 = vmatprep.subr.mxu0 0.0
    %1551 = vmatpush1.msra.mxu0 0.0
    %1552 = vmatprep.subr.mxu0 0.0
    %1553 = vmatpush1.msra.mxu0 0.0
    %1554 = vmatprep.subr.mxu0 0.0
    %1555 = vmatpush1.msra.mxu0 0.0
    %1556 = vmatprep.subr.mxu0 0.0
    %1557 = vmatpush1.msra.mxu0 0.0
    %1558 = vmatprep.subr.mxu0 0.0
    %1559 = vmatpush1.msra.mxu0 0.0
    %1560 = vmatprep.subr.mxu0 0.0
    %1561 = vmatpush1.msra.mxu0 0.0
    %1562 = vmatprep.subr.mxu0 0.0
    %1563 = vmatpush1.msra.mxu0 0.0
    %1564 = vmatprep.subr.mxu0 0.0
    %1565 = vmatpush1.msra.mxu0 0.0
    %1566 = vmatprep.subr.mxu0 0.0
    %1567 = vmatpush1.msra.mxu0 0.0
    %1568 = vmatprep.subr.mxu0 0.0
    %1569 = vmatpush1.msra.mxu0 0.0
    %1570 = vmatprep.subr.mxu0 0.0
    %1571 = vmatpush1.msra.mxu0 0.0
    %1572 = vmatprep.subr.mxu0 0.0
    %1573 = vmatpush1.msra.mxu0 0.0
    %1574 = vmatprep.subr.mxu0 0.0
    %1575 = vmatpush1.msra.mxu0 0.0
    %1576 = vmatprep.subr.mxu0 0.0
    %1577 = vmatpush1.msra.mxu0 0.0
    %1578 = vmatprep.subr.mxu0 0.0
    %1579 = vmatpush1.msra.mxu0 0.0
    %1580 = vmatprep.mubr.f32.mxu0 0.0
    %1581 = vmatmul.mubr.f32.gmra.mrb[0].mxu0 %v1498
    %v1582 = vpop.f32.mrb[0].mxu0
    %v1583 = vadd.f32 0.0, %v1582
    %v1584 = vpop.f32.mrb[0].mxu0
    %1585 = vmatprep.mubr.f32.mxu0 0.0
    %1586 = vmatmul.mubr.f32.gmra.mrb[0].mxu0 %v1499
    %v1587 = vpop.f32.mrb[0].mxu0
    %v1588 = vadd.f32 0.0, %v1587
    %v1589 = vpop.f32.mrb[0].mxu0
    %1590 = vdwg.mxu0
    %v1591 = vadd.f32 %v1361, %v1583
    %v1592 = vadd.f32 %v1362, %v1588
    %v1593 = vmul.f32 %v1591, %v1591
    %v1594 = vmul.f32 %v1592, %v1592
    %v1595 = vsel %vm158, %v1593, 0.0
    %1596 = vadd.xlane.f32.xlu0 %v1595
    %v1597 = vpop.xlane.xlu0 %1596
    %v1598 = vsel %vm158, %v1594, 0.0
    %1599 = vadd.xlane.f32.xlu0 %v1598
    %v1600 = vpop.xlane.xlu0 %1599
    %v1601 = vmul.f32 %v1597, %v165
    %v1602 = vmul.f32 %v1600, %v165
    %v1603 = vadd.f32 %v1601, 1e-06
    %v1604 = vadd.f32 %v1602, 1e-06
    %v1605 = vrsqrt.pop %v1603
    %v1606 = vrsqrt.pop %v1604
    %v1607 = vmul.f32 %v1591, %v1605
    %v1608 = vmul.f32 %v1592, %v1606
    %v1609 = vlaneseq
    %v1610 = vshrl.u32 %v1609, 7
    %v1611 = vsub.s32 6, %v1610
    %v1612 = vrot.slane %v24, %v1611
    %v1613 = vmul.f32 %v1607, %v1612
    %v1614 = vmul.f32 %v1608, %v1612
    %v1615 = vld [vmem:[%s2 + $0x200] sm:$0xff]
    %v1616 = vld [vmem:[%s2 + $0x220] sm:$0xff]
    %v1617 = vld [vmem:[%s2 + $0x240] sm:$0xff]
    %v1618 = vld [vmem:[%s2 + $0x260] sm:$0xff]
    %v1619 = vld [vmem:[%s2 + $0x280] sm:$0xff]
    %v1620 = vld [vmem:[%s2 + $0x2a0] sm:$0xff]
    %v1621 = vld [vmem:[%s2 + $0x2c0] sm:$0xff]
    %v1622 = vld [vmem:[%s2 + $0x2e0] sm:$0xff]
    %v1624 = vsel %vm158, %v1613, 0
    %v1627 = vsel %vm158, %v1614, 0
    %1629 = vmatprep.subr.mxu0 0.0
    %1630 = vmatpush1.msra.mxu0 %v1615
    %1631 = vmatprep.subr.mxu0 0.0
    %1632 = vmatpush1.msra.mxu0 %v1616
    %1633 = vmatprep.subr.mxu0 0.0
    %1634 = vmatpush1.msra.mxu0 %v1617
    %1635 = vmatprep.subr.mxu0 0.0
    %1636 = vmatpush1.msra.mxu0 %v1618
    %1637 = vmatprep.subr.mxu0 0.0
    %1638 = vmatpush1.msra.mxu0 %v1619
    %1639 = vmatprep.subr.mxu0 0.0
    %1640 = vmatpush1.msra.mxu0 %v1620
    %1641 = vmatprep.subr.mxu0 0.0
    %1642 = vmatpush1.msra.mxu0 %v1621
    %1643 = vmatprep.subr.mxu0 0.0
    %1644 = vmatpush1.msra.mxu0 %v1622
    %1645 = vmatprep.subr.mxu0 0.0
    %1646 = vmatpush1.msra.mxu0 0.0
    %1647 = vmatprep.subr.mxu0 0.0
    %1648 = vmatpush1.msra.mxu0 0.0
    %1649 = vmatprep.subr.mxu0 0.0
    %1650 = vmatpush1.msra.mxu0 0.0
    %1651 = vmatprep.subr.mxu0 0.0
    %1652 = vmatpush1.msra.mxu0 0.0
    %1653 = vmatprep.subr.mxu0 0.0
    %1654 = vmatpush1.msra.mxu0 0.0
    %1655 = vmatprep.subr.mxu0 0.0
    %1656 = vmatpush1.msra.mxu0 0.0
    %1657 = vmatprep.subr.mxu0 0.0
    %1658 = vmatpush1.msra.mxu0 0.0
    %1659 = vmatprep.subr.mxu0 0.0
    %1660 = vmatpush1.msra.mxu0 0.0
    %1661 = vmatprep.subr.mxu0 0.0
    %1662 = vmatpush1.msra.mxu0 0.0
    %1663 = vmatprep.subr.mxu0 0.0
    %1664 = vmatpush1.msra.mxu0 0.0
    %1665 = vmatprep.subr.mxu0 0.0
    %1666 = vmatpush1.msra.mxu0 0.0
    %1667 = vmatprep.subr.mxu0 0.0
    %1668 = vmatpush1.msra.mxu0 0.0
    %1669 = vmatprep.subr.mxu0 0.0
    %1670 = vmatpush1.msra.mxu0 0.0
    %1671 = vmatprep.subr.mxu0 0.0
    %1672 = vmatpush1.msra.mxu0 0.0
    %1673 = vmatprep.subr.mxu0 0.0
    %1674 = vmatpush1.msra.mxu0 0.0
    %1675 = vmatprep.subr.mxu0 0.0
    %1676 = vmatpush1.msra.mxu0 0.0
    %1677 = vmatprep.subr.mxu0 0.0
    %1678 = vmatpush1.msra.mxu0 0.0
    %1679 = vmatprep.subr.mxu0 0.0
    %1680 = vmatpush1.msra.mxu0 0.0
    %1681 = vmatprep.subr.mxu0 0.0
    %1682 = vmatpush1.msra.mxu0 0.0
    %1683 = vmatprep.subr.mxu0 0.0
    %1684 = vmatpush1.msra.mxu0 0.0
    %1685 = vmatprep.subr.mxu0 0.0
    %1686 = vmatpush1.msra.mxu0 0.0
    %1687 = vmatprep.subr.mxu0 0.0
    %1688 = vmatpush1.msra.mxu0 0.0
    %1689 = vmatprep.subr.mxu0 0.0
    %1690 = vmatpush1.msra.mxu0 0.0
    %1691 = vmatprep.subr.mxu0 0.0
    %1692 = vmatpush1.msra.mxu0 0.0
    %1693 = vmatprep.mubr.f32.mxu0 0.0
    %1694 = vmatmul.mubr.f32.gmra.mrb[0].mxu0 %v1624
    %v1695 = vpop.f32.mrb[0].mxu0
    %v1696 = vadd.f32 0.0, %v1695
    %v1697 = vpop.f32.mrb[0].mxu0
    %1698 = vmatprep.mubr.f32.mxu0 0.0
    %1699 = vmatmul.mubr.f32.gmra.mrb[0].mxu0 %v1627
    %v1700 = vpop.f32.mrb[0].mxu0
    %v1701 = vadd.f32 0.0, %v1700
    %v1702 = vpop.f32.mrb[0].mxu0
    %1703 = vdwg.mxu0
    %v1704 = vmul.f32 %v1696, %v1696
    %v1705 = vmul.f32 %v1701, %v1701
    %v1707 = vsel %vm158, %v1704, 0
    %v1710 = vsel %vm158, %v1705, 0
    %1712 = vmatprep.subr.mxu0 0.0
    %1713 = vmatpush1.msra.mxu0 %v26
    %1714 = vmatprep.subr.mxu0 0.0
    %1715 = vmatpush1.msra.mxu0 %v27
    %1716 = vmatprep.subr.mxu0 0.0
    %1717 = vmatpush1.msra.mxu0 %v28
    %1718 = vmatprep.subr.mxu0 0.0
    %1719 = vmatpush1.msra.mxu0 %v29
    %1720 = vmatprep.subr.mxu0 0.0
    %1721 = vmatpush1.msra.mxu0 %v30
    %1722 = vmatprep.subr.mxu0 0.0
    %1723 = vmatpush1.msra.mxu0 %v31
    %1724 = vmatprep.subr.mxu0 0.0
    %1725 = vmatpush1.msra.mxu0 %v32
    %1726 = vmatprep.subr.mxu0 0.0
    %1727 = vmatpush1.msra.mxu0 %v33
    %1728 = vmatprep.subr.mxu0 0.0
    %1729 = vmatpush1.msra.mxu0 0.0
    %1730 = vmatprep.subr.mxu0 0.0
    %1731 = vmatpush1.msra.mxu0 0.0
    %1732 = vmatprep.subr.mxu0 0.0
    %1733 = vmatpush1.msra.mxu0 0.0
    %1734 = vmatprep.subr.mxu0 0.0
    %1735 = vmatpush1.msra.mxu0 0.0
    %1736 = vmatprep.subr.mxu0 0.0
    %1737 = vmatpush1.msra.mxu0 0.0
    %1738 = vmatprep.subr.mxu0 0.0
    %1739 = vmatpush1.msra.mxu0 0.0
    %1740 = vmatprep.subr.mxu0 0.0
    %1741 = vmatpush1.msra.mxu0 0.0
    %1742 = vmatprep.subr.mxu0 0.0
    %1743 = vmatpush1.msra.mxu0 0.0
    %1744 = vmatprep.subr.mxu0 0.0
    %1745 = vmatpush1.msra.mxu0 0.0
    %1746 = vmatprep.subr.mxu0 0.0
    %1747 = vmatpush1.msra.mxu0 0.0
    %1748 = vmatprep.subr.mxu0 0.0
    %1749 = vmatpush1.msra.mxu0 0.0
    %1750 = vmatprep.subr.mxu0 0.0
    %1751 = vmatpush1.msra.mxu0 0.0
    %1752 = vmatprep.subr.mxu0 0.0
    %1753 = vmatpush1.msra.mxu0 0.0
    %1754 = vmatprep.subr.mxu0 0.0
    %1755 = vmatpush1.msra.mxu0 0.0
    %1756 = vmatprep.subr.mxu0 0.0
    %1757 = vmatpush1.msra.mxu0 0.0
    %1758 = vmatprep.subr.mxu0 0.0
    %1759 = vmatpush1.msra.mxu0 0.0
    %1760 = vmatprep.subr.mxu0 0.0
    %1761 = vmatpush1.msra.mxu0 0.0
    %1762 = vmatprep.subr.mxu0 0.0
    %1763 = vmatpush1.msra.mxu0 0.0
    %1764 = vmatprep.subr.mxu0 0.0
    %1765 = vmatpush1.msra.mxu0 0.0
    %1766 = vmatprep.subr.mxu0 0.0
    %1767 = vmatpush1.msra.mxu0 0.0
    %1768 = vmatprep.subr.mxu0 0.0
    %1769 = vmatpush1.msra.mxu0 0.0
    %1770 = vmatprep.subr.mxu0 0.0
    %1771 = vmatpush1.msra.mxu0 0.0
    %1772 = vmatprep.subr.mxu0 0.0
    %1773 = vmatpush1.msra.mxu0 0.0
    %1774 = vmatprep.subr.mxu0 0.0
    %1775 = vmatpush1.msra.mxu0 0.0
    %1776 = vmatprep.mubr.f32.mxu0 0.0
    %1777 = vmatmul.mubr.f32.gmra.mrb[0].mxu0 %v1707
    %v1778 = vpop.f32.mrb[0].mxu0
    %v1779 = vadd.f32 1e-06, %v1778
    %v1780 = vpop.f32.mrb[0].mxu0
    %1781 = vmatprep.mubr.f32.mxu0 0.0
    %1782 = vmatmul.mubr.f32.gmra.mrb[0].mxu0 %v1710
    %v1783 = vpop.f32.mrb[0].mxu0
    %v1784 = vadd.f32 1e-06, %v1783
    %v1785 = vpop.f32.mrb[0].mxu0
    %1786 = vdwg.mxu0
    %v1787 = vrsqrt.pop %v1779
    %v1788 = vrsqrt.pop %v1784
    %v1789 = vmul.f32 %v1696, %v1787
    %v1790 = vmul.f32 %v1701, %v1788
    %v1791 = vlaneseq
    %v1792 = vshrl.u32 %v1791, 7
    %v1793 = vsub.s32 0, %v1792
    %v1794 = vrot.slane %v25, %v1793
    %v1795 = vmul.f32 %v1789, %v1794
    %v1796 = vmul.f32 %v1790, %v1794
    %v1798 = vsel %vm158, %v1795, 0
    %v1801 = vsel %vm158, %v1796, 0
    %1803 = vmatprep.subr.mxu0 0.0
    %1804 = vmatpush1.msra.mxu0 %v371
    %1805 = vmatprep.subr.mxu0 0.0
    %1806 = vmatpush1.msra.mxu0 %v373
    %1807 = vmatprep.subr.mxu0 0.0
    %1808 = vmatpush1.msra.mxu0 %v375
    %1809 = vmatprep.subr.mxu0 0.0
    %1810 = vmatpush1.msra.mxu0 %v377
    %1811 = vmatprep.subr.mxu0 0.0
    %1812 = vmatpush1.msra.mxu0 %v379
    %1813 = vmatprep.subr.mxu0 0.0
    %1814 = vmatpush1.msra.mxu0 %v381
    %1815 = vmatprep.subr.mxu0 0.0
    %1816 = vmatpush1.msra.mxu0 %v383
    %1817 = vmatprep.subr.mxu0 0.0
    %1818 = vmatpush1.msra.mxu0 %v385
    %1819 = vmatprep.subr.mxu0 0.0
    %1820 = vmatpush1.msra.mxu0 0.0
    %1821 = vmatprep.subr.mxu0 0.0
    %1822 = vmatpush1.msra.mxu0 0.0
    %1823 = vmatprep.subr.mxu0 0.0
    %1824 = vmatpush1.msra.mxu0 0.0
    %1825 = vmatprep.subr.mxu0 0.0
    %1826 = vmatpush1.msra.mxu0 0.0
    %1827 = vmatprep.subr.mxu0 0.0
    %1828 = vmatpush1.msra.mxu0 0.0
    %1829 = vmatprep.subr.mxu0 0.0
    %1830 = vmatpush1.msra.mxu0 0.0
    %1831 = vmatprep.subr.mxu0 0.0
    %1832 = vmatpush1.msra.mxu0 0.0
    %1833 = vmatprep.subr.mxu0 0.0
    %1834 = vmatpush1.msra.mxu0 0.0
    %1835 = vmatprep.subr.mxu0 0.0
    %1836 = vmatpush1.msra.mxu0 0.0
    %1837 = vmatprep.subr.mxu0 0.0
    %1838 = vmatpush1.msra.mxu0 0.0
    %1839 = vmatprep.subr.mxu0 0.0
    %1840 = vmatpush1.msra.mxu0 0.0
    %1841 = vmatprep.subr.mxu0 0.0
    %1842 = vmatpush1.msra.mxu0 0.0
    %1843 = vmatprep.subr.mxu0 0.0
    %1844 = vmatpush1.msra.mxu0 0.0
    %1845 = vmatprep.subr.mxu0 0.0
    %1846 = vmatpush1.msra.mxu0 0.0
    %1847 = vmatprep.subr.mxu0 0.0
    %1848 = vmatpush1.msra.mxu0 0.0
    %1849 = vmatprep.subr.mxu0 0.0
    %1850 = vmatpush1.msra.mxu0 0.0
    %1851 = vmatprep.subr.mxu0 0.0
    %1852 = vmatpush1.msra.mxu0 0.0
    %1853 = vmatprep.subr.mxu0 0.0
    %1854 = vmatpush1.msra.mxu0 0.0
    %1855 = vmatprep.subr.mxu0 0.0
    %1856 = vmatpush1.msra.mxu0 0.0
    %1857 = vmatprep.subr.mxu0 0.0
    %1858 = vmatpush1.msra.mxu0 0.0
    %1859 = vmatprep.subr.mxu0 0.0
    %1860 = vmatpush1.msra.mxu0 0.0
    %1861 = vmatprep.subr.mxu0 0.0
    %1862 = vmatpush1.msra.mxu0 0.0
    %1863 = vmatprep.subr.mxu0 0.0
    %1864 = vmatpush1.msra.mxu0 0.0
    %1865 = vmatprep.subr.mxu0 0.0
    %1866 = vmatpush1.msra.mxu0 0.0
    %1867 = vmatprep.mubr.f32.mxu0 0.0
    %1868 = vmatmul.mubr.f32.gmra.mrb[0].mxu0 %v1798
    %v1869 = vpop.f32.mrb[0].mxu0
    %v1870 = vadd.f32 0.0, %v1869
    %v1871 = vpop.f32.mrb[0].mxu0
    %1872 = vmatprep.mubr.f32.mxu0 0.0
    %1873 = vmatmul.mubr.f32.gmra.mrb[0].mxu0 %v1801
    %v1874 = vpop.f32.mrb[0].mxu0
    %v1875 = vadd.f32 0.0, %v1874
    %v1876 = vpop.f32.mrb[0].mxu0
    %1877 = vdwg.mxu0
    %v1878 = vmul.f32 %v1795, %v34
    %v1879 = vmul.f32 %v1796, %v35
    %v1880 = vmul.f32 %v1870, %v36
    %v1881 = vmul.f32 %v1875, %v37
    %v1882 = vadd.f32 %v1878, %v1880
    %v1883 = vadd.f32 %v1879, %v1881
    %1884 = vrot.lane.b32.xlu0 %v1704, 64
    %v1885 = vpop.permute.xlu0 %1884
    %1886 = vrot.lane.b32.xlu0 %v1705, 64
    %v1887 = vpop.permute.xlu0 %1886
    %v1888 = vsel %vm485, %v1885, 0
    %v1890 = vsel %vm485, %v1887, 0
    %1892 = vmatprep.subr.mxu0 0.0
    %1893 = vmatpush1.msra.mxu0 %v26
    %1894 = vmatprep.subr.mxu0 0.0
    %1895 = vmatpush1.msra.mxu0 %v27
    %1896 = vmatprep.subr.mxu0 0.0
    %1897 = vmatpush1.msra.mxu0 %v28
    %1898 = vmatprep.subr.mxu0 0.0
    %1899 = vmatpush1.msra.mxu0 %v29
    %1900 = vmatprep.subr.mxu0 0.0
    %1901 = vmatpush1.msra.mxu0 0.0
    %1902 = vmatprep.subr.mxu0 0.0
    %1903 = vmatpush1.msra.mxu0 0.0
    %1904 = vmatprep.subr.mxu0 0.0
    %1905 = vmatpush1.msra.mxu0 0.0
    %1906 = vmatprep.subr.mxu0 0.0
    %1907 = vmatpush1.msra.mxu0 0.0
    %1908 = vmatprep.subr.mxu0 0.0
    %1909 = vmatpush1.msra.mxu0 0.0
    %1910 = vmatprep.subr.mxu0 0.0
    %1911 = vmatpush1.msra.mxu0 0.0
    %1912 = vmatprep.subr.mxu0 0.0
    %1913 = vmatpush1.msra.mxu0 0.0
    %1914 = vmatprep.subr.mxu0 0.0
    %1915 = vmatpush1.msra.mxu0 0.0
    %1916 = vmatprep.subr.mxu0 0.0
    %1917 = vmatpush1.msra.mxu0 0.0
    %1918 = vmatprep.subr.mxu0 0.0
    %1919 = vmatpush1.msra.mxu0 0.0
    %1920 = vmatprep.subr.mxu0 0.0
    %1921 = vmatpush1.msra.mxu0 0.0
    %1922 = vmatprep.subr.mxu0 0.0
    %1923 = vmatpush1.msra.mxu0 0.0
    %1924 = vmatprep.subr.mxu0 0.0
    %1925 = vmatpush1.msra.mxu0 0.0
    %1926 = vmatprep.subr.mxu0 0.0
    %1927 = vmatpush1.msra.mxu0 0.0
    %1928 = vmatprep.subr.mxu0 0.0
    %1929 = vmatpush1.msra.mxu0 0.0
    %1930 = vmatprep.subr.mxu0 0.0
    %1931 = vmatpush1.msra.mxu0 0.0
    %1932 = vmatprep.subr.mxu0 0.0
    %1933 = vmatpush1.msra.mxu0 0.0
    %1934 = vmatprep.subr.mxu0 0.0
    %1935 = vmatpush1.msra.mxu0 0.0
    %1936 = vmatprep.subr.mxu0 0.0
    %1937 = vmatpush1.msra.mxu0 0.0
    %1938 = vmatprep.subr.mxu0 0.0
    %1939 = vmatpush1.msra.mxu0 0.0
    %1940 = vmatprep.subr.mxu0 0.0
    %1941 = vmatpush1.msra.mxu0 0.0
    %1942 = vmatprep.subr.mxu0 0.0
    %1943 = vmatpush1.msra.mxu0 0.0
    %1944 = vmatprep.subr.mxu0 0.0
    %1945 = vmatpush1.msra.mxu0 0.0
    %1946 = vmatprep.subr.mxu0 0.0
    %1947 = vmatpush1.msra.mxu0 0.0
    %1948 = vmatprep.subr.mxu0 0.0
    %1949 = vmatpush1.msra.mxu0 0.0
    %1950 = vmatprep.subr.mxu0 0.0
    %1951 = vmatpush1.msra.mxu0 0.0
    %1952 = vmatprep.subr.mxu0 0.0
    %1953 = vmatpush1.msra.mxu0 0.0
    %1954 = vmatprep.subr.mxu0 0.0
    %1955 = vmatpush1.msra.mxu0 0.0
    %1956 = vmatprep.mubr.f32.mxu0 0.0
    %1957 = vmatmul.mubr.f32.gmra.mrb[0].mxu0 %v1888
    %v1958 = vpop.f32.mrb[0].mxu0
    %v1959 = vadd.f32 1e-06, %v1958
    %v1960 = vpop.f32.mrb[0].mxu0
    %1961 = vmatprep.mubr.f32.mxu0 0.0
    %1962 = vmatmul.mubr.f32.gmra.mrb[0].mxu0 %v1890
    %v1963 = vpop.f32.mrb[0].mxu0
    %v1964 = vadd.f32 1e-06, %v1963
    %v1965 = vpop.f32.mrb[0].mxu0
    %1966 = vdwg.mxu0
    %v1967 = vrsqrt.pop %v1959
    %v1968 = vrsqrt.pop %v1964
    %1971 = vrot.lane.b32.xlu0 %v1967, 64
    %v1972 = vpop.permute.xlu0 %1971
    %1973 = vrot.lane.b32.xlu0 %v1968, 64
    %v1974 = vpop.permute.xlu0 %1973
    %v1977 = vmul.f32 %v1696, %v1972
    %v1978 = vmul.f32 %v1701, %v1974
    %v1979 = vlaneseq
    %v1980 = vshrl.u32 %v1979, 7
    %v1981 = vsub.s32 1, %v1980
    %v1982 = vrot.slane %v25, %v1981
    %1984 = vrot.lane.b32.xlu0 %v1982, 64
    %v1985 = vpop.permute.xlu0 %1984
    %v1987 = vmul.f32 %v1977, %v1985
    %v1988 = vmul.f32 %v1978, %v1985
    %1991 = vrot.lane.b32.xlu0 %v1987, 64
    %v1992 = vpop.permute.xlu0 %1991
    %1993 = vrot.lane.b32.xlu0 %v1988, 64
    %v1994 = vpop.permute.xlu0 %1993
    %v1995 = vsel %vm485, %v1992, 0
    %v1997 = vsel %vm485, %v1994, 0
    %1999 = vmatprep.subr.mxu0 0.0
    %2000 = vmatpush1.msra.mxu0 %v371
    %2001 = vmatprep.subr.mxu0 0.0
    %2002 = vmatpush1.msra.mxu0 %v373
    %2003 = vmatprep.subr.mxu0 0.0
    %2004 = vmatpush1.msra.mxu0 %v375
    %2005 = vmatprep.subr.mxu0 0.0
    %2006 = vmatpush1.msra.mxu0 %v377
    %2007 = vmatprep.subr.mxu0 0.0
    %2008 = vmatpush1.msra.mxu0 0.0
    %2009 = vmatprep.subr.mxu0 0.0
    %2010 = vmatpush1.msra.mxu0 0.0
    %2011 = vmatprep.subr.mxu0 0.0
    %2012 = vmatpush1.msra.mxu0 0.0
    %2013 = vmatprep.subr.mxu0 0.0
    %2014 = vmatpush1.msra.mxu0 0.0
    %2015 = vmatprep.subr.mxu0 0.0
    %2016 = vmatpush1.msra.mxu0 0.0
    %2017 = vmatprep.subr.mxu0 0.0
    %2018 = vmatpush1.msra.mxu0 0.0
    %2019 = vmatprep.subr.mxu0 0.0
    %2020 = vmatpush1.msra.mxu0 0.0
    %2021 = vmatprep.subr.mxu0 0.0
    %2022 = vmatpush1.msra.mxu0 0.0
    %2023 = vmatprep.subr.mxu0 0.0
    %2024 = vmatpush1.msra.mxu0 0.0
    %2025 = vmatprep.subr.mxu0 0.0
    %2026 = vmatpush1.msra.mxu0 0.0
    %2027 = vmatprep.subr.mxu0 0.0
    %2028 = vmatpush1.msra.mxu0 0.0
    %2029 = vmatprep.subr.mxu0 0.0
    %2030 = vmatpush1.msra.mxu0 0.0
    %2031 = vmatprep.subr.mxu0 0.0
    %2032 = vmatpush1.msra.mxu0 0.0
    %2033 = vmatprep.subr.mxu0 0.0
    %2034 = vmatpush1.msra.mxu0 0.0
    %2035 = vmatprep.subr.mxu0 0.0
    %2036 = vmatpush1.msra.mxu0 0.0
    %2037 = vmatprep.subr.mxu0 0.0
    %2038 = vmatpush1.msra.mxu0 0.0
    %2039 = vmatprep.subr.mxu0 0.0
    %2040 = vmatpush1.msra.mxu0 0.0
    %2041 = vmatprep.subr.mxu0 0.0
    %2042 = vmatpush1.msra.mxu0 0.0
    %2043 = vmatprep.subr.mxu0 0.0
    %2044 = vmatpush1.msra.mxu0 0.0
    %2045 = vmatprep.subr.mxu0 0.0
    %2046 = vmatpush1.msra.mxu0 0.0
    %2047 = vmatprep.subr.mxu0 0.0
    %2048 = vmatpush1.msra.mxu0 0.0
    %2049 = vmatprep.subr.mxu0 0.0
    %2050 = vmatpush1.msra.mxu0 0.0
    %2051 = vmatprep.subr.mxu0 0.0
    %2052 = vmatpush1.msra.mxu0 0.0
    %2053 = vmatprep.subr.mxu0 0.0
    %2054 = vmatpush1.msra.mxu0 0.0
    %2055 = vmatprep.subr.mxu0 0.0
    %2056 = vmatpush1.msra.mxu0 0.0
    %2057 = vmatprep.subr.mxu0 0.0
    %2058 = vmatpush1.msra.mxu0 0.0
    %2059 = vmatprep.subr.mxu0 0.0
    %2060 = vmatpush1.msra.mxu0 0.0
    %2061 = vmatprep.subr.mxu0 0.0
    %2062 = vmatpush1.msra.mxu0 0.0
    %2063 = vmatprep.mubr.f32.mxu0 0.0
    %2064 = vmatmul.mubr.f32.gmra.mrb[0].mxu0 %v1995
    %v2065 = vpop.f32.mrb[0].mxu0
    %v2066 = vadd.f32 0.0, %v2065
    %v2067 = vpop.f32.mrb[0].mxu0
    %2068 = vmatprep.mubr.f32.mxu0 0.0
    %2069 = vmatmul.mubr.f32.gmra.mrb[0].mxu0 %v1997
    %v2070 = vpop.f32.mrb[0].mxu0
    %v2071 = vadd.f32 0.0, %v2070
    %v2072 = vpop.f32.mrb[0].mxu0
    %2073 = vdwg.mxu0
    %v2074 = vmul.f32 %v1987, %v675
    %v2075 = vmul.f32 %v1988, %v677
    %v2076 = vmul.f32 %v2066, %v36
    %v2077 = vmul.f32 %v2071, %v37
    %2080 = vrot.lane.b32.xlu0 %v2076, 64
    %v2081 = vpop.permute.xlu0 %2080
    %2082 = vrot.lane.b32.xlu0 %v2077, 64
    %v2083 = vpop.permute.xlu0 %2082
    %v2086 = vadd.f32 %v2074, %v2081
    %v2087 = vadd.f32 %v2075, %v2083
    %2090 = vrot.lane.b32.xlu0 %v1882, 112
    %v2091 = vpop.permute.xlu0 %2090
    %2092 = vrot.lane.b32.xlu0 %v1883, 112
    %v2093 = vpop.permute.xlu0 %2092
    %2096 = vrot.lane.b32.xlu0 %v2086, 64
    %v2097 = vpop.permute.xlu0 %2096
    %2098 = vrot.lane.b32.xlu0 %v2087, 64
    %v2099 = vpop.permute.xlu0 %2098
    %v2100 = vsel %vm706, %v1882, 0
    %v2102 = vsel %vm706, %v1883, 0
    %v2104 = vsel %vm706, %v2091, 0
    %v2106 = vsel %vm706, %v2093, 0
    %v2108 = vsel %vm706, %v2097, 0
    %v2110 = vsel %vm706, %v2099, 0
    %2112 = vmatprep.subr.mxu0 0.0
    %2113 = vmatpush1.xpose.msra.mxu0 %v2108
    %2114 = vmatprep.subr.mxu0 0.0
    %2115 = vmatpush1.xpose.msra.mxu0 %v2110
    %2116 = vmatprep.subr.mxu0 0.0
    %2117 = vmatpush1.xpose.msra.mxu0 0.0
    %2118 = vmatprep.subr.mxu0 0.0
    %2119 = vmatpush1.xpose.msra.mxu0 0.0
    %2120 = vmatprep.subr.mxu0 0.0
    %2121 = vmatpush1.xpose.msra.mxu0 0.0
    %2122 = vmatprep.subr.mxu0 0.0
    %2123 = vmatpush1.xpose.msra.mxu0 0.0
    %2124 = vmatprep.subr.mxu0 0.0
    %2125 = vmatpush1.xpose.msra.mxu0 0.0
    %2126 = vmatprep.subr.mxu0 0.0
    %2127 = vmatpush1.xpose.msra.mxu0 0.0
    %2128 = vmatprep.subr.mxu0 0.0
    %2129 = vmatpush1.xpose.msra.mxu0 0.0
    %2130 = vmatprep.subr.mxu0 0.0
    %2131 = vmatpush1.xpose.msra.mxu0 0.0
    %2132 = vmatprep.subr.mxu0 0.0
    %2133 = vmatpush1.xpose.msra.mxu0 0.0
    %2134 = vmatprep.subr.mxu0 0.0
    %2135 = vmatpush1.xpose.msra.mxu0 0.0
    %2136 = vmatprep.subr.mxu0 0.0
    %2137 = vmatpush1.xpose.msra.mxu0 0.0
    %2138 = vmatprep.subr.mxu0 0.0
    %2139 = vmatpush1.xpose.msra.mxu0 0.0
    %2140 = vmatprep.subr.mxu0 0.0
    %2141 = vmatpush1.xpose.msra.mxu0 0.0
    %2142 = vmatprep.subr.mxu0 0.0
    %2143 = vmatpush1.xpose.msra.mxu0 0.0
    %2144 = vmatprep.subr.mxu0 0.0
    %2145 = vmatpush1.xpose.msra.mxu0 0.0
    %2146 = vmatprep.subr.mxu0 0.0
    %2147 = vmatpush1.xpose.msra.mxu0 0.0
    %2148 = vmatprep.subr.mxu0 0.0
    %2149 = vmatpush1.xpose.msra.mxu0 0.0
    %2150 = vmatprep.subr.mxu0 0.0
    %2151 = vmatpush1.xpose.msra.mxu0 0.0
    %2152 = vmatprep.subr.mxu0 0.0
    %2153 = vmatpush1.xpose.msra.mxu0 0.0
    %2154 = vmatprep.subr.mxu0 0.0
    %2155 = vmatpush1.xpose.msra.mxu0 0.0
    %2156 = vmatprep.subr.mxu0 0.0
    %2157 = vmatpush1.xpose.msra.mxu0 0.0
    %2158 = vmatprep.subr.mxu0 0.0
    %2159 = vmatpush1.xpose.msra.mxu0 0.0
    %2160 = vmatprep.subr.mxu0 0.0
    %2161 = vmatpush1.xpose.msra.mxu0 0.0
    %2162 = vmatprep.subr.mxu0 0.0
    %2163 = vmatpush1.xpose.msra.mxu0 0.0
    %2164 = vmatprep.subr.mxu0 0.0
    %2165 = vmatpush1.xpose.msra.mxu0 0.0
    %2166 = vmatprep.subr.mxu0 0.0
    %2167 = vmatpush1.xpose.msra.mxu0 0.0
    %2168 = vmatprep.subr.mxu0 0.0
    %2169 = vmatpush1.xpose.msra.mxu0 0.0
    %2170 = vmatprep.subr.mxu0 0.0
    %2171 = vmatpush1.xpose.msra.mxu0 0.0
    %2172 = vmatprep.subr.mxu0 0.0
    %2173 = vmatpush1.xpose.msra.mxu0 0.0
    %2174 = vmatprep.subr.mxu0 0.0
    %2175 = vmatpush1.xpose.msra.mxu0 0.0
    %2176 = vmatprep.mubr.f32.mxu0 0.0
    %2177 = vmatmul.mubr.f32.gmra.mrb[0].mxu0 %v2100
    %v2178 = vpop.f32.mrb[0].mxu0
    %v2179 = vadd.f32 %v38, %v2178
    %v2180 = vpop.f32.mrb[0].mxu0
    %2181 = vmatprep.mubr.f32.mxu0 0.0
    %2182 = vmatmul.mubr.f32.gmra.mrb[0].mxu0 %v2102
    %v2183 = vpop.f32.mrb[0].mxu0
    %v2184 = vadd.f32 %v39, %v2183
    %v2185 = vpop.f32.mrb[0].mxu0
    %2186 = vmatprep.mubr.f32.mxu0 0.0
    %2187 = vmatmul.mubr.f32.gmra.mrb[0].mxu0 %v2104
    %v2188 = vpop.f32.mrb[0].mxu0
    %v2189 = vadd.f32 %v38, %v2188
    %v2190 = vpop.f32.mrb[0].mxu0
    %2191 = vmatprep.mubr.f32.mxu0 0.0
    %2192 = vmatmul.mubr.f32.gmra.mrb[0].mxu0 %v2106
    %v2193 = vpop.f32.mrb[0].mxu0
    %v2194 = vadd.f32 %v39, %v2193
    %v2195 = vpop.f32.mrb[0].mxu0
    %2196 = vdwg.mxu0
    %v2197 = vsel %vm706, %v2179, -inf
    %2198 = vmax.xlane.f32.xlu0 %v2197
    %v2199 = vpop.xlane.xlu0 %2198
    %v2200 = vsel %vm706, %v2184, -inf
    %2201 = vmax.xlane.f32.xlu0 %v2200
    %v2202 = vpop.xlane.xlu0 %2201
    %v2203 = vsel %vm706, %v2189, -inf
    %2204 = vmax.xlane.f32.xlu0 %v2203
    %v2205 = vpop.xlane.xlu0 %2204
    %v2206 = vsel %vm706, %v2194, -inf
    %2207 = vmax.xlane.f32.xlu0 %v2206
    %v2208 = vpop.xlane.xlu0 %2207
    %v2209 = vsub.f32 %v2179, %v2199
    %v2210 = vsub.f32 %v2184, %v2202
    %v2211 = vsub.f32 %v2189, %v2205
    %v2212 = vsub.f32 %v2194, %v2208
    %v2213 = vmul.f32 %v2209, 1.442695
    %v2214 = vpow.pop %v2213
    %v2215 = vmul.f32 %v2210, 1.442695
    %v2216 = vpow.pop %v2215
    %v2217 = vmul.f32 %v2211, 1.442695
    %v2218 = vpow.pop %v2217
    %v2219 = vmul.f32 %v2212, 1.442695
    %v2220 = vpow.pop %v2219
    %v2221 = vsel %vm706, %v2214, 0.0
    %2222 = vadd.xlane.f32.xlu0 %v2221
    %v2223 = vpop.xlane.xlu0 %2222
    %v2224 = vsel %vm706, %v2216, 0.0
    %2225 = vadd.xlane.f32.xlu0 %v2224
    %v2226 = vpop.xlane.xlu0 %2225
    %v2227 = vsel %vm706, %v2218, 0.0
    %2228 = vadd.xlane.f32.xlu0 %v2227
    %v2229 = vpop.xlane.xlu0 %2228
    %v2230 = vsel %vm706, %v2220, 0.0
    %2231 = vadd.xlane.f32.xlu0 %v2230
    %v2232 = vpop.xlane.xlu0 %2231
    %v2233 = vrcp.pop %v2223
    %v2234 = vrcp.pop %v2226
    %v2235 = vrcp.pop %v2229
    %v2236 = vrcp.pop %v2232
    %v2237 = vmul.f32 %v2214, %v2233
    %v2238 = vmul.f32 %v2216, %v2234
    %v2239 = vmul.f32 %v2218, %v2235
    %v2240 = vmul.f32 %v2220, %v2236
    %2243 = vrot.lane.b32.xlu0 %v1696, 32
    %v2244 = vpop.permute.xlu0 %2243
    %2245 = vrot.lane.b32.xlu0 %v1701, 32
    %v2246 = vpop.permute.xlu0 %2245
    %v2250 = vsel %vm706, %v2237, 0
    %v2253 = vsel %vm706, %v2238, 0
    %v2256 = vsel %vm706, %v2239, 0
    %v2259 = vsel %vm706, %v2240, 0
    %2261 = vmatprep.subr.mxu0 0.0
    %2262 = vmatpush1.msra.mxu0 %v2244
    %2263 = vmatprep.subr.mxu0 0.0
    %2264 = vmatpush1.msra.mxu0 %v2246
    %2265 = vmatprep.subr.mxu0 0.0
    %2266 = vmatpush1.msra.mxu0 0.0
    %2267 = vmatprep.subr.mxu0 0.0
    %2268 = vmatpush1.msra.mxu0 0.0
    %2269 = vmatprep.subr.mxu0 0.0
    %2270 = vmatpush1.msra.mxu0 0.0
    %2271 = vmatprep.subr.mxu0 0.0
    %2272 = vmatpush1.msra.mxu0 0.0
    %2273 = vmatprep.subr.mxu0 0.0
    %2274 = vmatpush1.msra.mxu0 0.0
    %2275 = vmatprep.subr.mxu0 0.0
    %2276 = vmatpush1.msra.mxu0 0.0
    %2277 = vmatprep.subr.mxu0 0.0
    %2278 = vmatpush1.msra.mxu0 0.0
    %2279 = vmatprep.subr.mxu0 0.0
    %2280 = vmatpush1.msra.mxu0 0.0
    %2281 = vmatprep.subr.mxu0 0.0
    %2282 = vmatpush1.msra.mxu0 0.0
    %2283 = vmatprep.subr.mxu0 0.0
    %2284 = vmatpush1.msra.mxu0 0.0
    %2285 = vmatprep.subr.mxu0 0.0
    %2286 = vmatpush1.msra.mxu0 0.0
    %2287 = vmatprep.subr.mxu0 0.0
    %2288 = vmatpush1.msra.mxu0 0.0
    %2289 = vmatprep.subr.mxu0 0.0
    %2290 = vmatpush1.msra.mxu0 0.0
    %2291 = vmatprep.subr.mxu0 0.0
    %2292 = vmatpush1.msra.mxu0 0.0
    %2293 = vmatprep.subr.mxu0 0.0
    %2294 = vmatpush1.msra.mxu0 0.0
    %2295 = vmatprep.subr.mxu0 0.0
    %2296 = vmatpush1.msra.mxu0 0.0
    %2297 = vmatprep.subr.mxu0 0.0
    %2298 = vmatpush1.msra.mxu0 0.0
    %2299 = vmatprep.subr.mxu0 0.0
    %2300 = vmatpush1.msra.mxu0 0.0
    %2301 = vmatprep.subr.mxu0 0.0
    %2302 = vmatpush1.msra.mxu0 0.0
    %2303 = vmatprep.subr.mxu0 0.0
    %2304 = vmatpush1.msra.mxu0 0.0
    %2305 = vmatprep.subr.mxu0 0.0
    %2306 = vmatpush1.msra.mxu0 0.0
    %2307 = vmatprep.subr.mxu0 0.0
    %2308 = vmatpush1.msra.mxu0 0.0
    %2309 = vmatprep.subr.mxu0 0.0
    %2310 = vmatpush1.msra.mxu0 0.0
    %2311 = vmatprep.subr.mxu0 0.0
    %2312 = vmatpush1.msra.mxu0 0.0
    %2313 = vmatprep.subr.mxu0 0.0
    %2314 = vmatpush1.msra.mxu0 0.0
    %2315 = vmatprep.subr.mxu0 0.0
    %2316 = vmatpush1.msra.mxu0 0.0
    %2317 = vmatprep.subr.mxu0 0.0
    %2318 = vmatpush1.msra.mxu0 0.0
    %2319 = vmatprep.subr.mxu0 0.0
    %2320 = vmatpush1.msra.mxu0 0.0
    %2321 = vmatprep.subr.mxu0 0.0
    %2322 = vmatpush1.msra.mxu0 0.0
    %2323 = vmatprep.subr.mxu0 0.0
    %2324 = vmatpush1.msra.mxu0 0.0
    %2325 = vmatprep.mubr.f32.mxu0 0.0
    %2326 = vmatmul.mubr.f32.gmra.mrb[0].mxu0 %v2250
    %v2327 = vpop.f32.mrb[0].mxu0
    %v2328 = vadd.f32 0.0, %v2327
    %v2329 = vpop.f32.mrb[0].mxu0
    %2330 = vmatprep.mubr.f32.mxu0 0.0
    %2331 = vmatmul.mubr.f32.gmra.mrb[0].mxu0 %v2253
    %v2332 = vpop.f32.mrb[0].mxu0
    %v2333 = vadd.f32 0.0, %v2332
    %v2334 = vpop.f32.mrb[0].mxu0
    %2335 = vmatprep.mubr.f32.mxu0 0.0
    %2336 = vmatmul.mubr.f32.gmra.mrb[0].mxu0 %v2256
    %v2337 = vpop.f32.mrb[0].mxu0
    %v2338 = vadd.f32 0.0, %v2337
    %v2339 = vpop.f32.mrb[0].mxu0
    %2340 = vmatprep.mubr.f32.mxu0 0.0
    %2341 = vmatmul.mubr.f32.gmra.mrb[0].mxu0 %v2259
    %v2342 = vpop.f32.mrb[0].mxu0
    %v2343 = vadd.f32 0.0, %v2342
    %v2344 = vpop.f32.mrb[0].mxu0
    %2345 = vdwg.mxu0
    %2346 = vrot.lane.b32.xlu0 %v1882, 96
    %v2347 = vpop.permute.xlu0 %2346
    %2348 = vrot.lane.b32.xlu0 %v1883, 96
    %v2349 = vpop.permute.xlu0 %2348
    %2350 = vrot.lane.b32.xlu0 %v2091, 96
    %v2351 = vpop.permute.xlu0 %2350
    %2352 = vrot.lane.b32.xlu0 %v2093, 96
    %v2353 = vpop.permute.xlu0 %2352
    %2354 = vrot.lane.b32.xlu0 %v2086, 48
    %v2355 = vpop.permute.xlu0 %2354
    %2356 = vrot.lane.b32.xlu0 %v2087, 48
    %v2357 = vpop.permute.xlu0 %2356
    %v2358 = vsel %vm706, %v2347, 0
    %v2360 = vsel %vm706, %v2349, 0
    %v2362 = vsel %vm706, %v2351, 0
    %v2364 = vsel %vm706, %v2353, 0
    %v2366 = vsel %vm706, %v2355, 0
    %v2368 = vsel %vm706, %v2357, 0
    %2370 = vmatprep.subr.mxu0 0.0
    %2371 = vmatpush1.xpose.msra.mxu0 %v2366
    %2372 = vmatprep.subr.mxu0 0.0
    %2373 = vmatpush1.xpose.msra.mxu0 %v2368
    %2374 = vmatprep.subr.mxu0 0.0
    %2375 = vmatpush1.xpose.msra.mxu0 0.0
    %2376 = vmatprep.subr.mxu0 0.0
    %2377 = vmatpush1.xpose.msra.mxu0 0.0
    %2378 = vmatprep.subr.mxu0 0.0
    %2379 = vmatpush1.xpose.msra.mxu0 0.0
    %2380 = vmatprep.subr.mxu0 0.0
    %2381 = vmatpush1.xpose.msra.mxu0 0.0
    %2382 = vmatprep.subr.mxu0 0.0
    %2383 = vmatpush1.xpose.msra.mxu0 0.0
    %2384 = vmatprep.subr.mxu0 0.0
    %2385 = vmatpush1.xpose.msra.mxu0 0.0
    %2386 = vmatprep.subr.mxu0 0.0
    %2387 = vmatpush1.xpose.msra.mxu0 0.0
    %2388 = vmatprep.subr.mxu0 0.0
    %2389 = vmatpush1.xpose.msra.mxu0 0.0
    %2390 = vmatprep.subr.mxu0 0.0
    %2391 = vmatpush1.xpose.msra.mxu0 0.0
    %2392 = vmatprep.subr.mxu0 0.0
    %2393 = vmatpush1.xpose.msra.mxu0 0.0
    %2394 = vmatprep.subr.mxu0 0.0
    %2395 = vmatpush1.xpose.msra.mxu0 0.0
    %2396 = vmatprep.subr.mxu0 0.0
    %2397 = vmatpush1.xpose.msra.mxu0 0.0
    %2398 = vmatprep.subr.mxu0 0.0
    %2399 = vmatpush1.xpose.msra.mxu0 0.0
    %2400 = vmatprep.subr.mxu0 0.0
    %2401 = vmatpush1.xpose.msra.mxu0 0.0
    %2402 = vmatprep.subr.mxu0 0.0
    %2403 = vmatpush1.xpose.msra.mxu0 0.0
    %2404 = vmatprep.subr.mxu0 0.0
    %2405 = vmatpush1.xpose.msra.mxu0 0.0
    %2406 = vmatprep.subr.mxu0 0.0
    %2407 = vmatpush1.xpose.msra.mxu0 0.0
    %2408 = vmatprep.subr.mxu0 0.0
    %2409 = vmatpush1.xpose.msra.mxu0 0.0
    %2410 = vmatprep.subr.mxu0 0.0
    %2411 = vmatpush1.xpose.msra.mxu0 0.0
    %2412 = vmatprep.subr.mxu0 0.0
    %2413 = vmatpush1.xpose.msra.mxu0 0.0
    %2414 = vmatprep.subr.mxu0 0.0
    %2415 = vmatpush1.xpose.msra.mxu0 0.0
    %2416 = vmatprep.subr.mxu0 0.0
    %2417 = vmatpush1.xpose.msra.mxu0 0.0
    %2418 = vmatprep.subr.mxu0 0.0
    %2419 = vmatpush1.xpose.msra.mxu0 0.0
    %2420 = vmatprep.subr.mxu0 0.0
    %2421 = vmatpush1.xpose.msra.mxu0 0.0
    %2422 = vmatprep.subr.mxu0 0.0
    %2423 = vmatpush1.xpose.msra.mxu0 0.0
    %2424 = vmatprep.subr.mxu0 0.0
    %2425 = vmatpush1.xpose.msra.mxu0 0.0
    %2426 = vmatprep.subr.mxu0 0.0
    %2427 = vmatpush1.xpose.msra.mxu0 0.0
    %2428 = vmatprep.subr.mxu0 0.0
    %2429 = vmatpush1.xpose.msra.mxu0 0.0
    %2430 = vmatprep.subr.mxu0 0.0
    %2431 = vmatpush1.xpose.msra.mxu0 0.0
    %2432 = vmatprep.subr.mxu0 0.0
    %2433 = vmatpush1.xpose.msra.mxu0 0.0
    %2434 = vmatprep.mubr.f32.mxu0 0.0
    %2435 = vmatmul.mubr.f32.gmra.mrb[0].mxu0 %v2358
    %v2436 = vpop.f32.mrb[0].mxu0
    %v2437 = vadd.f32 %v38, %v2436
    %v2438 = vpop.f32.mrb[0].mxu0
    %2439 = vmatprep.mubr.f32.mxu0 0.0
    %2440 = vmatmul.mubr.f32.gmra.mrb[0].mxu0 %v2360
    %v2441 = vpop.f32.mrb[0].mxu0
    %v2442 = vadd.f32 %v39, %v2441
    %v2443 = vpop.f32.mrb[0].mxu0
    %2444 = vmatprep.mubr.f32.mxu0 0.0
    %2445 = vmatmul.mubr.f32.gmra.mrb[0].mxu0 %v2362
    %v2446 = vpop.f32.mrb[0].mxu0
    %v2447 = vadd.f32 %v38, %v2446
    %v2448 = vpop.f32.mrb[0].mxu0
    %2449 = vmatprep.mubr.f32.mxu0 0.0
    %2450 = vmatmul.mubr.f32.gmra.mrb[0].mxu0 %v2364
    %v2451 = vpop.f32.mrb[0].mxu0
    %v2452 = vadd.f32 %v39, %v2451
    %v2453 = vpop.f32.mrb[0].mxu0
    %2454 = vdwg.mxu0
    %v2455 = vsel %vm706, %v2437, -inf
    %2456 = vmax.xlane.f32.xlu0 %v2455
    %v2457 = vpop.xlane.xlu0 %2456
    %v2458 = vsel %vm706, %v2442, -inf
    %2459 = vmax.xlane.f32.xlu0 %v2458
    %v2460 = vpop.xlane.xlu0 %2459
    %v2461 = vsel %vm706, %v2447, -inf
    %2462 = vmax.xlane.f32.xlu0 %v2461
    %v2463 = vpop.xlane.xlu0 %2462
    %v2464 = vsel %vm706, %v2452, -inf
    %2465 = vmax.xlane.f32.xlu0 %v2464
    %v2466 = vpop.xlane.xlu0 %2465
    %v2467 = vsub.f32 %v2437, %v2457
    %v2468 = vsub.f32 %v2442, %v2460
    %v2469 = vsub.f32 %v2447, %v2463
    %v2470 = vsub.f32 %v2452, %v2466
    %v2471 = vmul.f32 %v2467, 1.442695
    %v2472 = vpow.pop %v2471
    %v2473 = vmul.f32 %v2468, 1.442695
    %v2474 = vpow.pop %v2473
    %v2475 = vmul.f32 %v2469, 1.442695
    %v2476 = vpow.pop %v2475
    %v2477 = vmul.f32 %v2470, 1.442695
    %v2478 = vpow.pop %v2477
    %v2479 = vsel %vm706, %v2472, 0.0
    %2480 = vadd.xlane.f32.xlu0 %v2479
    %v2481 = vpop.xlane.xlu0 %2480
    %v2482 = vsel %vm706, %v2474, 0.0
    %2483 = vadd.xlane.f32.xlu0 %v2482
    %v2484 = vpop.xlane.xlu0 %2483
    %v2485 = vsel %vm706, %v2476, 0.0
    %2486 = vadd.xlane.f32.xlu0 %v2485
    %v2487 = vpop.xlane.xlu0 %2486
    %v2488 = vsel %vm706, %v2478, 0.0
    %2489 = vadd.xlane.f32.xlu0 %v2488
    %v2490 = vpop.xlane.xlu0 %2489
    %v2491 = vrcp.pop %v2481
    %v2492 = vrcp.pop %v2484
    %v2493 = vrcp.pop %v2487
    %v2494 = vrcp.pop %v2490
    %v2495 = vmul.f32 %v2472, %v2491
    %v2496 = vmul.f32 %v2474, %v2492
    %v2497 = vmul.f32 %v2476, %v2493
    %v2498 = vmul.f32 %v2478, %v2494
    %2499 = vrot.lane.b32.xlu0 %v1696, 16
    %v2500 = vpop.permute.xlu0 %2499
    %2501 = vrot.lane.b32.xlu0 %v1701, 16
    %v2502 = vpop.permute.xlu0 %2501
    %v2506 = vsel %vm706, %v2495, 0
    %v2509 = vsel %vm706, %v2496, 0
    %v2512 = vsel %vm706, %v2497, 0
    %v2515 = vsel %vm706, %v2498, 0
    %2517 = vmatprep.subr.mxu0 0.0
    %2518 = vmatpush1.msra.mxu0 %v2500
    %2519 = vmatprep.subr.mxu0 0.0
    %2520 = vmatpush1.msra.mxu0 %v2502
    %2521 = vmatprep.subr.mxu0 0.0
    %2522 = vmatpush1.msra.mxu0 0.0
    %2523 = vmatprep.subr.mxu0 0.0
    %2524 = vmatpush1.msra.mxu0 0.0
    %2525 = vmatprep.subr.mxu0 0.0
    %2526 = vmatpush1.msra.mxu0 0.0
    %2527 = vmatprep.subr.mxu0 0.0
    %2528 = vmatpush1.msra.mxu0 0.0
    %2529 = vmatprep.subr.mxu0 0.0
    %2530 = vmatpush1.msra.mxu0 0.0
    %2531 = vmatprep.subr.mxu0 0.0
    %2532 = vmatpush1.msra.mxu0 0.0
    %2533 = vmatprep.subr.mxu0 0.0
    %2534 = vmatpush1.msra.mxu0 0.0
    %2535 = vmatprep.subr.mxu0 0.0
    %2536 = vmatpush1.msra.mxu0 0.0
    %2537 = vmatprep.subr.mxu0 0.0
    %2538 = vmatpush1.msra.mxu0 0.0
    %2539 = vmatprep.subr.mxu0 0.0
    %2540 = vmatpush1.msra.mxu0 0.0
    %2541 = vmatprep.subr.mxu0 0.0
    %2542 = vmatpush1.msra.mxu0 0.0
    %2543 = vmatprep.subr.mxu0 0.0
    %2544 = vmatpush1.msra.mxu0 0.0
    %2545 = vmatprep.subr.mxu0 0.0
    %2546 = vmatpush1.msra.mxu0 0.0
    %2547 = vmatprep.subr.mxu0 0.0
    %2548 = vmatpush1.msra.mxu0 0.0
    %2549 = vmatprep.subr.mxu0 0.0
    %2550 = vmatpush1.msra.mxu0 0.0
    %2551 = vmatprep.subr.mxu0 0.0
    %2552 = vmatpush1.msra.mxu0 0.0
    %2553 = vmatprep.subr.mxu0 0.0
    %2554 = vmatpush1.msra.mxu0 0.0
    %2555 = vmatprep.subr.mxu0 0.0
    %2556 = vmatpush1.msra.mxu0 0.0
    %2557 = vmatprep.subr.mxu0 0.0
    %2558 = vmatpush1.msra.mxu0 0.0
    %2559 = vmatprep.subr.mxu0 0.0
    %2560 = vmatpush1.msra.mxu0 0.0
    %2561 = vmatprep.subr.mxu0 0.0
    %2562 = vmatpush1.msra.mxu0 0.0
    %2563 = vmatprep.subr.mxu0 0.0
    %2564 = vmatpush1.msra.mxu0 0.0
    %2565 = vmatprep.subr.mxu0 0.0
    %2566 = vmatpush1.msra.mxu0 0.0
    %2567 = vmatprep.subr.mxu0 0.0
    %2568 = vmatpush1.msra.mxu0 0.0
    %2569 = vmatprep.subr.mxu0 0.0
    %2570 = vmatpush1.msra.mxu0 0.0
    %2571 = vmatprep.subr.mxu0 0.0
    %2572 = vmatpush1.msra.mxu0 0.0
    %2573 = vmatprep.subr.mxu0 0.0
    %2574 = vmatpush1.msra.mxu0 0.0
    %2575 = vmatprep.subr.mxu0 0.0
    %2576 = vmatpush1.msra.mxu0 0.0
    %2577 = vmatprep.subr.mxu0 0.0
    %2578 = vmatpush1.msra.mxu0 0.0
    %2579 = vmatprep.subr.mxu0 0.0
    %2580 = vmatpush1.msra.mxu0 0.0
    %2581 = vmatprep.mubr.f32.mxu0 0.0
    %2582 = vmatmul.mubr.f32.gmra.mrb[0].mxu0 %v2506
    %v2583 = vpop.f32.mrb[0].mxu0
    %v2584 = vadd.f32 0.0, %v2583
    %v2585 = vpop.f32.mrb[0].mxu0
    %2586 = vmatprep.mubr.f32.mxu0 0.0
    %2587 = vmatmul.mubr.f32.gmra.mrb[0].mxu0 %v2509
    %v2588 = vpop.f32.mrb[0].mxu0
    %v2589 = vadd.f32 0.0, %v2588
    %v2590 = vpop.f32.mrb[0].mxu0
    %2591 = vmatprep.mubr.f32.mxu0 0.0
    %2592 = vmatmul.mubr.f32.gmra.mrb[0].mxu0 %v2512
    %v2593 = vpop.f32.mrb[0].mxu0
    %v2594 = vadd.f32 0.0, %v2593
    %v2595 = vpop.f32.mrb[0].mxu0
    %2596 = vmatprep.mubr.f32.mxu0 0.0
    %2597 = vmatmul.mubr.f32.gmra.mrb[0].mxu0 %v2515
    %v2598 = vpop.f32.mrb[0].mxu0
    %v2599 = vadd.f32 0.0, %v2598
    %v2600 = vpop.f32.mrb[0].mxu0
    %2601 = vdwg.mxu0
    %2604 = vrot.lane.b32.xlu0 %v2338, 16
    %v2605 = vpop.permute.xlu0 %2604
    %2606 = vrot.lane.b32.xlu0 %v2343, 16
    %v2607 = vpop.permute.xlu0 %2606
    %2612 = vrot.lane.b32.xlu0 %v2584, 32
    %v2613 = vpop.permute.xlu0 %2612
    %2614 = vrot.lane.b32.xlu0 %v2589, 32
    %v2615 = vpop.permute.xlu0 %2614
    %2620 = vrot.lane.b32.xlu0 %v2594, 48
    %v2621 = vpop.permute.xlu0 %2620
    %2622 = vrot.lane.b32.xlu0 %v2599, 48
    %v2623 = vpop.permute.xlu0 %2622
    %v2626 = vsel %vm706, %v2328, %v2605
    %v2627 = vsel %vm706, %v2333, %v2607
    %v2628 = vsel %vm485, %v2626, %v2613
    %v2629 = vsel %vm485, %v2627, %v2615
    %v2630 = vsel %vm1237, %v2628, %v2621
    %v2631 = vsel %vm1237, %v2629, %v2623
    %v2632 = vld [vmem:[%s2 + $0x218] sm:$0xff]
    %v2633 = vld [vmem:[%s2 + $0x238] sm:$0xff]
    %v2634 = vld [vmem:[%s2 + $0x258] sm:$0xff]
    %v2635 = vld [vmem:[%s2 + $0x278] sm:$0xff]
    %v2636 = vld [vmem:[%s2 + $0x298] sm:$0xff]
    %v2637 = vld [vmem:[%s2 + $0x2b8] sm:$0xff]
    %v2638 = vld [vmem:[%s2 + $0x2d8] sm:$0xff]
    %v2639 = vld [vmem:[%s2 + $0x2f8] sm:$0xff]
    %2648 = vrot.lane.b32.xlu0 %v2632, 64
    %v2649 = vpop.permute.xlu0 %2648
    %2650 = vrot.lane.b32.xlu0 %v2633, 64
    %v2651 = vpop.permute.xlu0 %2650
    %2652 = vrot.lane.b32.xlu0 %v2634, 64
    %v2653 = vpop.permute.xlu0 %2652
    %2654 = vrot.lane.b32.xlu0 %v2635, 64
    %v2655 = vpop.permute.xlu0 %2654
    %2656 = vrot.lane.b32.xlu0 %v2636, 64
    %v2657 = vpop.permute.xlu0 %2656
    %2658 = vrot.lane.b32.xlu0 %v2637, 64
    %v2659 = vpop.permute.xlu0 %2658
    %2660 = vrot.lane.b32.xlu0 %v2638, 64
    %v2661 = vpop.permute.xlu0 %2660
    %2662 = vrot.lane.b32.xlu0 %v2639, 64
    %v2663 = vpop.permute.xlu0 %2662
    %v2673 = vsel %vm158, %v2630, 0
    %v2676 = vsel %vm158, %v2631, 0
    %2678 = vmatprep.subr.mxu0 0.0
    %2679 = vmatpush1.msra.mxu0 %v2649
    %2680 = vmatprep.subr.mxu0 0.0
    %2681 = vmatpush1.msra.mxu0 %v2651
    %2682 = vmatprep.subr.mxu0 0.0
    %2683 = vmatpush1.msra.mxu0 %v2653
    %2684 = vmatprep.subr.mxu0 0.0
    %2685 = vmatpush1.msra.mxu0 %v2655
    %2686 = vmatprep.subr.mxu0 0.0
    %2687 = vmatpush1.msra.mxu0 %v2657
    %2688 = vmatprep.subr.mxu0 0.0
    %2689 = vmatpush1.msra.mxu0 %v2659
    %2690 = vmatprep.subr.mxu0 0.0
    %2691 = vmatpush1.msra.mxu0 %v2661
    %2692 = vmatprep.subr.mxu0 0.0
    %2693 = vmatpush1.msra.mxu0 %v2663
    %2694 = vmatprep.subr.mxu0 0.0
    %2695 = vmatpush1.msra.mxu0 0.0
    %2696 = vmatprep.subr.mxu0 0.0
    %2697 = vmatpush1.msra.mxu0 0.0
    %2698 = vmatprep.subr.mxu0 0.0
    %2699 = vmatpush1.msra.mxu0 0.0
    %2700 = vmatprep.subr.mxu0 0.0
    %2701 = vmatpush1.msra.mxu0 0.0
    %2702 = vmatprep.subr.mxu0 0.0
    %2703 = vmatpush1.msra.mxu0 0.0
    %2704 = vmatprep.subr.mxu0 0.0
    %2705 = vmatpush1.msra.mxu0 0.0
    %2706 = vmatprep.subr.mxu0 0.0
    %2707 = vmatpush1.msra.mxu0 0.0
    %2708 = vmatprep.subr.mxu0 0.0
    %2709 = vmatpush1.msra.mxu0 0.0
    %2710 = vmatprep.subr.mxu0 0.0
    %2711 = vmatpush1.msra.mxu0 0.0
    %2712 = vmatprep.subr.mxu0 0.0
    %2713 = vmatpush1.msra.mxu0 0.0
    %2714 = vmatprep.subr.mxu0 0.0
    %2715 = vmatpush1.msra.mxu0 0.0
    %2716 = vmatprep.subr.mxu0 0.0
    %2717 = vmatpush1.msra.mxu0 0.0
    %2718 = vmatprep.subr.mxu0 0.0
    %2719 = vmatpush1.msra.mxu0 0.0
    %2720 = vmatprep.subr.mxu0 0.0
    %2721 = vmatpush1.msra.mxu0 0.0
    %2722 = vmatprep.subr.mxu0 0.0
    %2723 = vmatpush1.msra.mxu0 0.0
    %2724 = vmatprep.subr.mxu0 0.0
    %2725 = vmatpush1.msra.mxu0 0.0
    %2726 = vmatprep.subr.mxu0 0.0
    %2727 = vmatpush1.msra.mxu0 0.0
    %2728 = vmatprep.subr.mxu0 0.0
    %2729 = vmatpush1.msra.mxu0 0.0
    %2730 = vmatprep.subr.mxu0 0.0
    %2731 = vmatpush1.msra.mxu0 0.0
    %2732 = vmatprep.subr.mxu0 0.0
    %2733 = vmatpush1.msra.mxu0 0.0
    %2734 = vmatprep.subr.mxu0 0.0
    %2735 = vmatpush1.msra.mxu0 0.0
    %2736 = vmatprep.subr.mxu0 0.0
    %2737 = vmatpush1.msra.mxu0 0.0
    %2738 = vmatprep.subr.mxu0 0.0
    %2739 = vmatpush1.msra.mxu0 0.0
    %2740 = vmatprep.subr.mxu0 0.0
    %2741 = vmatpush1.msra.mxu0 0.0
    %2742 = vmatprep.mubr.f32.mxu0 0.0
    %2743 = vmatmul.mubr.f32.gmra.mrb[0].mxu0 %v2673
    %v2744 = vpop.f32.mrb[0].mxu0
    %v2745 = vadd.f32 0.0, %v2744
    %v2746 = vpop.f32.mrb[0].mxu0
    %2747 = vmatprep.mubr.f32.mxu0 0.0
    %2748 = vmatmul.mubr.f32.gmra.mrb[0].mxu0 %v2676
    %v2749 = vpop.f32.mrb[0].mxu0
    %v2750 = vadd.f32 0.0, %v2749
    %v2751 = vpop.f32.mrb[0].mxu0
    %2752 = vdwg.mxu0
    %v2753 = vadd.f32 %v1591, %v2745
    %v2754 = vadd.f32 %v1592, %v2750
    %v2755 = vmul.f32 %v2753, %v2753
    %v2756 = vmul.f32 %v2754, %v2754
    %v2757 = vsel %vm158, %v2755, 0.0
    %2758 = vadd.xlane.f32.xlu0 %v2757
    %v2759 = vpop.xlane.xlu0 %2758
    %v2760 = vsel %vm158, %v2756, 0.0
    %2761 = vadd.xlane.f32.xlu0 %v2760
    %v2762 = vpop.xlane.xlu0 %2761
    %v2763 = vmul.f32 %v2759, %v165
    %v2764 = vmul.f32 %v2762, %v165
    %v2765 = vadd.f32 %v2763, 1e-06
    %v2766 = vadd.f32 %v2764, 1e-06
    %v2767 = vrsqrt.pop %v2765
    %v2768 = vrsqrt.pop %v2766
    %v2769 = vmul.f32 %v2753, %v2767
    %v2770 = vmul.f32 %v2754, %v2768
    %v2771 = vlaneseq
    %v2772 = vshrl.u32 %v2771, 7
    %v2773 = vsub.s32 7, %v2772
    %v2774 = vrot.slane %v24, %v2773
    %v2775 = vmul.f32 %v2769, %v2774
    %v2776 = vmul.f32 %v2770, %v2774
    %v2777 = vld [vmem:[%s2 + $0x208] sm:$0xff]
    %v2778 = vld [vmem:[%s2 + $0x210] sm:$0xff]
    %v2779 = vld [vmem:[%s2 + $0x228] sm:$0xff]
    %v2780 = vld [vmem:[%s2 + $0x230] sm:$0xff]
    %v2781 = vld [vmem:[%s2 + $0x248] sm:$0xff]
    %v2782 = vld [vmem:[%s2 + $0x250] sm:$0xff]
    %v2783 = vld [vmem:[%s2 + $0x268] sm:$0xff]
    %v2784 = vld [vmem:[%s2 + $0x270] sm:$0xff]
    %v2785 = vld [vmem:[%s2 + $0x288] sm:$0xff]
    %v2786 = vld [vmem:[%s2 + $0x290] sm:$0xff]
    %v2787 = vld [vmem:[%s2 + $0x2a8] sm:$0xff]
    %v2788 = vld [vmem:[%s2 + $0x2b0] sm:$0xff]
    %v2789 = vld [vmem:[%s2 + $0x2c8] sm:$0xff]
    %v2790 = vld [vmem:[%s2 + $0x2d0] sm:$0xff]
    %v2791 = vld [vmem:[%s2 + $0x2e8] sm:$0xff]
    %v2792 = vld [vmem:[%s2 + $0x2f0] sm:$0xff]
    %v2794 = vsel %vm158, %v2775, 0
    %v2797 = vsel %vm158, %v2776, 0
    %2799 = vmatprep.subr.mxu0 %v2778
    %2800 = vmatpush1.msra.mxu0 %v2777
    %2801 = vmatprep.subr.mxu0 %v2780
    %2802 = vmatpush1.msra.mxu0 %v2779
    %2803 = vmatprep.subr.mxu0 %v2782
    %2804 = vmatpush1.msra.mxu0 %v2781
    %2805 = vmatprep.subr.mxu0 %v2784
    %2806 = vmatpush1.msra.mxu0 %v2783
    %2807 = vmatprep.subr.mxu0 %v2786
    %2808 = vmatpush1.msra.mxu0 %v2785
    %2809 = vmatprep.subr.mxu0 %v2788
    %2810 = vmatpush1.msra.mxu0 %v2787
    %2811 = vmatprep.subr.mxu0 %v2790
    %2812 = vmatpush1.msra.mxu0 %v2789
    %2813 = vmatprep.subr.mxu0 %v2792
    %2814 = vmatpush1.msra.mxu0 %v2791
    %2815 = vmatprep.subr.mxu0 0.0
    %2816 = vmatpush1.msra.mxu0 0.0
    %2817 = vmatprep.subr.mxu0 0.0
    %2818 = vmatpush1.msra.mxu0 0.0
    %2819 = vmatprep.subr.mxu0 0.0
    %2820 = vmatpush1.msra.mxu0 0.0
    %2821 = vmatprep.subr.mxu0 0.0
    %2822 = vmatpush1.msra.mxu0 0.0
    %2823 = vmatprep.subr.mxu0 0.0
    %2824 = vmatpush1.msra.mxu0 0.0
    %2825 = vmatprep.subr.mxu0 0.0
    %2826 = vmatpush1.msra.mxu0 0.0
    %2827 = vmatprep.subr.mxu0 0.0
    %2828 = vmatpush1.msra.mxu0 0.0
    %2829 = vmatprep.subr.mxu0 0.0
    %2830 = vmatpush1.msra.mxu0 0.0
    %2831 = vmatprep.subr.mxu0 0.0
    %2832 = vmatpush1.msra.mxu0 0.0
    %2833 = vmatprep.subr.mxu0 0.0
    %2834 = vmatpush1.msra.mxu0 0.0
    %2835 = vmatprep.subr.mxu0 0.0
    %2836 = vmatpush1.msra.mxu0 0.0
    %2837 = vmatprep.subr.mxu0 0.0
    %2838 = vmatpush1.msra.mxu0 0.0
    %2839 = vmatprep.subr.mxu0 0.0
    %2840 = vmatpush1.msra.mxu0 0.0
    %2841 = vmatprep.subr.mxu0 0.0
    %2842 = vmatpush1.msra.mxu0 0.0
    %2843 = vmatprep.subr.mxu0 0.0
    %2844 = vmatpush1.msra.mxu0 0.0
    %2845 = vmatprep.subr.mxu0 0.0
    %2846 = vmatpush1.msra.mxu0 0.0
    %2847 = vmatprep.subr.mxu0 0.0
    %2848 = vmatpush1.msra.mxu0 0.0
    %2849 = vmatprep.subr.mxu0 0.0
    %2850 = vmatpush1.msra.mxu0 0.0
    %2851 = vmatprep.subr.mxu0 0.0
    %2852 = vmatpush1.msra.mxu0 0.0
    %2853 = vmatprep.subr.mxu0 0.0
    %2854 = vmatpush1.msra.mxu0 0.0
    %2855 = vmatprep.subr.mxu0 0.0
    %2856 = vmatpush1.msra.mxu0 0.0
    %2857 = vmatprep.subr.mxu0 0.0
    %2858 = vmatpush1.msra.mxu0 0.0
    %2859 = vmatprep.subr.mxu0 0.0
    %2860 = vmatpush1.msra.mxu0 0.0
    %2861 = vmatprep.subr.mxu0 0.0
    %2862 = vmatpush1.msra.mxu0 0.0
    %2863 = vmatprep.mubr.f32.mxu0 0.0
    %2864 = vmatmul.mubr.f32.gmra.mrb[0].mxu0 %v2794
    %v2865 = vpop.f32.mrb[0].mxu0
    %v2866 = vadd.f32 0.0, %v2865
    %v2867 = vpop.f32.mrb[0].mxu0
    %v2868 = vadd.f32 0.0, %v2867
    %2869 = vmatprep.mubr.f32.mxu0 0.0
    %2870 = vmatmul.mubr.f32.gmra.mrb[0].mxu0 %v2797
    %v2871 = vpop.f32.mrb[0].mxu0
    %v2872 = vadd.f32 0.0, %v2871
    %v2873 = vpop.f32.mrb[0].mxu0
    %v2874 = vadd.f32 0.0, %v2873
    %2875 = vdwg.mxu0
    %v2876 = vxor.u32 %v2866, 2147483648
    %v2877 = vxor.u32 %v2872, 2147483648
    %v2878 = vmul.f32 %v2876, 1.442695
    %v2879 = vpow.pop %v2878
    %v2880 = vmul.f32 %v2877, 1.442695
    %v2881 = vpow.pop %v2880
    %v2882 = vadd.f32 %v2879, 1.0
    %v2883 = vadd.f32 %v2881, 1.0
    %v2884 = vrcp.pop %v2882
    %v2885 = vmul.f32 1.0, %v2884
    %v2886 = vrcp.pop %v2883
    %v2887 = vmul.f32 1.0, %v2886
    %v2888 = vmul.f32 %v2866, %v2885
    %v2889 = vmul.f32 %v2872, %v2887
    %v2890 = vmul.f32 %v2888, %v2868
    %v2891 = vmul.f32 %v2889, %v2874
    %v2892 = vld [vmem:[%s2 + $0x218] sm:$0xff]
    %v2893 = vld [vmem:[%s2 + $0x238] sm:$0xff]
    %v2894 = vld [vmem:[%s2 + $0x258] sm:$0xff]
    %v2895 = vld [vmem:[%s2 + $0x278] sm:$0xff]
    %v2896 = vld [vmem:[%s2 + $0x298] sm:$0xff]
    %v2897 = vld [vmem:[%s2 + $0x2b8] sm:$0xff]
    %v2898 = vld [vmem:[%s2 + $0x2d8] sm:$0xff]
    %v2899 = vld [vmem:[%s2 + $0x2f8] sm:$0xff]
    %v2900 = vld [vmem:[%s2 + $0x318] sm:$0xff]
    %v2901 = vld [vmem:[%s2 + $0x338] sm:$0xff]
    %v2902 = vld [vmem:[%s2 + $0x358] sm:$0xff]
    %v2903 = vld [vmem:[%s2 + $0x378] sm:$0xff]
    %v2904 = vld [vmem:[%s2 + $0x398] sm:$0xff]
    %v2905 = vld [vmem:[%s2 + $0x3b8] sm:$0xff]
    %v2906 = vld [vmem:[%s2 + $0x3d8] sm:$0xff]
    %v2907 = vld [vmem:[%s2 + $0x3f8] sm:$0xff]
    %2908 = vmatprep.subr.mxu0 0.0
    %2909 = vmatpush1.msra.mxu0 %v2892
    %2910 = vmatprep.subr.mxu0 0.0
    %2911 = vmatpush1.msra.mxu0 %v2893
    %2912 = vmatprep.subr.mxu0 0.0
    %2913 = vmatpush1.msra.mxu0 %v2894
    %2914 = vmatprep.subr.mxu0 0.0
    %2915 = vmatpush1.msra.mxu0 %v2895
    %2916 = vmatprep.subr.mxu0 0.0
    %2917 = vmatpush1.msra.mxu0 %v2896
    %2918 = vmatprep.subr.mxu0 0.0
    %2919 = vmatpush1.msra.mxu0 %v2897
    %2920 = vmatprep.subr.mxu0 0.0
    %2921 = vmatpush1.msra.mxu0 %v2898
    %2922 = vmatprep.subr.mxu0 0.0
    %2923 = vmatpush1.msra.mxu0 %v2899
    %2924 = vmatprep.subr.mxu0 0.0
    %2925 = vmatpush1.msra.mxu0 %v2900
    %2926 = vmatprep.subr.mxu0 0.0
    %2927 = vmatpush1.msra.mxu0 %v2901
    %2928 = vmatprep.subr.mxu0 0.0
    %2929 = vmatpush1.msra.mxu0 %v2902
    %2930 = vmatprep.subr.mxu0 0.0
    %2931 = vmatpush1.msra.mxu0 %v2903
    %2932 = vmatprep.subr.mxu0 0.0
    %2933 = vmatpush1.msra.mxu0 %v2904
    %2934 = vmatprep.subr.mxu0 0.0
    %2935 = vmatpush1.msra.mxu0 %v2905
    %2936 = vmatprep.subr.mxu0 0.0
    %2937 = vmatpush1.msra.mxu0 %v2906
    %2938 = vmatprep.subr.mxu0 0.0
    %2939 = vmatpush1.msra.mxu0 %v2907
    %2940 = vmatprep.subr.mxu0 0.0
    %2941 = vmatpush1.msra.mxu0 0.0
    %2942 = vmatprep.subr.mxu0 0.0
    %2943 = vmatpush1.msra.mxu0 0.0
    %2944 = vmatprep.subr.mxu0 0.0
    %2945 = vmatpush1.msra.mxu0 0.0
    %2946 = vmatprep.subr.mxu0 0.0
    %2947 = vmatpush1.msra.mxu0 0.0
    %2948 = vmatprep.subr.mxu0 0.0
    %2949 = vmatpush1.msra.mxu0 0.0
    %2950 = vmatprep.subr.mxu0 0.0
    %2951 = vmatpush1.msra.mxu0 0.0
    %2952 = vmatprep.subr.mxu0 0.0
    %2953 = vmatpush1.msra.mxu0 0.0
    %2954 = vmatprep.subr.mxu0 0.0
    %2955 = vmatpush1.msra.mxu0 0.0
    %2956 = vmatprep.subr.mxu0 0.0
    %2957 = vmatpush1.msra.mxu0 0.0
    %2958 = vmatprep.subr.mxu0 0.0
    %2959 = vmatpush1.msra.mxu0 0.0
    %2960 = vmatprep.subr.mxu0 0.0
    %2961 = vmatpush1.msra.mxu0 0.0
    %2962 = vmatprep.subr.mxu0 0.0
    %2963 = vmatpush1.msra.mxu0 0.0
    %2964 = vmatprep.subr.mxu0 0.0
    %2965 = vmatpush1.msra.mxu0 0.0
    %2966 = vmatprep.subr.mxu0 0.0
    %2967 = vmatpush1.msra.mxu0 0.0
    %2968 = vmatprep.subr.mxu0 0.0
    %2969 = vmatpush1.msra.mxu0 0.0
    %2970 = vmatprep.subr.mxu0 0.0
    %2971 = vmatpush1.msra.mxu0 0.0
    %2972 = vmatprep.mubr.f32.mxu0 0.0
    %2973 = vmatmul.mubr.f32.gmra.mrb[0].mxu0 %v2890
    %v2974 = vpop.f32.mrb[0].mxu0
    %v2975 = vadd.f32 0.0, %v2974
    %v2976 = vpop.f32.mrb[0].mxu0
    %2977 = vmatprep.mubr.f32.mxu0 0.0
    %2978 = vmatmul.mubr.f32.gmra.mrb[0].mxu0 %v2891
    %v2979 = vpop.f32.mrb[0].mxu0
    %v2980 = vadd.f32 0.0, %v2979
    %v2981 = vpop.f32.mrb[0].mxu0
    %2982 = vdwg.mxu0
    %v2983 = vadd.f32 %v2753, %v2975
    %v2984 = vadd.f32 %v2754, %v2980
    %v2985 = vmul.f32 %v2983, %v2983
    %v2986 = vmul.f32 %v2984, %v2984
    %v2987 = vsel %vm158, %v2985, 0.0
    %2988 = vadd.xlane.f32.xlu0 %v2987
    %v2989 = vpop.xlane.xlu0 %2988
    %v2990 = vsel %vm158, %v2986, 0.0
    %2991 = vadd.xlane.f32.xlu0 %v2990
    %v2992 = vpop.xlane.xlu0 %2991
    %v2993 = vmul.f32 %v2989, %v165
    %v2994 = vmul.f32 %v2992, %v165
    %v2995 = vadd.f32 %v2993, 1e-06
    %v2996 = vadd.f32 %v2994, 1e-06
    %v2997 = vrsqrt.pop %v2995
    %v2998 = vrsqrt.pop %v2996
    %v2999 = vmul.f32 %v2983, %v2997
    %v3000 = vmul.f32 %v2984, %v2998
    %v3001 = vlaneseq
    %v3002 = vshrl.u32 %v3001, 7
    %v3003 = vsub.s32 1, %v3002
    %v3004 = vrot.slane %v24, %v3003
    %v3005 = vmul.f32 %v2999, %v3004
    %v3006 = vmul.f32 %v3000, %v3004
    %v3007 = vld [vmem:[%s4] sm:$0xff]
    %v3008 = vld [vmem:[%s4 + $0x18] sm:$0xff]
    %v3009 = vld [vmem:[%s4 + $0x30] sm:$0xff]
    %v3010 = vld [vmem:[%s4 + $0x48] sm:$0xff]
    %v3011 = vld [vmem:[%s4 + $0x60] sm:$0xff]
    %v3012 = vld [vmem:[%s4 + $0x78] sm:$0xff]
    %v3013 = vld [vmem:[%s4 + $0x90] sm:$0xff]
    %v3014 = vld [vmem:[%s4 + $0xa8] sm:$0xff]
    %v3016 = vsel %vm158, %v3005, 0
    %v3019 = vsel %vm158, %v3006, 0
    %3021 = vmatprep.subr.mxu0 0.0
    %3022 = vmatpush1.msra.mxu0 %v3007
    %3023 = vmatprep.subr.mxu0 0.0
    %3024 = vmatpush1.msra.mxu0 %v3008
    %3025 = vmatprep.subr.mxu0 0.0
    %3026 = vmatpush1.msra.mxu0 %v3009
    %3027 = vmatprep.subr.mxu0 0.0
    %3028 = vmatpush1.msra.mxu0 %v3010
    %3029 = vmatprep.subr.mxu0 0.0
    %3030 = vmatpush1.msra.mxu0 %v3011
    %3031 = vmatprep.subr.mxu0 0.0
    %3032 = vmatpush1.msra.mxu0 %v3012
    %3033 = vmatprep.subr.mxu0 0.0
    %3034 = vmatpush1.msra.mxu0 %v3013
    %3035 = vmatprep.subr.mxu0 0.0
    %3036 = vmatpush1.msra.mxu0 %v3014
    %3037 = vmatprep.subr.mxu0 0.0
    %3038 = vmatpush1.msra.mxu0 0.0
    %3039 = vmatprep.subr.mxu0 0.0
    %3040 = vmatpush1.msra.mxu0 0.0
    %3041 = vmatprep.subr.mxu0 0.0
    %3042 = vmatpush1.msra.mxu0 0.0
    %3043 = vmatprep.subr.mxu0 0.0
    %3044 = vmatpush1.msra.mxu0 0.0
    %3045 = vmatprep.subr.mxu0 0.0
    %3046 = vmatpush1.msra.mxu0 0.0
    %3047 = vmatprep.subr.mxu0 0.0
    %3048 = vmatpush1.msra.mxu0 0.0
    %3049 = vmatprep.subr.mxu0 0.0
    %3050 = vmatpush1.msra.mxu0 0.0
    %3051 = vmatprep.subr.mxu0 0.0
    %3052 = vmatpush1.msra.mxu0 0.0
    %3053 = vmatprep.subr.mxu0 0.0
    %3054 = vmatpush1.msra.mxu0 0.0
    %3055 = vmatprep.subr.mxu0 0.0
    %3056 = vmatpush1.msra.mxu0 0.0
    %3057 = vmatprep.subr.mxu0 0.0
    %3058 = vmatpush1.msra.mxu0 0.0
    %3059 = vmatprep.subr.mxu0 0.0
    %3060 = vmatpush1.msra.mxu0 0.0
    %3061 = vmatprep.subr.mxu0 0.0
    %3062 = vmatpush1.msra.mxu0 0.0
    %3063 = vmatprep.subr.mxu0 0.0
    %3064 = vmatpush1.msra.mxu0 0.0
    %3065 = vmatprep.subr.mxu0 0.0
    %3066 = vmatpush1.msra.mxu0 0.0
    %3067 = vmatprep.subr.mxu0 0.0
    %3068 = vmatpush1.msra.mxu0 0.0
    %3069 = vmatprep.subr.mxu0 0.0
    %3070 = vmatpush1.msra.mxu0 0.0
    %3071 = vmatprep.subr.mxu0 0.0
    %3072 = vmatpush1.msra.mxu0 0.0
    %3073 = vmatprep.subr.mxu0 0.0
    %3074 = vmatpush1.msra.mxu0 0.0
    %3075 = vmatprep.subr.mxu0 0.0
    %3076 = vmatpush1.msra.mxu0 0.0
    %3077 = vmatprep.subr.mxu0 0.0
    %3078 = vmatpush1.msra.mxu0 0.0
    %3079 = vmatprep.subr.mxu0 0.0
    %3080 = vmatpush1.msra.mxu0 0.0
    %3081 = vmatprep.subr.mxu0 0.0
    %3082 = vmatpush1.msra.mxu0 0.0
    %3083 = vmatprep.subr.mxu0 0.0
    %3084 = vmatpush1.msra.mxu0 0.0
    %3085 = vmatprep.mubr.f32.mxu0 0.0
    %3086 = vmatmul.mubr.f32.gmra.mrb[0].mxu0 %v3016
    %v3087 = vpop.f32.mrb[0].mxu0
    %v3088 = vadd.f32 0.0, %v3087
    %v3089 = vpop.f32.mrb[0].mxu0
    %3090 = vmatprep.mubr.f32.mxu0 0.0
    %3091 = vmatmul.mubr.f32.gmra.mrb[0].mxu0 %v3019
    %v3092 = vpop.f32.mrb[0].mxu0
    %v3093 = vadd.f32 0.0, %v3092
    %v3094 = vpop.f32.mrb[0].mxu0
    %3095 = vdwg.mxu0
    %v3096 = vmax.f32 %v3088, -30.0
    %v3097 = vmax.f32 %v3093, -30.0
    %v3098 = vmin.f32 %v3096, 30.0
    %v3099 = vmin.f32 %v3097, 30.0
    %3100 = vst [vmem:[#allocation2] sm:$0xff] %v3098
    %3101 = vst [vmem:[#allocation2 + $0x8] sm:$0xff] %v3099
    %3102 = vst.msk [vmem:[#allocation4] sm:$0xff] %vm158, %v3005
    %3103 = vst.msk [vmem:[#allocation4 + $0x8] sm:$0xff] %vm158, %v3006
    // Predicated region
    $region22: #{draft_model_forward.1} parent=1 // pred_check
      _
    $region23: #{draft_model_forward.1} parent=1 // pred_check_branch
      %3105 = sbr.rel (0) target = $region25
    $region24: #{draft_model_forward.1} parent=1 // pred_region
      %s3107 = ssub.s32 256, 256
      %3108 = vsyncadd [#allocation3], %s3107
      %s3109 = sshll.u32 [#allocation2], 4
      %s3110 = int_to_ptr.vmem [resolvable:$true] %s3109
      %3115 = dma.vmem_to_hbm [thread:$0]  %s3110, 256, %s5, [#allocation3], 128, 128, 8
    $region25: #{draft_model_forward.1} parent=1 // pred_fallthru
      _
    // Predicated region
    $region26: #{draft_model_forward.1} parent=1 // pred_check
      _
    $region27: #{draft_model_forward.1} parent=1 // pred_check_branch
      %3117 = sbr.rel (0) target = $region29
    $region28: #{draft_model_forward.1} parent=1 // pred_region
      %s3119 = ssub.s32 256, 256
      %3120 = vsyncadd [#allocation5], %s3119
      %s3121 = sshll.u32 [#allocation4], 4
      %s3122 = int_to_ptr.vmem [resolvable:$true] %s3121
      %3127 = dma.vmem_to_hbm [thread:$0]  %s3122, 256, %s6, [#allocation5], 128, 128, 8
    $region29: #{draft_model_forward.1} parent=1 // pred_fallthru
      _
    // Predicated region
    $region30: #{draft_model_forward.1} parent=1 // pred_check
      _
    $region31: #{draft_model_forward.1} parent=1 // pred_check_branch
      %3129 = sbr.rel (0) target = $region33
    $region32: #{draft_model_forward.1} parent=1 // pred_region
      %3130 = dma.done [#allocation3], 256
    $region33: #{draft_model_forward.1} parent=1 // pred_fallthru
      _
    // Predicated region
    $region34: #{draft_model_forward.1} parent=1 // pred_check
      _
    $region35: #{draft_model_forward.1} parent=1 // pred_check_branch
      %3132 = sbr.rel (0) target = $region37
    $region36: #{draft_model_forward.1} parent=1 // pred_region
      %3133 = dma.done [#allocation5], 256
    $region37: #{draft_model_forward.1} parent=1 // pred_fallthru
      _
    %3134 = vsyncpa [#allocation3], 1
    %3135 = vsyncpa [#allocation5], 1

</llo_original>
